<compile_context>
chip_gen: v6e
topology: v6e:2x2x1
jax: 0.10.0
libtpu: 0.0.40
codegen_flags: <defaults>
</compile_context>

<pallas_src>
import functools

import jax
import jax.numpy as jnp
from jax import lax
from jax.experimental import pallas as pl
from jax.experimental.pallas import tpu as pltpu


# --------------------- per-batch prep kernel (grid=(B,)) -------------------- #
def _sadecoder_prep_kernel(
    xpad_ref,                               # (1, NP, C)  bf16 token-padded input
    wk_ref, bk_ref,                         # (C, K) bf16 / (1, K) f32   (BN folded)
    wv1_ref, bv1_ref,                       # (9, C, V) bf16 / (1, V) f32  (3x3 conv)
    wv2_ref, bv2_ref,                       # (V, V) bf16 / (1, V) f32     (1x1 conv)
    wl1_ref, bl1_ref, wl2_ref, bl2_ref,     # image-context linears
    wmg_ref, bm_ref,                        # merge conv (image-context half) + bias
    fq_ref, fkT_ref, v2_ref, bias_ref,      # outputs (per batch element)
    *, w):
    f32, bf16 = jnp.float32, jnp.bfloat16
    pad = w + 1
    np_tot = xpad_ref.shape[1]
    n = np_tot - 2 * pad
    k = wk_ref.shape[1]
    v = wv2_ref.shape[0]

    xp = xpad_ref[0]                        # (NP, C) bf16
    x = xp[pad:pad + n, :]                  # (N, C)  interior (un-padded) tokens

    # image-context path (tiny; hoisted ahead of the big matmuls). Its merge
    # contribution is folded into a per-batch bias row: h2 @ Wm_g + bm.
    g = jnp.mean(x.astype(f32), axis=0, keepdims=True)                      # (1, C)
    h1 = jnp.maximum(
        jnp.dot(g.astype(bf16), wl1_ref[...], preferred_element_type=f32)
        + bl1_ref[...], 0.0)
    h2 = jnp.maximum(
        jnp.dot(h1.astype(bf16), wl2_ref[...], preferred_element_type=f32)
        + bl2_ref[...], 0.0)
    bias_ref[0] = (jnp.dot(h2.astype(bf16), wmg_ref[...],
                           preferred_element_type=f32) + bm_ref[...])       # (1, C)

    # f_key / f_query: 1x1 conv (+ folded BN) + ReLU -> (N, K)
    fk = jnp.maximum(
        jnp.dot(x, wk_ref[...], preferred_element_type=f32) + bk_ref[...], 0.0)
    # transposed key stored once (canonical contraction per attention tile, no
    # per-tile XLU transpose) and K^-0.5 folded into the query once per batch.
    fkT_ref[0] = jnp.transpose(fk).astype(bf16)                             # (K, N)
    fq_ref[0] = (fk * (k ** -0.5)).astype(bf16)                             # (N, K)

    # f_value: 3x3 conv (pad=1) as 9 shifted-view matmuls (no im2col) + ReLU,
    # then 1x1 conv + ReLU.  Column-wrap masks hoisted out of the tap loop;
    # row-out-of-range taps land in the zero padding of xp.
    col = lax.broadcasted_iota(jnp.int32, (n, 1), 0) % w
    ok_left = col >= 1            # valid tap when dx == -1
    ok_right = col <= w - 2       # valid tap when dx == +1
    acc = jnp.zeros((n, v), f32)
    for t in range(9):
        dy, dx = t // 3 - 1, t % 3 - 1
        d = dy * w + dx
        tap = xp[pad + d:pad + d + n, :]                   # (N, C) bf16, static slice
        if dx == -1:
            tap = jnp.where(ok_left, tap, 0)
        elif dx == 1:
            tap = jnp.where(ok_right, tap, 0)
        acc = acc + jnp.dot(tap, wv1_ref[t], preferred_element_type=f32)
    v1 = jnp.maximum(acc + bv1_ref[...], 0.0)
    v2 = jnp.maximum(
        jnp.dot(v1.astype(bf16), wv2_ref[...], preferred_element_type=f32)
        + bv2_ref[...], 0.0)
    v2_ref[0] = v2.astype(bf16)


# ------------- attention + merge kernel (grid=(B, NQ), fully parallel) ------ #
def _sadecoder_attn_kernel(fq_ref, fkT_ref, v2_ref, bias_ref, wmv_ref,
                           out_ref, sim_ref):
    f32, bf16 = jnp.float32, jnp.bfloat16

    fq = fq_ref[0]                                          # (TQ, K) bf16, pre-scaled
    logits = jnp.dot(fq, fkT_ref[0], preferred_element_type=f32)            # (TQ, N)

    m = jnp.max(logits, axis=-1, keepdims=True)
    e = jnp.exp(logits - m)                                 # f32 elementwise (v5e-safe)
    inv = 1.0 / jnp.sum(e, axis=-1, keepdims=True)          # exact: sim matches torch
    p = e * inv                                             # (TQ, N) f32 softmax
    sim_ref[0] = p.astype(sim_ref.dtype)                    # lane-dense store

    ctx = jnp.dot(p.astype(bf16), v2_ref[0], preferred_element_type=f32)    # (TQ, V)
    merged = (jnp.dot(ctx.astype(bf16), wmv_ref[...], preferred_element_type=f32)
              + bias_ref[0])                                                # (TQ, C)
    out_ref[0] = jnp.maximum(merged, 0.0)


# ------------------------------ JAX wrapper -------------------------------- #
def _vmem_capacity_bytes():
    try:
        info = pltpu.get_tpu_info()
        cap = getattr(info, "vmem_capacity_bytes", None)
        if cap:
            return int(cap)
    except Exception:
        pass
    return 64 * 1024 * 1024  # conservative (v7x per-TC)


def sadecoder_forward(x_nchw, params, *, tq=128, sim_dtype=jnp.float32):
    """x_nchw: (B, C, H, W) float32.  Returns (out_nchw, sim_map)."""
    B, C, H, W = x_nchw.shape
    N = H * W
    K = params['wk'].shape[1]
    V = params['wv2'].shape[0]
    Cmid = params['wl2'].shape[0]
    bf16, f32 = jnp.bfloat16, jnp.float32

    # Generation-aware VMEM budget (v5e/v6e: 128 MiB, v7x: 64 MiB/TC) and
    # query-tile sizing against it.
    vmem_budget = int(_vmem_capacity_bytes() * 0.7)
    sim_bytes = jnp.dtype(sim_dtype).itemsize

    def attn_working_set(tq_):
        # double-buffered inputs + outputs of the attention call
        return 2 * (tq_ * K * 2 + K * N * 2 + N * V * 2 + C * 4 + V * C * 2
                    + tq_ * C * 4 + tq_ * N * sim_bytes)

    TQ = min(tq, N)
    while TQ > 16 and (N % TQ != 0 or attn_working_set(TQ) > vmem_budget):
        TQ //= 2
    assert N % TQ == 0, "query tile must divide N"
    assert TQ == N or TQ % 16 == 0, "query tile must be a multiple of 16 (bf16 sublanes)"
    NQ = N // TQ

    PAD = W + 1
    NP = N + 2 * PAD

    # channels-last tokens, padded with one blank image row (+1 token) per side so
    # every 3x3 tap inside the prep kernel is a plain static slice (no im2col).
    x_tok = jnp.transpose(x_nchw, (0, 2, 3, 1)).reshape(B, N, C)
    zpad = jnp.zeros((B, PAD, C), x_tok.dtype)
    x_pad = jnp.concatenate([zpad, x_tok, zpad], axis=1).astype(bf16)

    def wspec1(shape):
        return pl.BlockSpec(shape, lambda b, _nd=len(shape): (0,) * _nd)

    def wspec2(shape):
        return pl.BlockSpec(shape, lambda b, q, _nd=len(shape): (0,) * _nd)

    # ---- kernel 1: per-batch prep (f_key, f_value, image-context bias) ---- #
    prep_kern = functools.partial(_sadecoder_prep_kernel, w=W)
    fq, fkT, v2, bias = pl.pallas_call(
        prep_kern,
        grid=(B,),
        in_specs=[
            pl.BlockSpec((1, NP, C), lambda b: (b, 0, 0)),   # padded tokens
            wspec1((C, K)), wspec1((1, K)),                  # wk, bk
            wspec1((9, C, V)), wspec1((1, V)),               # wv1 (3x3), bv1
            wspec1((V, V)), wspec1((1, V)),                  # wv2 (1x1), bv2
            wspec1((C, Cmid)), wspec1((1, Cmid)),            # wl1, bl1
            wspec1((Cmid, Cmid)), wspec1((1, Cmid)),         # wl2, bl2
            wspec1((Cmid, C)), wspec1((1, C)),               # wm_g, bm
        ],
        out_specs=[
            pl.BlockSpec((1, N, K), lambda b: (b, 0, 0)),    # fq  (K^-0.5 folded)
            pl.BlockSpec((1, K, N), lambda b: (b, 0, 0)),    # fkT (transposed key)
            pl.BlockSpec((1, N, V), lambda b: (b, 0, 0)),    # f_value
            pl.BlockSpec((1, 1, C), lambda b: (b, 0, 0)),    # merge bias (img ctx)
        ],
        out_shape=[
            jax.ShapeDtypeStruct((B, N, K), bf16),
            jax.ShapeDtypeStruct((B, K, N), bf16),
            jax.ShapeDtypeStruct((B, N, V), bf16),
            jax.ShapeDtypeStruct((B, 1, C), f32),
        ],
        compiler_params=pltpu.CompilerParams(
            dimension_semantics=("parallel",),
            vmem_limit_bytes=vmem_budget),
    )(x_pad,
      params['wk'].astype(bf16), params['bk'].astype(f32),
      params['wv1'].astype(bf16), params['bv1'].astype(f32),
      params['wv2'].astype(bf16), params['bv2'].astype(f32),
      params['wl1'].astype(bf16), params['bl1'].astype(f32),
      params['wl2'].astype(bf16), params['bl2'].astype(f32),
      params['wm_g'].astype(bf16), params['bm'].astype(f32))

    # ---- kernel 2: query-tiled attention + merge (both axes parallel) ---- #
    out_tok, sim_map = pl.pallas_call(
        _sadecoder_attn_kernel,
        grid=(B, NQ),
        in_specs=[
            pl.BlockSpec((1, TQ, K), lambda b, q: (b, q, 0)),   # fq tile
            pl.BlockSpec((1, K, N), lambda b, q: (b, 0, 0)),    # fkT (per batch)
            pl.BlockSpec((1, N, V), lambda b, q: (b, 0, 0)),    # f_value (per batch)
            pl.BlockSpec((1, 1, C), lambda b, q: (b, 0, 0)),    # merge bias
            wspec2((V, C)),                                      # wm_v
        ],
        out_specs=[
            pl.BlockSpec((1, TQ, C), lambda b, q: (b, q, 0)),
            pl.BlockSpec((1, TQ, N), lambda b, q: (b, q, 0)),
        ],
        out_shape=[
            jax.ShapeDtypeStruct((B, N, C), f32),
            jax.ShapeDtypeStruct((B, N, N), sim_dtype),
        ],
        compiler_params=pltpu.CompilerParams(
            dimension_semantics=("parallel", "parallel"),
            vmem_limit_bytes=vmem_budget),
    )(fq, fkT, v2, bias, params['wm_v'].astype(bf16))

    out_nchw = jnp.transpose(out_tok.reshape(B, H, W, C), (0, 3, 1, 2))
    return out_nchw, sim_map


# ------------------------- deterministic parameters ------------------------ #
def make_params(key, C, K, V, Cmid):
    ks = jax.random.split(key, 8)
    kaiming = lambda k, shape, fan_in: (
        jax.random.normal(k, shape, jnp.float32) * jnp.sqrt(2.0 / fan_in))

    # f_key conv 1x1 (C -> K), bias 0; BatchNorm(eval): gamma=1, beta=0,
    # running_mean=0, running_var=1, eps=1e-5  -> fold into the conv.
    # TODO(synk): real checkpoints must fold actual running stats / gamma / beta.
    wk = kaiming(ks[0], (C, K), C)
    bk = jnp.zeros((1, K), jnp.float32)
    bn_scale = 1.0 / jnp.sqrt(1.0 + 1e-5)
    wk = wk * bn_scale
    bk = bk * bn_scale

    # f_value conv1 3x3 (C -> V): torch layout (V, C, 3, 3) -> (ky*3+kx, C, V)
    wv1_ochw = kaiming(ks[1], (V, C, 3, 3), C * 9)
    wv1 = jnp.transpose(wv1_ochw, (2, 3, 1, 0)).reshape(9, C, V)
    bv1 = jnp.zeros((1, V), jnp.float32)
    # f_value conv2 1x1 (V -> V)
    wv2 = kaiming(ks[2], (V, V), V)
    bv2 = jnp.zeros((1, V), jnp.float32)

    # image_context linears: Linear(C, Cmid), Linear(Cmid, Cmid)
    wl1 = jax.random.uniform(ks[3], (C, Cmid), jnp.float32,
                             -1.0 / jnp.sqrt(C), 1.0 / jnp.sqrt(C))
    bl1 = jax.random.uniform(ks[4], (1, Cmid), jnp.float32,
                             -1.0 / jnp.sqrt(C), 1.0 / jnp.sqrt(C))
    wl2 = jax.random.uniform(ks[5], (Cmid, Cmid), jnp.float32,
                             -1.0 / jnp.sqrt(Cmid), 1.0 / jnp.sqrt(Cmid))
    bl2 = jax.random.uniform(ks[6], (1, Cmid), jnp.float32,
                             -1.0 / jnp.sqrt(Cmid), 1.0 / jnp.sqrt(Cmid))

    # merge conv 1x1 ((V + Cmid) -> C), split along its input channels
    wm = kaiming(ks[7], (V + Cmid, C), V + Cmid)
    wm_v, wm_g = wm[:V], wm[V:]
    bm = jnp.zeros((1, C), jnp.float32)

    return dict(wk=wk, bk=bk, wv1=wv1, bv1=bv1, wv2=wv2, bv2=bv2,
                wl1=wl1, bl1=bl1, wl2=wl2, bl2=bl2,
                wm_v=wm_v, wm_g=wm_g, bm=bm)


# ---------------------------------- main ----------------------------------- #
if __name__ == "__main__":
    # Small shapes consistent with SADecoder's structural constraints
    # (key = in/4, value = in, image-context hidden = in/4), chosen so that
    # N = H*W = 128 and C = 128 keep the sim / out stores lane-dense.
    B, C, H, W = 2, 128, 8, 16
    K, V, Cmid = C // 4, C, C // 4

    key = jax.random.PRNGKey(0)
    kx, kp = jax.random.split(key)
    x = jax.random.normal(kx, (B, C, H, W), jnp.float32)
    params = make_params(kp, C, K, V, Cmid)

    out, sim_map = jax.jit(sadecoder_forward)(x, params)
    jax.block_until_ready((out, sim_map))

    assert out.shape == (B, C, H, W)
    assert sim_map.shape == (B, H * W, H * W)
    print("KERNEL_OK")
</pallas_src>

<mosaic_0001>
module attributes {stable_mosaic.version = 11 : i64} {
  func.func @_sadecoder_prep_kernel(%arg0: i32, %arg1: memref<1x162x128xbf16, #tpu.memory_space<vmem>>, %arg2: memref<128x32xbf16, #tpu.memory_space<vmem>>, %arg3: memref<1x32xf32, #tpu.memory_space<vmem>>, %arg4: memref<9x128x128xbf16, #tpu.memory_space<vmem>>, %arg5: memref<1x128xf32, #tpu.memory_space<vmem>>, %arg6: memref<128x128xbf16, #tpu.memory_space<vmem>>, %arg7: memref<1x128xf32, #tpu.memory_space<vmem>>, %arg8: memref<128x32xbf16, #tpu.memory_space<vmem>>, %arg9: memref<1x32xf32, #tpu.memory_space<vmem>>, %arg10: memref<32x32xbf16, #tpu.memory_space<vmem>>, %arg11: memref<1x32xf32, #tpu.memory_space<vmem>>, %arg12: memref<32x128xbf16, #tpu.memory_space<vmem>>, %arg13: memref<1x128xf32, #tpu.memory_space<vmem>>, %arg14: memref<1x128x32xbf16, #tpu.memory_space<vmem>>, %arg15: memref<1x32x128xbf16, #tpu.memory_space<vmem>>, %arg16: memref<1x128x128xbf16, #tpu.memory_space<vmem>>, %arg17: memref<1x1x128xf32, #tpu.memory_space<vmem>>) attributes {dimension_semantics = [#tpu.dimension_semantics<parallel>], iteration_bounds = array<i64: 2>, scalar_prefetch = 0 : i64, scratch_operands = 0 : i64, tpu.core_type = #tpu.core_type<tc>, window_params = [{transform_indices = @transform_0, window_bounds = array<i64: 1, 162, 128>}, {pipeline_mode = #tpu.pipeline_mode<synchronous>, transform_indices = @transform_1, window_bounds = array<i64: 128, 32>}, {pipeline_mode = #tpu.pipeline_mode<synchronous>, transform_indices = @transform_2, window_bounds = array<i64: 1, 32>}, {pipeline_mode = #tpu.pipeline_mode<synchronous>, transform_indices = @transform_3, window_bounds = array<i64: 9, 128, 128>}, {pipeline_mode = #tpu.pipeline_mode<synchronous>, transform_indices = @transform_4, window_bounds = array<i64: 1, 128>}, {pipeline_mode = #tpu.pipeline_mode<synchronous>, transform_indices = @transform_5, window_bounds = array<i64: 128, 128>}, {pipeline_mode = #tpu.pipeline_mode<synchronous>, transform_indices = @transform_6, window_bounds = array<i64: 1, 128>}, {pipeline_mode = #tpu.pipeline_mode<synchronous>, transform_indices = @transform_7, window_bounds = array<i64: 128, 32>}, {pipeline_mode = #tpu.pipeline_mode<synchronous>, transform_indices = @transform_8, window_bounds = array<i64: 1, 32>}, {pipeline_mode = #tpu.pipeline_mode<synchronous>, transform_indices = @transform_9, window_bounds = array<i64: 32, 32>}, {pipeline_mode = #tpu.pipeline_mode<synchronous>, transform_indices = @transform_10, window_bounds = array<i64: 1, 32>}, {pipeline_mode = #tpu.pipeline_mode<synchronous>, transform_indices = @transform_11, window_bounds = array<i64: 32, 128>}, {pipeline_mode = #tpu.pipeline_mode<synchronous>, transform_indices = @transform_12, window_bounds = array<i64: 1, 128>}, {transform_indices = @transform_13, window_bounds = array<i64: 1, 128, 32>}, {transform_indices = @transform_14, window_bounds = array<i64: 1, 32, 128>}, {transform_indices = @transform_15, window_bounds = array<i64: 1, 128, 128>}, {transform_indices = @transform_16, window_bounds = array<i64: 1, 1, 128>}]} {
    %c0 = arith.constant 0 : index
    %c0_0 = arith.constant 0 : index
    %c0_1 = arith.constant 0 : index
    %0 = vector.load %arg1[%c0, %c0_0, %c0_1] : memref<1x162x128xbf16, #tpu.memory_space<vmem>>, vector<1x162x128xbf16>
    %1 = vector.shape_cast %0 : vector<1x162x128xbf16> to vector<162x128xbf16>
    %2 = vector.extract_strided_slice %1 {offsets = [17, 0], sizes = [128, 128], strides = [1, 1]} : vector<162x128xbf16> to vector<128x128xbf16>
    %3 = arith.extf %2 : vector<128x128xbf16> to vector<128x128xf32>
    %cst = arith.constant dense<0.000000e+00> : vector<128xf32>
    %4 = vector.multi_reduction <add>, %3, %cst [0] : vector<128x128xf32> to vector<128xf32>
    %5 = vector.shape_cast %4 : vector<128xf32> to vector<1x128xf32>
    %cst_2 = arith.constant 1.280000e+02 : f32
    %6 = vector.broadcast %cst_2 : f32 to vector<1x128xf32>
    %7 = arith.divf %5, %6 : vector<1x128xf32>
    %8 = arith.truncf %7 : vector<1x128xf32> to vector<1x128xbf16>
    %c0_3 = arith.constant 0 : index
    %c0_4 = arith.constant 0 : index
    %9 = vector.load %arg8[%c0_3, %c0_4] : memref<128x32xbf16, #tpu.memory_space<vmem>>, vector<128x32xbf16>
    %cst_5 = arith.constant dense<0.000000e+00> : vector<1x32xf32>
    %10 = tpu.matmul %8, %9, %cst_5 {dimension_numbers = #tpu.dot_dimension_numbers<[1], [0], [0], [1], [0, 0, 1, 1], [], []>} : vector<1x128xbf16>, vector<128x32xbf16>, vector<1x32xf32> -> vector<1x32xf32>
    %c0_6 = arith.constant 0 : index
    %c0_7 = arith.constant 0 : index
    %11 = vector.load %arg9[%c0_6, %c0_7] : memref<1x32xf32, #tpu.memory_space<vmem>>, vector<1x32xf32>
    %12 = arith.addf %10, %11 : vector<1x32xf32>
    %cst_8 = arith.constant 0.000000e+00 : f32
    %13 = vector.broadcast %cst_8 : f32 to vector<1x32xf32>
    %14 = arith.maximumf %12, %13 : vector<1x32xf32>
    %15 = arith.truncf %14 : vector<1x32xf32> to vector<1x32xbf16>
    %c0_9 = arith.constant 0 : index
    %c0_10 = arith.constant 0 : index
    %16 = vector.load %arg10[%c0_9, %c0_10] : memref<32x32xbf16, #tpu.memory_space<vmem>>, vector<32x32xbf16>
    %cst_11 = arith.constant dense<0.000000e+00> : vector<1x32xf32>
    %17 = tpu.matmul %15, %16, %cst_11 {dimension_numbers = #tpu.dot_dimension_numbers<[1], [0], [0], [1], [0, 0, 1, 1], [], []>} : vector<1x32xbf16>, vector<32x32xbf16>, vector<1x32xf32> -> vector<1x32xf32>
    %c0_12 = arith.constant 0 : index
    %c0_13 = arith.constant 0 : index
    %18 = vector.load %arg11[%c0_12, %c0_13] : memref<1x32xf32, #tpu.memory_space<vmem>>, vector<1x32xf32>
    %19 = arith.addf %17, %18 : vector<1x32xf32>
    %cst_14 = arith.constant 0.000000e+00 : f32
    %20 = vector.broadcast %cst_14 : f32 to vector<1x32xf32>
    %21 = arith.maximumf %19, %20 : vector<1x32xf32>
    %22 = arith.truncf %21 : vector<1x32xf32> to vector<1x32xbf16>
    %c0_15 = arith.constant 0 : index
    %c0_16 = arith.constant 0 : index
    %23 = vector.load %arg12[%c0_15, %c0_16] : memref<32x128xbf16, #tpu.memory_space<vmem>>, vector<32x128xbf16>
    %cst_17 = arith.constant dense<0.000000e+00> : vector<1x128xf32>
    %24 = tpu.matmul %22, %23, %cst_17 {dimension_numbers = #tpu.dot_dimension_numbers<[1], [0], [0], [1], [0, 0, 1, 1], [], []>} : vector<1x32xbf16>, vector<32x128xbf16>, vector<1x128xf32> -> vector<1x128xf32>
    %c0_18 = arith.constant 0 : index
    %c0_19 = arith.constant 0 : index
    %25 = vector.load %arg13[%c0_18, %c0_19] : memref<1x128xf32, #tpu.memory_space<vmem>>, vector<1x128xf32>
    %26 = arith.addf %24, %25 : vector<1x128xf32>
    %c0_20 = arith.constant 0 : index
    %c0_21 = arith.constant 0 : index
    %c0_22 = arith.constant 0 : index
    %27 = vector.load %arg17[%c0_20, %c0_21, %c0_22] : memref<1x1x128xf32, #tpu.memory_space<vmem>>, vector<1x1x128xf32>
    %28 = vector.shape_cast %27 : vector<1x1x128xf32> to vector<1x128xf32>
    %29 = vector.shape_cast %26 : vector<1x128xf32> to vector<1x1x128xf32>
    tpu.vector_store %arg17[%c0_20, %c0_21, %c0_22], %29 {strides = array<i32>} : memref<1x1x128xf32, #tpu.memory_space<vmem>>, vector<1x1x128xf32>,
    %c0_23 = arith.constant 0 : index
    %c0_24 = arith.constant 0 : index
    %30 = vector.load %arg2[%c0_23, %c0_24] : memref<128x32xbf16, #tpu.memory_space<vmem>>, vector<128x32xbf16>
    %cst_25 = arith.constant dense<0.000000e+00> : vector<128x32xf32>
    %31 = tpu.matmul %2, %30, %cst_25 {dimension_numbers = #tpu.dot_dimension_numbers<[1], [0], [0], [1], [0, 0, 1, 1], [], []>} : vector<128x128xbf16>, vector<128x32xbf16>, vector<128x32xf32> -> vector<128x32xf32>
    %c0_26 = arith.constant 0 : index
    %c0_27 = arith.constant 0 : index
    %32 = vector.load %arg3[%c0_26, %c0_27] : memref<1x32xf32, #tpu.memory_space<vmem>>, vector<1x32xf32>
    %33 = vector.broadcast %32 : vector<1x32xf32> to vector<128x32xf32>
    %34 = arith.addf %31, %33 : vector<128x32xf32>
    %cst_28 = arith.constant 0.000000e+00 : f32
    %35 = vector.broadcast %cst_28 : f32 to vector<128x32xf32>
    %36 = arith.maximumf %34, %35 : vector<128x32xf32>
    %37 = tpu.transpose %36, [1, 0] : vector<128x32xf32> -> vector<32x128xf32>
    %38 = arith.truncf %37 : vector<32x128xf32> to vector<32x128xbf16>
    %c0_29 = arith.constant 0 : index
    %c0_30 = arith.constant 0 : index
    %c0_31 = arith.constant 0 : index
    %39 = vector.load %arg15[%c0_29, %c0_30, %c0_31] : memref<1x32x128xbf16, #tpu.memory_space<vmem>>, vector<1x32x128xbf16>
    %40 = vector.shape_cast %39 : vector<1x32x128xbf16> to vector<32x128xbf16>
    %41 = vector.shape_cast %38 : vector<32x128xbf16> to vector<1x32x128xbf16>
    tpu.vector_store %arg15[%c0_29, %c0_30, %c0_31], %41 {strides = array<i32>} : memref<1x32x128xbf16, #tpu.memory_space<vmem>>, vector<1x32x128xbf16>,
    %cst_32 = arith.constant 0.176776692 : f32
    %42 = vector.broadcast %cst_32 : f32 to vector<128x32xf32>
    %43 = arith.mulf %36, %42 : vector<128x32xf32>
    %44 = arith.truncf %43 : vector<128x32xf32> to vector<128x32xbf16>
    %c0_33 = arith.constant 0 : index
    %c0_34 = arith.constant 0 : index
    %c0_35 = arith.constant 0 : index
    %45 = vector.load %arg14[%c0_33, %c0_34, %c0_35] : memref<1x128x32xbf16, #tpu.memory_space<vmem>>, vector<1x128x32xbf16>
    %46 = vector.shape_cast %45 : vector<1x128x32xbf16> to vector<128x32xbf16>
    %47 = vector.shape_cast %44 : vector<128x32xbf16> to vector<1x128x32xbf16>
    tpu.vector_store %arg14[%c0_33, %c0_34, %c0_35], %47 {strides = array<i32>} : memref<1x128x32xbf16, #tpu.memory_space<vmem>>, vector<1x128x32xbf16>,
    %48 = tpu.iota {dimensions = array<i32: 0>} : vector<128x1xi32>
    %c16_i32 = arith.constant 16 : i32
    %c0_i32 = arith.constant 0 : i32
    %49 = arith.cmpi eq, %c16_i32, %c0_i32 : i32
    %c1_i32 = arith.constant 1 : i32
    %50 = arith.select %49, %c1_i32, %c16_i32 : i32
    %51 = vector.broadcast %50 : i32 to vector<128x1xi32>
    %52 = arith.remsi %48, %51 : vector<128x1xi32>
    %c0_i32_36 = arith.constant 0 : i32
    %53 = vector.broadcast %c0_i32_36 : i32 to vector<128x1xi32>
    %54 = arith.cmpi ne, %52, %53 : vector<128x1xi32>
    %c0_i32_37 = arith.constant 0 : i32
    %55 = vector.broadcast %c0_i32_37 : i32 to vector<128x1xi32>
    %56 = arith.cmpi slt, %52, %55 : vector<128x1xi32>
    %c0_i32_38 = arith.constant 0 : i32
    %57 = arith.cmpi slt, %50, %c0_i32_38 : i32
    %58 = vector.broadcast %57 : i1 to vector<128x1xi1>
    %59 = vector.broadcast %58 : vector<128x1xi1> to vector<128x1xi1>
    %60 = arith.xori %56, %59 : vector<128x1xi1>
    %61 = arith.andi %60, %54 : vector<128x1xi1>
    %62 = vector.broadcast %50 : i32 to vector<128x1xi32>
    %63 = arith.addi %52, %62 : vector<128x1xi32>
    %64 = arith.select %61, %63, %52 : vector<128x1xi1>, vector<128x1xi32>
    %c1_i32_39 = arith.constant 1 : i32
    %65 = vector.broadcast %c1_i32_39 : i32 to vector<128x1xi32>
    %66 = arith.cmpi sge, %64, %65 : vector<128x1xi32>
    %c14_i32 = arith.constant 14 : i32
    %67 = vector.broadcast %c14_i32 : i32 to vector<128x1xi32>
    %68 = arith.cmpi sle, %64, %67 : vector<128x1xi32>
    %cst_40 = arith.constant 0.000000e+00 : f32
    %69 = vector.broadcast %cst_40 : f32 to vector<128x128xf32>
    %70 = vector.extract_strided_slice %1 {offsets = [0, 0], sizes = [128, 128], strides = [1, 1]} : vector<162x128xbf16> to vector<128x128xbf16>
    %c0_i32_41 = arith.constant 0 : i32
    %71 = arith.sitofp %c0_i32_41 : i32 to bf16
    %72 = vector.shape_cast %66 : vector<128x1xi1> to vector<128x1xi1>
    %73 = vector.broadcast %72 : vector<128x1xi1> to vector<128x128xi1>
    %74 = vector.broadcast %71 : bf16 to vector<128x128xbf16>
    %75 = arith.select %73, %70, %74 : vector<128x128xi1>, vector<128x128xbf16>
    %c0_42 = arith.constant 0 : index
    %c0_43 = arith.constant 0 : index
    %c0_44 = arith.constant 0 : index
    %76 = vector.load %arg4[%c0_42, %c0_43, %c0_44] : memref<9x128x128xbf16, #tpu.memory_space<vmem>>, vector<1x128x128xbf16>
    %77 = vector.shape_cast %76 : vector<1x128x128xbf16> to vector<128x128xbf16>
    %cst_45 = arith.constant dense<0.000000e+00> : vector<128x128xf32>
    %78 = tpu.matmul %75, %77, %cst_45 {dimension_numbers = #tpu.dot_dimension_numbers<[1], [0], [0], [1], [0, 0, 1, 1], [], []>} : vector<128x128xbf16>, vector<128x128xbf16>, vector<128x128xf32> -> vector<128x128xf32>
    %79 = arith.addf %69, %78 : vector<128x128xf32>
    %80 = vector.extract_strided_slice %1 {offsets = [1, 0], sizes = [128, 128], strides = [1, 1]} : vector<162x128xbf16> to vector<128x128xbf16>
    %c1 = arith.constant 1 : index
    %c0_46 = arith.constant 0 : index
    %c0_47 = arith.constant 0 : index
    %81 = vector.load %arg4[%c1, %c0_46, %c0_47] : memref<9x128x128xbf16, #tpu.memory_space<vmem>>, vector<1x128x128xbf16>
    %82 = vector.shape_cast %81 : vector<1x128x128xbf16> to vector<128x128xbf16>
    %cst_48 = arith.constant dense<0.000000e+00> : vector<128x128xf32>
    %83 = tpu.matmul %80, %82, %cst_48 {dimension_numbers = #tpu.dot_dimension_numbers<[1], [0], [0], [1], [0, 0, 1, 1], [], []>} : vector<128x128xbf16>, vector<128x128xbf16>, vector<128x128xf32> -> vector<128x128xf32>
    %84 = arith.addf %79, %83 : vector<128x128xf32>
    %85 = vector.extract_strided_slice %1 {offsets = [2, 0], sizes = [128, 128], strides = [1, 1]} : vector<162x128xbf16> to vector<128x128xbf16>
    %c0_i32_49 = arith.constant 0 : i32
    %86 = arith.sitofp %c0_i32_49 : i32 to bf16
    %87 = vector.shape_cast %68 : vector<128x1xi1> to vector<128x1xi1>
    %88 = vector.broadcast %87 : vector<128x1xi1> to vector<128x128xi1>
    %89 = vector.broadcast %86 : bf16 to vector<128x128xbf16>
    %90 = arith.select %88, %85, %89 : vector<128x128xi1>, vector<128x128xbf16>
    %c2 = arith.constant 2 : index
    %c0_50 = arith.constant 0 : index
    %c0_51 = arith.constant 0 : index
    %91 = vector.load %arg4[%c2, %c0_50, %c0_51] : memref<9x128x128xbf16, #tpu.memory_space<vmem>>, vector<1x128x128xbf16>
    %92 = vector.shape_cast %91 : vector<1x128x128xbf16> to vector<128x128xbf16>
    %cst_52 = arith.constant dense<0.000000e+00> : vector<128x128xf32>
    %93 = tpu.matmul %90, %92, %cst_52 {dimension_numbers = #tpu.dot_dimension_numbers<[1], [0], [0], [1], [0, 0, 1, 1], [], []>} : vector<128x128xbf16>, vector<128x128xbf16>, vector<128x128xf32> -> vector<128x128xf32>
    %94 = arith.addf %84, %93 : vector<128x128xf32>
    %95 = vector.extract_strided_slice %1 {offsets = [16, 0], sizes = [128, 128], strides = [1, 1]} : vector<162x128xbf16> to vector<128x128xbf16>
    %c0_i32_53 = arith.constant 0 : i32
    %96 = arith.sitofp %c0_i32_53 : i32 to bf16
    %97 = vector.shape_cast %66 : vector<128x1xi1> to vector<128x1xi1>
    %98 = vector.broadcast %97 : vector<128x1xi1> to vector<128x128xi1>
    %99 = vector.broadcast %96 : bf16 to vector<128x128xbf16>
    %100 = arith.select %98, %95, %99 : vector<128x128xi1>, vector<128x128xbf16>
    %c3 = arith.constant 3 : index
    %c0_54 = arith.constant 0 : index
    %c0_55 = arith.constant 0 : index
    %101 = vector.load %arg4[%c3, %c0_54, %c0_55] : memref<9x128x128xbf16, #tpu.memory_space<vmem>>, vector<1x128x128xbf16>
    %102 = vector.shape_cast %101 : vector<1x128x128xbf16> to vector<128x128xbf16>
    %cst_56 = arith.constant dense<0.000000e+00> : vector<128x128xf32>
    %103 = tpu.matmul %100, %102, %cst_56 {dimension_numbers = #tpu.dot_dimension_numbers<[1], [0], [0], [1], [0, 0, 1, 1], [], []>} : vector<128x128xbf16>, vector<128x128xbf16>, vector<128x128xf32> -> vector<128x128xf32>
    %104 = arith.addf %94, %103 : vector<128x128xf32>
    %105 = vector.extract_strided_slice %1 {offsets = [17, 0], sizes = [128, 128], strides = [1, 1]} : vector<162x128xbf16> to vector<128x128xbf16>
    %c4 = arith.constant 4 : index
    %c0_57 = arith.constant 0 : index
    %c0_58 = arith.constant 0 : index
    %106 = vector.load %arg4[%c4, %c0_57, %c0_58] : memref<9x128x128xbf16, #tpu.memory_space<vmem>>, vector<1x128x128xbf16>
    %107 = vector.shape_cast %106 : vector<1x128x128xbf16> to vector<128x128xbf16>
    %cst_59 = arith.constant dense<0.000000e+00> : vector<128x128xf32>
    %108 = tpu.matmul %105, %107, %cst_59 {dimension_numbers = #tpu.dot_dimension_numbers<[1], [0], [0], [1], [0, 0, 1, 1], [], []>} : vector<128x128xbf16>, vector<128x128xbf16>, vector<128x128xf32> -> vector<128x128xf32>
    %109 = arith.addf %104, %108 : vector<128x128xf32>
    %110 = vector.extract_strided_slice %1 {offsets = [18, 0], sizes = [128, 128], strides = [1, 1]} : vector<162x128xbf16> to vector<128x128xbf16>
    %c0_i32_60 = arith.constant 0 : i32
    %111 = arith.sitofp %c0_i32_60 : i32 to bf16
    %112 = vector.shape_cast %68 : vector<128x1xi1> to vector<128x1xi1>
    %113 = vector.broadcast %112 : vector<128x1xi1> to vector<128x128xi1>
    %114 = vector.broadcast %111 : bf16 to vector<128x128xbf16>
    %115 = arith.select %113, %110, %114 : vector<128x128xi1>, vector<128x128xbf16>
    %c5 = arith.constant 5 : index
    %c0_61 = arith.constant 0 : index
    %c0_62 = arith.constant 0 : index
    %116 = vector.load %arg4[%c5, %c0_61, %c0_62] : memref<9x128x128xbf16, #tpu.memory_space<vmem>>, vector<1x128x128xbf16>
    %117 = vector.shape_cast %116 : vector<1x128x128xbf16> to vector<128x128xbf16>
    %cst_63 = arith.constant dense<0.000000e+00> : vector<128x128xf32>
    %118 = tpu.matmul %115, %117, %cst_63 {dimension_numbers = #tpu.dot_dimension_numbers<[1], [0], [0], [1], [0, 0, 1, 1], [], []>} : vector<128x128xbf16>, vector<128x128xbf16>, vector<128x128xf32> -> vector<128x128xf32>
    %119 = arith.addf %109, %118 : vector<128x128xf32>
    %120 = vector.extract_strided_slice %1 {offsets = [32, 0], sizes = [128, 128], strides = [1, 1]} : vector<162x128xbf16> to vector<128x128xbf16>
    %c0_i32_64 = arith.constant 0 : i32
    %121 = arith.sitofp %c0_i32_64 : i32 to bf16
    %122 = vector.shape_cast %66 : vector<128x1xi1> to vector<128x1xi1>
    %123 = vector.broadcast %122 : vector<128x1xi1> to vector<128x128xi1>
    %124 = vector.broadcast %121 : bf16 to vector<128x128xbf16>
    %125 = arith.select %123, %120, %124 : vector<128x128xi1>, vector<128x128xbf16>
    %c6 = arith.constant 6 : index
    %c0_65 = arith.constant 0 : index
    %c0_66 = arith.constant 0 : index
    %126 = vector.load %arg4[%c6, %c0_65, %c0_66] : memref<9x128x128xbf16, #tpu.memory_space<vmem>>, vector<1x128x128xbf16>
    %127 = vector.shape_cast %126 : vector<1x128x128xbf16> to vector<128x128xbf16>
    %cst_67 = arith.constant dense<0.000000e+00> : vector<128x128xf32>
    %128 = tpu.matmul %125, %127, %cst_67 {dimension_numbers = #tpu.dot_dimension_numbers<[1], [0], [0], [1], [0, 0, 1, 1], [], []>} : vector<128x128xbf16>, vector<128x128xbf16>, vector<128x128xf32> -> vector<128x128xf32>
    %129 = arith.addf %119, %128 : vector<128x128xf32>
    %130 = vector.extract_strided_slice %1 {offsets = [33, 0], sizes = [128, 128], strides = [1, 1]} : vector<162x128xbf16> to vector<128x128xbf16>
    %c7 = arith.constant 7 : index
    %c0_68 = arith.constant 0 : index
    %c0_69 = arith.constant 0 : index
    %131 = vector.load %arg4[%c7, %c0_68, %c0_69] : memref<9x128x128xbf16, #tpu.memory_space<vmem>>, vector<1x128x128xbf16>
    %132 = vector.shape_cast %131 : vector<1x128x128xbf16> to vector<128x128xbf16>
    %cst_70 = arith.constant dense<0.000000e+00> : vector<128x128xf32>
    %133 = tpu.matmul %130, %132, %cst_70 {dimension_numbers = #tpu.dot_dimension_numbers<[1], [0], [0], [1], [0, 0, 1, 1], [], []>} : vector<128x128xbf16>, vector<128x128xbf16>, vector<128x128xf32> -> vector<128x128xf32>
    %134 = arith.addf %129, %133 : vector<128x128xf32>
    %135 = vector.extract_strided_slice %1 {offsets = [34, 0], sizes = [128, 128], strides = [1, 1]} : vector<162x128xbf16> to vector<128x128xbf16>
    %c0_i32_71 = arith.constant 0 : i32
    %136 = arith.sitofp %c0_i32_71 : i32 to bf16
    %137 = vector.shape_cast %68 : vector<128x1xi1> to vector<128x1xi1>
    %138 = vector.broadcast %137 : vector<128x1xi1> to vector<128x128xi1>
    %139 = vector.broadcast %136 : bf16 to vector<128x128xbf16>
    %140 = arith.select %138, %135, %139 : vector<128x128xi1>, vector<128x128xbf16>
    %c8 = arith.constant 8 : index
    %c0_72 = arith.constant 0 : index
    %c0_73 = arith.constant 0 : index
    %141 = vector.load %arg4[%c8, %c0_72, %c0_73] : memref<9x128x128xbf16, #tpu.memory_space<vmem>>, vector<1x128x128xbf16>
    %142 = vector.shape_cast %141 : vector<1x128x128xbf16> to vector<128x128xbf16>
    %cst_74 = arith.constant dense<0.000000e+00> : vector<128x128xf32>
    %143 = tpu.matmul %140, %142, %cst_74 {dimension_numbers = #tpu.dot_dimension_numbers<[1], [0], [0], [1], [0, 0, 1, 1], [], []>} : vector<128x128xbf16>, vector<128x128xbf16>, vector<128x128xf32> -> vector<128x128xf32>
    %144 = arith.addf %134, %143 : vector<128x128xf32>
    %c0_75 = arith.constant 0 : index
    %c0_76 = arith.constant 0 : index
    %145 = vector.load %arg5[%c0_75, %c0_76] : memref<1x128xf32, #tpu.memory_space<vmem>>, vector<1x128xf32>
    %146 = vector.broadcast %145 : vector<1x128xf32> to vector<128x128xf32>
    %147 = arith.addf %144, %146 : vector<128x128xf32>
    %cst_77 = arith.constant 0.000000e+00 : f32
    %148 = vector.broadcast %cst_77 : f32 to vector<128x128xf32>
    %149 = arith.maximumf %147, %148 : vector<128x128xf32>
    %150 = arith.truncf %149 : vector<128x128xf32> to vector<128x128xbf16>
    %c0_78 = arith.constant 0 : index
    %c0_79 = arith.constant 0 : index
    %151 = vector.load %arg6[%c0_78, %c0_79] : memref<128x128xbf16, #tpu.memory_space<vmem>>, vector<128x128xbf16>
    %cst_80 = arith.constant dense<0.000000e+00> : vector<128x128xf32>
    %152 = tpu.matmul %150, %151, %cst_80 {dimension_numbers = #tpu.dot_dimension_numbers<[1], [0], [0], [1], [0, 0, 1, 1], [], []>} : vector<128x128xbf16>, vector<128x128xbf16>, vector<128x128xf32> -> vector<128x128xf32>
    %c0_81 = arith.constant 0 : index
    %c0_82 = arith.constant 0 : index
    %153 = vector.load %arg7[%c0_81, %c0_82] : memref<1x128xf32, #tpu.memory_space<vmem>>, vector<1x128xf32>
    %154 = vector.broadcast %153 : vector<1x128xf32> to vector<128x128xf32>
    %155 = arith.addf %152, %154 : vector<128x128xf32>
    %cst_83 = arith.constant 0.000000e+00 : f32
    %156 = vector.broadcast %cst_83 : f32 to vector<128x128xf32>
    %157 = arith.maximumf %155, %156 : vector<128x128xf32>
    %158 = arith.truncf %157 : vector<128x128xf32> to vector<128x128xbf16>
    %c0_84 = arith.constant 0 : index
    %c0_85 = arith.constant 0 : index
    %c0_86 = arith.constant 0 : index
    %159 = vector.load %arg16[%c0_84, %c0_85, %c0_86] : memref<1x128x128xbf16, #tpu.memory_space<vmem>>, vector<1x128x128xbf16>
    %160 = vector.shape_cast %159 : vector<1x128x128xbf16> to vector<128x128xbf16>
    %161 = vector.shape_cast %158 : vector<128x128xbf16> to vector<1x128x128xbf16>
    tpu.vector_store %arg16[%c0_84, %c0_85, %c0_86], %161 {strides = array<i32>} : memref<1x128x128xbf16, #tpu.memory_space<vmem>>, vector<1x128x128xbf16>,
    return
  }
  func.func @transform_0(%arg0: i32) -> (i32, i32, i32) {
    %c0_i32 = arith.constant 0 : i32
    %c0_i32_0 = arith.constant 0 : i32
    %c0_i32_1 = arith.constant 0 : i32
    return %arg0, %c0_i32, %c0_i32_0 : i32, i32, i32
  }
  func.func @transform_1(%arg0: i32) -> (i32, i32) {
    %c0_i32 = arith.constant 0 : i32
    %c0_i32_0 = arith.constant 0 : i32
    %c0_i32_1 = arith.constant 0 : i32
    return %c0_i32, %c0_i32_0 : i32, i32
  }
  func.func @transform_2(%arg0: i32) -> (i32, i32) {
    %c0_i32 = arith.constant 0 : i32
    %c0_i32_0 = arith.constant 0 : i32
    %c0_i32_1 = arith.constant 0 : i32
    return %c0_i32, %c0_i32_0 : i32, i32
  }
  func.func @transform_3(%arg0: i32) -> (i32, i32, i32) {
    %c0_i32 = arith.constant 0 : i32
    %c0_i32_0 = arith.constant 0 : i32
    %c0_i32_1 = arith.constant 0 : i32
    %c0_i32_2 = arith.constant 0 : i32
    return %c0_i32, %c0_i32_0, %c0_i32_1 : i32, i32, i32
  }
  func.func @transform_4(%arg0: i32) -> (i32, i32) {
    %c0_i32 = arith.constant 0 : i32
    %c0_i32_0 = arith.constant 0 : i32
    %c0_i32_1 = arith.constant 0 : i32
    return %c0_i32, %c0_i32_0 : i32, i32
  }
  func.func @transform_5(%arg0: i32) -> (i32, i32) {
    %c0_i32 = arith.constant 0 : i32
    %c0_i32_0 = arith.constant 0 : i32
    %c0_i32_1 = arith.constant 0 : i32
    return %c0_i32, %c0_i32_0 : i32, i32
  }
  func.func @transform_6(%arg0: i32) -> (i32, i32) {
    %c0_i32 = arith.constant 0 : i32
    %c0_i32_0 = arith.constant 0 : i32
    %c0_i32_1 = arith.constant 0 : i32
    return %c0_i32, %c0_i32_0 : i32, i32
  }
  func.func @transform_7(%arg0: i32) -> (i32, i32) {
    %c0_i32 = arith.constant 0 : i32
    %c0_i32_0 = arith.constant 0 : i32
    %c0_i32_1 = arith.constant 0 : i32
    return %c0_i32, %c0_i32_0 : i32, i32
  }
  func.func @transform_8(%arg0: i32) -> (i32, i32) {
    %c0_i32 = arith.constant 0 : i32
    %c0_i32_0 = arith.constant 0 : i32
    %c0_i32_1 = arith.constant 0 : i32
    return %c0_i32, %c0_i32_0 : i32, i32
  }
  func.func @transform_9(%arg0: i32) -> (i32, i32) {
    %c0_i32 = arith.constant 0 : i32
    %c0_i32_0 = arith.constant 0 : i32
    %c0_i32_1 = arith.constant 0 : i32
    return %c0_i32, %c0_i32_0 : i32, i32
  }
  func.func @transform_10(%arg0: i32) -> (i32, i32) {
    %c0_i32 = arith.constant 0 : i32
    %c0_i32_0 = arith.constant 0 : i32
    %c0_i32_1 = arith.constant 0 : i32
    return %c0_i32, %c0_i32_0 : i32, i32
  }
  func.func @transform_11(%arg0: i32) -> (i32, i32) {
    %c0_i32 = arith.constant 0 : i32
    %c0_i32_0 = arith.constant 0 : i32
    %c0_i32_1 = arith.constant 0 : i32
    return %c0_i32, %c0_i32_0 : i32, i32
  }
  func.func @transform_12(%arg0: i32) -> (i32, i32) {
    %c0_i32 = arith.constant 0 : i32
    %c0_i32_0 = arith.constant 0 : i32
    %c0_i32_1 = arith.constant 0 : i32
    return %c0_i32, %c0_i32_0 : i32, i32
  }
  func.func @transform_13(%arg0: i32) -> (i32, i32, i32) {
    %c0_i32 = arith.constant 0 : i32
    %c0_i32_0 = arith.constant 0 : i32
    %c0_i32_1 = arith.constant 0 : i32
    return %arg0, %c0_i32, %c0_i32_0 : i32, i32, i32
  }
  func.func @transform_14(%arg0: i32) -> (i32, i32, i32) {
    %c0_i32 = arith.constant 0 : i32
    %c0_i32_0 = arith.constant 0 : i32
    %c0_i32_1 = arith.constant 0 : i32
    return %arg0, %c0_i32, %c0_i32_0 : i32, i32, i32
  }
  func.func @transform_15(%arg0: i32) -> (i32, i32, i32) {
    %c0_i32 = arith.constant 0 : i32
    %c0_i32_0 = arith.constant 0 : i32
    %c0_i32_1 = arith.constant 0 : i32
    return %arg0, %c0_i32, %c0_i32_0 : i32, i32, i32
  }
  func.func @transform_16(%arg0: i32) -> (i32, i32, i32) {
    %c0_i32 = arith.constant 0 : i32
    %c0_i32_0 = arith.constant 0 : i32
    %c0_i32_1 = arith.constant 0 : i32
    return %arg0, %c0_i32, %c0_i32_0 : i32, i32, i32
  }
}

module attributes {stable_mosaic.version = 11 : i64} {
  func.func @_sadecoder_attn_kernel(%arg0: i32, %arg1: i32, %arg2: memref<1x128x32xbf16, #tpu.memory_space<vmem>>, %arg3: memref<1x32x128xbf16, #tpu.memory_space<vmem>>, %arg4: memref<1x128x128xbf16, #tpu.memory_space<vmem>>, %arg5: memref<1x1x128xf32, #tpu.memory_space<vmem>>, %arg6: memref<128x128xbf16, #tpu.memory_space<vmem>>, %arg7: memref<1x128x128xf32, #tpu.memory_space<vmem>>, %arg8: memref<1x128x128xf32, #tpu.memory_space<vmem>>) attributes {dimension_semantics = [#tpu.dimension_semantics<parallel>, #tpu.dimension_semantics<parallel>], iteration_bounds = array<i64: 2, 1>, scalar_prefetch = 0 : i64, scratch_operands = 0 : i64, tpu.core_type = #tpu.core_type<tc>, window_params = [{transform_indices = @transform_0, window_bounds = array<i64: 1, 128, 32>}, {transform_indices = @transform_1, window_bounds = array<i64: 1, 32, 128>}, {transform_indices = @transform_2, window_bounds = array<i64: 1, 128, 128>}, {transform_indices = @transform_3, window_bounds = array<i64: 1, 1, 128>}, {pipeline_mode = #tpu.pipeline_mode<synchronous>, transform_indices = @transform_4, window_bounds = array<i64: 128, 128>}, {transform_indices = @transform_5, window_bounds = array<i64: 1, 128, 128>}, {transform_indices = @transform_6, window_bounds = array<i64: 1, 128, 128>}]} {
    %c0 = arith.constant 0 : index
    %c0_0 = arith.constant 0 : index
    %c0_1 = arith.constant 0 : index
    %0 = vector.load %arg2[%c0, %c0_0, %c0_1] : memref<1x128x32xbf16, #tpu.memory_space<vmem>>, vector<1x128x32xbf16>
    %1 = vector.shape_cast %0 : vector<1x128x32xbf16> to vector<128x32xbf16>
    %c0_2 = arith.constant 0 : index
    %c0_3 = arith.constant 0 : index
    %c0_4 = arith.constant 0 : index
    %2 = vector.load %arg3[%c0_2, %c0_3, %c0_4] : memref<1x32x128xbf16, #tpu.memory_space<vmem>>, vector<1x32x128xbf16>
    %3 = vector.shape_cast %2 : vector<1x32x128xbf16> to vector<32x128xbf16>
    %cst = arith.constant dense<0.000000e+00> : vector<128x128xf32>
    %4 = tpu.matmul %1, %3, %cst {dimension_numbers = #tpu.dot_dimension_numbers<[1], [0], [0], [1], [0, 0, 1, 1], [], []>} : vector<128x32xbf16>, vector<32x128xbf16>, vector<128x128xf32> -> vector<128x128xf32>
    %cst_5 = arith.constant dense<0xFF800000> : vector<128xf32>
    %5 = vector.multi_reduction <maximumf>, %4, %cst_5 [1] : vector<128x128xf32> to vector<128xf32>
    %6 = vector.shape_cast %5 : vector<128xf32> to vector<128x1xf32>
    %7 = vector.broadcast %6 : vector<128x1xf32> to vector<128x128xf32>
    %8 = arith.subf %4, %7 : vector<128x128xf32>
    %9 = math.exp %8 : vector<128x128xf32>
    %cst_6 = arith.constant dense<0.000000e+00> : vector<128xf32>
    %10 = vector.multi_reduction <add>, %9, %cst_6 [1] : vector<128x128xf32> to vector<128xf32>
    %11 = vector.shape_cast %10 : vector<128xf32> to vector<128x1xf32>
    %cst_7 = arith.constant 1.000000e+00 : f32
    %12 = vector.broadcast %cst_7 : f32 to vector<128x1xf32>
    %13 = arith.divf %12, %11 : vector<128x1xf32>
    %14 = vector.broadcast %13 : vector<128x1xf32> to vector<128x128xf32>
    %15 = arith.mulf %9, %14 : vector<128x128xf32>
    %c0_8 = arith.constant 0 : index
    %c0_9 = arith.constant 0 : index
    %c0_10 = arith.constant 0 : index
    %16 = vector.load %arg8[%c0_8, %c0_9, %c0_10] : memref<1x128x128xf32, #tpu.memory_space<vmem>>, vector<1x128x128xf32>
    %17 = vector.shape_cast %16 : vector<1x128x128xf32> to vector<128x128xf32>
    %18 = vector.shape_cast %15 : vector<128x128xf32> to vector<1x128x128xf32>
    tpu.vector_store %arg8[%c0_8, %c0_9, %c0_10], %18 {strides = array<i32>} : memref<1x128x128xf32, #tpu.memory_space<vmem>>, vector<1x128x128xf32>,
    %19 = arith.truncf %15 : vector<128x128xf32> to vector<128x128xbf16>
    %c0_11 = arith.constant 0 : index
    %c0_12 = arith.constant 0 : index
    %c0_13 = arith.constant 0 : index
    %20 = vector.load %arg4[%c0_11, %c0_12, %c0_13] : memref<1x128x128xbf16, #tpu.memory_space<vmem>>, vector<1x128x128xbf16>
    %21 = vector.shape_cast %20 : vector<1x128x128xbf16> to vector<128x128xbf16>
    %cst_14 = arith.constant dense<0.000000e+00> : vector<128x128xf32>
    %22 = tpu.matmul %19, %21, %cst_14 {dimension_numbers = #tpu.dot_dimension_numbers<[1], [0], [0], [1], [0, 0, 1, 1], [], []>} : vector<128x128xbf16>, vector<128x128xbf16>, vector<128x128xf32> -> vector<128x128xf32>
    %23 = arith.truncf %22 : vector<128x128xf32> to vector<128x128xbf16>
    %c0_15 = arith.constant 0 : index
    %c0_16 = arith.constant 0 : index
    %24 = vector.load %arg6[%c0_15, %c0_16] : memref<128x128xbf16, #tpu.memory_space<vmem>>, vector<128x128xbf16>
    %cst_17 = arith.constant dense<0.000000e+00> : vector<128x128xf32>
    %25 = tpu.matmul %23, %24, %cst_17 {dimension_numbers = #tpu.dot_dimension_numbers<[1], [0], [0], [1], [0, 0, 1, 1], [], []>} : vector<128x128xbf16>, vector<128x128xbf16>, vector<128x128xf32> -> vector<128x128xf32>
    %c0_18 = arith.constant 0 : index
    %c0_19 = arith.constant 0 : index
    %c0_20 = arith.constant 0 : index
    %26 = vector.load %arg5[%c0_18, %c0_19, %c0_20] : memref<1x1x128xf32, #tpu.memory_space<vmem>>, vector<1x1x128xf32>
    %27 = vector.shape_cast %26 : vector<1x1x128xf32> to vector<1x128xf32>
    %28 = vector.broadcast %27 : vector<1x128xf32> to vector<128x128xf32>
    %29 = arith.addf %25, %28 : vector<128x128xf32>
    %cst_21 = arith.constant 0.000000e+00 : f32
    %30 = vector.broadcast %cst_21 : f32 to vector<128x128xf32>
    %31 = arith.maximumf %29, %30 : vector<128x128xf32>
    %c0_22 = arith.constant 0 : index
    %c0_23 = arith.constant 0 : index
    %c0_24 = arith.constant 0 : index
    %32 = vector.load %arg7[%c0_22, %c0_23, %c0_24] : memref<1x128x128xf32, #tpu.memory_space<vmem>>, vector<1x128x128xf32>
    %33 = vector.shape_cast %32 : vector<1x128x128xf32> to vector<128x128xf32>
    %34 = vector.shape_cast %31 : vector<128x128xf32> to vector<1x128x128xf32>
    tpu.vector_store %arg7[%c0_22, %c0_23, %c0_24], %34 {strides = array<i32>} : memref<1x128x128xf32, #tpu.memory_space<vmem>>, vector<1x128x128xf32>,
    return
  }
  func.func @transform_0(%arg0: i32, %arg1: i32) -> (i32, i32, i32) {
    %c0_i32 = arith.constant 0 : i32
    %c0_i32_0 = arith.constant 0 : i32
    return %arg0, %arg1, %c0_i32 : i32, i32, i32
  }
  func.func @transform_1(%arg0: i32, %arg1: i32) -> (i32, i32, i32) {
    %c0_i32 = arith.constant 0 : i32
    %c0_i32_0 = arith.constant 0 : i32
    %c0_i32_1 = arith.constant 0 : i32
    return %arg0, %c0_i32, %c0_i32_0 : i32, i32, i32
  }
  func.func @transform_2(%arg0: i32, %arg1: i32) -> (i32, i32, i32) {
    %c0_i32 = arith.constant 0 : i32
    %c0_i32_0 = arith.constant 0 : i32
    %c0_i32_1 = arith.constant 0 : i32
    return %arg0, %c0_i32, %c0_i32_0 : i32, i32, i32
  }
  func.func @transform_3(%arg0: i32, %arg1: i32) -> (i32, i32, i32) {
    %c0_i32 = arith.constant 0 : i32
    %c0_i32_0 = arith.constant 0 : i32
    %c0_i32_1 = arith.constant 0 : i32
    return %arg0, %c0_i32, %c0_i32_0 : i32, i32, i32
  }
  func.func @transform_4(%arg0: i32, %arg1: i32) -> (i32, i32) {
    %c0_i32 = arith.constant 0 : i32
    %c0_i32_0 = arith.constant 0 : i32
    %c0_i32_1 = arith.constant 0 : i32
    return %c0_i32, %c0_i32_0 : i32, i32
  }
  func.func @transform_5(%arg0: i32, %arg1: i32) -> (i32, i32, i32) {
    %c0_i32 = arith.constant 0 : i32
    %c0_i32_0 = arith.constant 0 : i32
    return %arg0, %arg1, %c0_i32 : i32, i32, i32
  }
  func.func @transform_6(%arg0: i32, %arg1: i32) -> (i32, i32, i32) {
    %c0_i32 = arith.constant 0 : i32
    %c0_i32_0 = arith.constant 0 : i32
    return %arg0, %arg1, %c0_i32 : i32, i32, i32
  }
}

</mosaic_0001>

<llo_original>
// kernel: sadecoder_forward.3
$region0: #{sadecoder_forward.3}
  #allocation0 [shape = 'u32[]', space=smem, size = 0x4, offset = 0x4, fixed_abs, tag = 'smem constant byte address 0x4 - core index']
  #allocation1 [shape = 'u32[144,128]{1,0:T(1,128)}', space=vmem, size = 0x12000, scoped, tag = 'internal scratch']
  %s0 = inlined_call_operand.vmem [shape: bf16[2,128,32], index: 0, kind: input, shape index: {}]
  %s1 = inlined_call_operand.vmem [shape: bf16[2,32,128], index: 1, kind: input, shape index: {}]
  %s2 = inlined_call_operand.vmem [shape: bf16[2,128,128], index: 2, kind: input, shape index: {}]
  %s3 = inlined_call_operand.vmem [shape: f32[2,1,128], index: 3, kind: input, shape index: {}]
  %s4 = inlined_call_operand.vmem [shape: bf16[128,128], index: 4, kind: input, shape index: {}]
  %s5 = inlined_call_operand.hbm [shape: f32[2,128,128], index: 5, kind: output, shape index: {0}]
  %s6 = inlined_call_operand.hbm [shape: f32[2,128,128], index: 6, kind: output, shape index: {1}]
  %7 = xla_tuple %s5, %s6
  %s8 = sld [smem:[#allocation0]]
  $region61: #{sadecoder_forward.3} parent=0
    _
  %s10 = ssub.s32 1, %s8
  %s11 = scalar_select 0, %s10, %s8
  $region1: #{sadecoder_forward.3} parent=0
    #allocation2 [shape = 'u8[131072]{0}', space=vmem, size = 0x20000, scoped, tag = 'output window, operand 0']
    #allocation3 [shape = 's32[2]{0}', space=sflag, size = 0x8, scoped, tag = 'scoped memory for sadecoder_forward.3']
    #allocation4 [shape = 'u8[131072]{0}', space=vmem, size = 0x20000, scoped, tag = 'output window, operand 1']
    #allocation5 [shape = 's32[2]{0}', space=sflag, size = 0x8, scoped, tag = 'scoped memory for sadecoder_forward.3']
    %12 = vsyncpa [#allocation3], 0
    %s13 = scalar_lea.sflag [#allocation3], 1
    %14 = vsyncpa %s13, 0
    %15 = vsyncpa [#allocation5], 0
    %s16 = scalar_lea.sflag [#allocation5], 1
    %17 = vsyncpa %s16, 0
    loop: start=0, step=1, limit=4
    $region2: #{sadecoder_forward.3} parent=1 // loop_pre_header
      _
    $region3: #{sadecoder_forward.3} parent=1 // loop_header
      %s19 = sphi 0, %s23
      %p20 = scmp.ge.s32.totalorder %s19, 4
      %s26 = sphi 0, %s38
      %s27 = sphi 0, %s34
      %s28 = sphi 0, %s26
      %s29 = sphi 0, %s27
      %s30 = sphi 0, %s28
      %s31 = sphi 0, %s29
      %s43 = sphi 0, %s45
      %s46 = sphi 0, %s43
      %s47 = sphi 0, %s46
      %s63 = sphi 0, %s47
      %s69 = sphi 0, %s71
      %s72 = sphi 0, %s69
      %s73 = sphi 0, %s72
      %s89 = sphi 0, %s73
      %s95 = sphi 0, %s97
      %s98 = sphi 0, %s95
      %s99 = sphi 0, %s98
      %s115 = sphi 0, %s99
      %s121 = sphi 0, %s123
      %s124 = sphi 0, %s121
      %s125 = sphi 0, %s124
      %s141 = sphi 0, %s125
      %s145 = sphi 0, %s145
      %s147 = sphi 0, %s145
      %s148 = sphi 0, %s147
      %s162 = sphi 0, %s148
      %s170 = sphi 0, %s172
      %s173 = sphi 0, %s170
      %s174 = sphi 0, %s173
      %s190 = sphi 0, %s174
      %s198 = sphi 0, %s200
      %s201 = sphi 0, %s198
      %s202 = sphi 0, %s201
      %s218 = sphi 0, %s202
    $region4: #{sadecoder_forward.3} parent=1 // loop_header_branch
      %22 = sbr.rel (%p20) target = $region8
    $region5: #{sadecoder_forward.3} parent=1 // loop_body
      %s24 = ssub.s32 %s19, 1
      %s25 = ssub.s32 %s19, 2
      %s32 = sadd.s32 1, %s27
      %p33 = scmp.ge.s32.totalorder %s32, 1
      %s34 = scalar_select %p33, 0, %s32
      %s35 = sadd.s32 1, %s26
      %s36 = scalar_select %p33, %s35, %s26
      %p37 = scmp.ge.s32.totalorder %s36, 2
      %s38 = scalar_select %p37, 0, %s36
      %s39 = ssub.s32 %s26, %s38
      %s40 = ssub.s32 %s27, %s34
      %s41 = sor.u32 %s39, %s40
      %p42 = scmp.eq.s32.totalorder %s41, 0
      %s44 = sadd.s32 %s43, 1
      %s45 = scalar_select %p42, %s43, %s44
      %p48 = pneg %p42
      %p49 = scmp.eq.s32.totalorder %s19, 1
      %p50 = por %p48, %p49
      %p51 = scmp.ne.s32.totalorder %s43, %s46
      %p52 = scmp.eq.s32.totalorder %s19, 0
      %p53 = por %p51, %p52
      %p54 = scmp.ne.s32.totalorder %s43, %s46
      %p55 = scmp.eq.s32.totalorder %s24, 1
      %p56 = por %p54, %p55
      %p57 = scmp.ne.s32.totalorder %s46, %s47
      %p58 = scmp.eq.s32.totalorder %s24, 0
      %p59 = por %p57, %p58
      %p60 = scmp.ne.s32.totalorder %s46, %s47
      %p61 = scmp.eq.s32.totalorder %s25, 1
      %p62 = por %p60, %p61
      %p64 = scmp.ne.s32.totalorder %s47, %s63
      %p65 = scmp.eq.s32.totalorder %s25, 0
      %p66 = por %p64, %p65
      %s67 = ssub.s32 %s26, %s38
      %p68 = scmp.eq.s32.totalorder %s67, 0
      %s70 = sadd.s32 %s69, 1
      %s71 = scalar_select %p68, %s69, %s70
      %p74 = pneg %p68
      %p75 = scmp.eq.s32.totalorder %s19, 1
      %p76 = por %p74, %p75
      %p77 = scmp.ne.s32.totalorder %s69, %s72
      %p78 = scmp.eq.s32.totalorder %s19, 0
      %p79 = por %p77, %p78
      %p80 = scmp.ne.s32.totalorder %s69, %s72
      %p81 = scmp.eq.s32.totalorder %s24, 1
      %p82 = por %p80, %p81
      %p83 = scmp.ne.s32.totalorder %s72, %s73
      %p84 = scmp.eq.s32.totalorder %s24, 0
      %p85 = por %p83, %p84
      %p86 = scmp.ne.s32.totalorder %s72, %s73
      %p87 = scmp.eq.s32.totalorder %s25, 1
      %p88 = por %p86, %p87
      %p90 = scmp.ne.s32.totalorder %s73, %s89
      %p91 = scmp.eq.s32.totalorder %s25, 0
      %p92 = por %p90, %p91
      %s93 = ssub.s32 %s26, %s38
      %p94 = scmp.eq.s32.totalorder %s93, 0
      %s96 = sadd.s32 %s95, 1
      %s97 = scalar_select %p94, %s95, %s96
      %p100 = pneg %p94
      %p101 = scmp.eq.s32.totalorder %s19, 1
      %p102 = por %p100, %p101
      %p103 = scmp.ne.s32.totalorder %s95, %s98
      %p104 = scmp.eq.s32.totalorder %s19, 0
      %p105 = por %p103, %p104
      %p106 = scmp.ne.s32.totalorder %s95, %s98
      %p107 = scmp.eq.s32.totalorder %s24, 1
      %p108 = por %p106, %p107
      %p109 = scmp.ne.s32.totalorder %s98, %s99
      %p110 = scmp.eq.s32.totalorder %s24, 0
      %p111 = por %p109, %p110
      %p112 = scmp.ne.s32.totalorder %s98, %s99
      %p113 = scmp.eq.s32.totalorder %s25, 1
      %p114 = por %p112, %p113
      %p116 = scmp.ne.s32.totalorder %s99, %s115
      %p117 = scmp.eq.s32.totalorder %s25, 0
      %p118 = por %p116, %p117
      %s119 = ssub.s32 %s26, %s38
      %p120 = scmp.eq.s32.totalorder %s119, 0
      %s122 = sadd.s32 %s121, 1
      %s123 = scalar_select %p120, %s121, %s122
      %p126 = pneg %p120
      %p127 = scmp.eq.s32.totalorder %s19, 1
      %p128 = por %p126, %p127
      %p129 = scmp.ne.s32.totalorder %s121, %s124
      %p130 = scmp.eq.s32.totalorder %s19, 0
      %p131 = por %p129, %p130
      %p132 = scmp.ne.s32.totalorder %s121, %s124
      %p133 = scmp.eq.s32.totalorder %s24, 1
      %p134 = por %p132, %p133
      %p135 = scmp.ne.s32.totalorder %s124, %s125
      %p136 = scmp.eq.s32.totalorder %s24, 0
      %p137 = por %p135, %p136
      %p138 = scmp.ne.s32.totalorder %s124, %s125
      %p139 = scmp.eq.s32.totalorder %s25, 1
      %p140 = por %p138, %p139
      %p142 = scmp.ne.s32.totalorder %s125, %s141
      %p143 = scmp.eq.s32.totalorder %s25, 0
      %p144 = por %p142, %p143
      %s146 = sadd.s32 %s145, 1
      %p149 = scmp.eq.s32.totalorder %s19, 1
      %p150 = scmp.ne.s32.totalorder %s145, %s147
      %p151 = scmp.eq.s32.totalorder %s19, 0
      %p152 = por %p150, %p151
      %p153 = scmp.ne.s32.totalorder %s145, %s147
      %p154 = scmp.eq.s32.totalorder %s24, 1
      %p155 = por %p153, %p154
      %p156 = scmp.ne.s32.totalorder %s147, %s148
      %p157 = scmp.eq.s32.totalorder %s24, 0
      %p158 = por %p156, %p157
      %p159 = scmp.ne.s32.totalorder %s147, %s148
      %p160 = scmp.eq.s32.totalorder %s25, 1
      %p161 = por %p159, %p160
      %p163 = scmp.ne.s32.totalorder %s148, %s162
      %p164 = scmp.eq.s32.totalorder %s25, 0
      %p165 = por %p163, %p164
      %s166 = ssub.s32 %s26, %s38
      %s167 = ssub.s32 %s27, %s34
      %s168 = sor.u32 %s166, %s167
      %p169 = scmp.eq.s32.totalorder %s168, 0
      %s171 = sadd.s32 %s170, 1
      %s172 = scalar_select %p169, %s170, %s171
      %p175 = pneg %p169
      %p176 = scmp.eq.s32.totalorder %s19, 1
      %p177 = por %p175, %p176
      %p178 = scmp.ne.s32.totalorder %s170, %s173
      %p179 = scmp.eq.s32.totalorder %s19, 0
      %p180 = por %p178, %p179
      %p181 = scmp.ne.s32.totalorder %s170, %s173
      %p182 = scmp.eq.s32.totalorder %s24, 1
      %p183 = por %p181, %p182
      %p184 = scmp.ne.s32.totalorder %s173, %s174
      %p185 = scmp.eq.s32.totalorder %s24, 0
      %p186 = por %p184, %p185
      %p187 = scmp.ne.s32.totalorder %s173, %s174
      %p188 = scmp.eq.s32.totalorder %s25, 1
      %p189 = por %p187, %p188
      %p191 = scmp.ne.s32.totalorder %s174, %s190
      %p192 = scmp.eq.s32.totalorder %s25, 0
      %p193 = por %p191, %p192
      %s194 = ssub.s32 %s26, %s38
      %s195 = ssub.s32 %s27, %s34
      %s196 = sor.u32 %s194, %s195
      %p197 = scmp.eq.s32.totalorder %s196, 0
      %s199 = sadd.s32 %s198, 1
      %s200 = scalar_select %p197, %s198, %s199
      %p203 = pneg %p197
      %p204 = scmp.eq.s32.totalorder %s19, 1
      %p205 = por %p203, %p204
      %p206 = scmp.ne.s32.totalorder %s198, %s201
      %p207 = scmp.eq.s32.totalorder %s19, 0
      %p208 = por %p206, %p207
      %p209 = scmp.ne.s32.totalorder %s198, %s201
      %p210 = scmp.eq.s32.totalorder %s24, 1
      %p211 = por %p209, %p210
      %p212 = scmp.ne.s32.totalorder %s201, %s202
      %p213 = scmp.eq.s32.totalorder %s24, 0
      %p214 = por %p212, %p213
      %p215 = scmp.ne.s32.totalorder %s201, %s202
      %p216 = scmp.eq.s32.totalorder %s25, 1
      %p217 = por %p215, %p216
      %p219 = scmp.ne.s32.totalorder %s202, %s218
      %p220 = scmp.eq.s32.totalorder %s25, 0
      %p221 = por %p219, %p220
      %p222 = scmp.le.s32.totalorder 1, %s19
      %p223 = scmp.lt.s32.totalorder %s19, 3
      %p224 = pnand %p222, %p223
      %p225 = pneg %p224
      // Predicated region
      $region9: #{sadecoder_forward.3} parent=5 // pred_check
        _
      $region10: #{sadecoder_forward.3} parent=5 // pred_check_branch
        %227 = sbr.rel (%p224) target = $region12
      $region11: #{sadecoder_forward.3} parent=5 // pred_region
        %s228 = ssub.s32 %s19, 1
        // Predicated region
        $region13: #{sadecoder_forward.3} parent=11 // pred_check
          %p229 = pneg %p158
        $region14: #{sadecoder_forward.3} parent=11 // pred_check_branch
          %231 = sbr.rel (%p229) target = $region16
        $region15: #{sadecoder_forward.3} parent=11 // pred_region
          _
        $region16: #{sadecoder_forward.3} parent=11 // pred_fallthru
          _
      $region12: #{sadecoder_forward.3} parent=5 // pred_fallthru
        _
      %p232 = scmp.lt.s32.totalorder %s19, 2
      // Predicated region
      $region17: #{sadecoder_forward.3} parent=5 // pred_check
        %p233 = pneg %p232
      $region18: #{sadecoder_forward.3} parent=5 // pred_check_branch
        %235 = sbr.rel (%p233) target = $region20
      $region19: #{sadecoder_forward.3} parent=5 // pred_region
        // Predicated region
        $region21: #{sadecoder_forward.3} parent=19 // pred_check
          %p236 = pneg %p53
        $region22: #{sadecoder_forward.3} parent=19 // pred_check_branch
          %238 = sbr.rel (%p236) target = $region24
        $region23: #{sadecoder_forward.3} parent=19 // pred_region
          %s239 = smul.u32 16, %s27
          %p240 = scmp.lt.s32.totalorder %s26, 1
          %s241 = scalar_select %p240, %s26, 1
          %p242 = scmp.lt.s32.totalorder %s239, 15
          %s243 = scalar_select %p242, %s239, 15
          %s244 = smul.addr %s241, 16
          %s245 = sadd.s32 %s243, %s244
          %s246 = smul.addr %s245, 4
          %s247 = scalar_lea.vmem %s0, %s246
          %s248 = smul.u32 16, %s27
        $region24: #{sadecoder_forward.3} parent=19 // pred_fallthru
          _
        // Predicated region
        $region25: #{sadecoder_forward.3} parent=19 // pred_check
          %p249 = pneg %p79
        $region26: #{sadecoder_forward.3} parent=19 // pred_check_branch
          %251 = sbr.rel (%p249) target = $region28
        $region27: #{sadecoder_forward.3} parent=19 // pred_region
          %p252 = scmp.lt.s32.totalorder %s26, 1
          %s253 = scalar_select %p252, %s26, 1
          %s254 = smul.addr %s253, 4
          %s255 = smul.addr %s254, 4
          %s256 = scalar_lea.vmem %s1, %s255
        $region28: #{sadecoder_forward.3} parent=19 // pred_fallthru
          _
        // Predicated region
        $region29: #{sadecoder_forward.3} parent=19 // pred_check
          %p257 = pneg %p105
        $region30: #{sadecoder_forward.3} parent=19 // pred_check_branch
          %259 = sbr.rel (%p257) target = $region32
        $region31: #{sadecoder_forward.3} parent=19 // pred_region
          %p260 = scmp.lt.s32.totalorder %s26, 1
          %s261 = scalar_select %p260, %s26, 1
          %s262 = smul.addr %s261, 16
          %s263 = smul.addr %s262, 4
          %s264 = scalar_lea.vmem %s2, %s263
        $region32: #{sadecoder_forward.3} parent=19 // pred_fallthru
          _
        // Predicated region
        $region33: #{sadecoder_forward.3} parent=19 // pred_check
          %p265 = pneg %p131
        $region34: #{sadecoder_forward.3} parent=19 // pred_check_branch
          %267 = sbr.rel (%p265) target = $region36
        $region35: #{sadecoder_forward.3} parent=19 // pred_region
          %p268 = scmp.lt.s32.totalorder %s26, 1
          %s269 = scalar_select %p268, %s26, 1
          %s270 = scalar_lea.vmem %s3, %s269
        $region36: #{sadecoder_forward.3} parent=19 // pred_fallthru
          _
      $region20: #{sadecoder_forward.3} parent=5 // pred_fallthru
        _
      %p271 = scmp.le.s32.totalorder 1, %s19
      %p272 = scmp.lt.s32.totalorder %s19, 3
      %p273 = pnand %p271, %p272
      %p274 = pneg %p273
      // Predicated region
      $region37: #{sadecoder_forward.3} parent=5 // pred_check
        _
      $region38: #{sadecoder_forward.3} parent=5 // pred_check_branch
        %276 = sbr.rel (%p273) target = $region40
      $region39: #{sadecoder_forward.3} parent=5 // pred_region
        %s277 = ssub.s32 %s19, 1
        %s278 = smul.u32 16, %s29
        %p279 = scmp.lt.s32.totalorder %s28, 1
        %s280 = scalar_select %p279, %s28, 1
        %p281 = scmp.lt.s32.totalorder %s278, 15
        %s282 = scalar_select %p281, %s278, 15
        %s283 = smul.addr %s280, 16
        %s284 = sadd.s32 %s282, %s283
        %s285 = smul.addr %s284, 4
        %s286 = scalar_lea.vmem %s0, %s285
        %p287 = pneg %p59
        %p288 = pneg %p56
        %p289 = scmp.lt.s32.totalorder %s28, 1
        %s290 = scalar_select %p289, %s28, 1
        %s291 = smul.addr %s290, 4
        %s292 = smul.addr %s291, 4
        %s293 = scalar_lea.vmem %s1, %s292
        %p294 = pneg %p85
        %p295 = pneg %p82
        %p296 = scmp.lt.s32.totalorder %s28, 1
        %s297 = scalar_select %p296, %s28, 1
        %s298 = smul.addr %s297, 16
        %s299 = smul.addr %s298, 4
        %s300 = scalar_lea.vmem %s2, %s299
        %p301 = pneg %p111
        %p302 = pneg %p108
        %p303 = scmp.lt.s32.totalorder %s28, 1
        %s304 = scalar_select %p303, %s28, 1
        %s305 = scalar_lea.vmem %s3, %s304
        %p306 = pneg %p137
        %p307 = pneg %p134
        %p308 = pneg %p158
        %p309 = pneg %p155
        %p310 = pneg %p186
        %p311 = pneg %p183
        %s312 = sand.u32 %s173, 1
        %s313 = scalar_lea.sflag [#allocation3], %s312
        %s314 = sand.u32 %s173, 1
        %s315 = smul.addr %s314, 128
        %s316 = scalar_lea.vmem [#allocation2], %s315
        %p317 = pneg %p214
        %p318 = pneg %p211
        %s319 = sand.u32 %s201, 1
        %s320 = scalar_lea.sflag [#allocation5], %s319
        %s321 = sand.u32 %s201, 1
        %s322 = smul.addr %s321, 128
        %s323 = scalar_lea.vmem [#allocation4], %s322
        %s324 = smul.u32 16, %s29
        %p325 = scmp.lt.s32.totalorder %s28, 1
        %s326 = scalar_select %p325, %s28, 1
        %p327 = scmp.lt.s32.totalorder %s324, 15
        %s328 = scalar_select %p327, %s324, 15
        %s329 = smul.addr %s326, 16
        %s330 = sadd.s32 %s328, %s329
        %s331 = smul.addr %s330, 4
        %s332 = scalar_lea.vmem %s0, %s331
        %s333 = smul.u32 16, %s29
        %p334 = scmp.lt.s32.totalorder %s28, 1
        %s335 = scalar_select %p334, %s28, 1
        %s336 = smul.addr %s335, 4
        %s337 = smul.addr %s336, 4
        %s338 = scalar_lea.vmem %s1, %s337
        %p339 = scmp.lt.s32.totalorder %s28, 1
        %s340 = scalar_select %p339, %s28, 1
        %s341 = smul.addr %s340, 16
        %s342 = smul.addr %s341, 4
        %s343 = scalar_lea.vmem %s2, %s342
        %p344 = scmp.lt.s32.totalorder %s28, 1
        %s345 = scalar_select %p344, %s28, 1
        %s346 = scalar_lea.vmem %s3, %s345
        %s347 = smul.u32 16, %s29
        %s348 = smul.u32 16, %s29
        %v350 = vld [vmem:[%s332] sm:$0xf]
        %v351 = vld [vmem:[%s332 + $0x4] sm:$0xf]
        %v352 = vld [vmem:[%s332 + $0x8] sm:$0xf]
        %v353 = vld [vmem:[%s332 + $0xc] sm:$0xf]
        %v354 = vld [vmem:[%s332 + $0x10] sm:$0xf]
        %v355 = vld [vmem:[%s332 + $0x14] sm:$0xf]
        %v356 = vld [vmem:[%s332 + $0x18] sm:$0xf]
        %v357 = vld [vmem:[%s332 + $0x1c] sm:$0xf]
        %v358 = vld [vmem:[%s332 + $0x20] sm:$0xf]
        %v359 = vld [vmem:[%s332 + $0x24] sm:$0xf]
        %v360 = vld [vmem:[%s332 + $0x28] sm:$0xf]
        %v361 = vld [vmem:[%s332 + $0x2c] sm:$0xf]
        %v362 = vld [vmem:[%s332 + $0x30] sm:$0xf]
        %v363 = vld [vmem:[%s332 + $0x34] sm:$0xf]
        %v364 = vld [vmem:[%s332 + $0x38] sm:$0xf]
        %v365 = vld [vmem:[%s332 + $0x3c] sm:$0xf]
        %v366 = vld [vmem:[%s338] sm:$0xf]
        %v367 = vld [vmem:[%s338 + $0x4] sm:$0xf]
        %v368 = vld [vmem:[%s338 + $0x8] sm:$0xf]
        %v369 = vld [vmem:[%s338 + $0xc] sm:$0xf]
        %v386 = vunpack.c.l.b16 %v350
        %v387 = vunpack.c.l.b16 %v351
        %v388 = vunpack.c.l.b16 %v352
        %v389 = vunpack.c.l.b16 %v353
        %v390 = vunpack.c.l.b16 %v354
        %v391 = vunpack.c.l.b16 %v355
        %v392 = vunpack.c.l.b16 %v356
        %v393 = vunpack.c.l.b16 %v357
        %v394 = vunpack.c.l.b16 %v358
        %v395 = vunpack.c.l.b16 %v359
        %v396 = vunpack.c.l.b16 %v360
        %v397 = vunpack.c.l.b16 %v361
        %v398 = vunpack.c.l.b16 %v362
        %v399 = vunpack.c.l.b16 %v363
        %v400 = vunpack.c.l.b16 %v364
        %v401 = vunpack.c.l.b16 %v365
        %v402 = vpack.c.b16 %v387, %v386
        %v403 = vpack.c.b16 %v389, %v388
        %v404 = vpack.c.b16 %v391, %v390
        %v405 = vpack.c.b16 %v393, %v392
        %v406 = vpack.c.b16 %v395, %v394
        %v407 = vpack.c.b16 %v397, %v396
        %v408 = vpack.c.b16 %v399, %v398
        %v409 = vpack.c.b16 %v401, %v400
        %v414 = vunpack.c.l.b16 %v366
        %v415 = vunpack.c.l.b16 %v367
        %v416 = vunpack.c.l.b16 %v368
        %v417 = vunpack.c.l.b16 %v369
        %v418 = vpack.c.b16 %v415, %v414
        %v419 = vpack.c.b16 %v417, %v416
        %vm422 = vcmask 261120
        %v424 = vsel %vm422, %v402, 0
        %v427 = vsel %vm422, %v403, 0
        %v430 = vsel %vm422, %v404, 0
        %v433 = vsel %vm422, %v405, 0
        %v436 = vsel %vm422, %v406, 0
        %v439 = vsel %vm422, %v407, 0
        %v442 = vsel %vm422, %v408, 0
        %v445 = vsel %vm422, %v409, 0
        %447 = vmatprep.subr.bf16.mxu0 0
        %448 = vmatpush1.bf16.msra.mxu0 0
        %449 = vmatprep.subr.bf16.mxu0 0
        %450 = vmatpush1.bf16.msra.mxu0 0
        %451 = vmatprep.subr.bf16.mxu0 0
        %452 = vmatpush1.bf16.msra.mxu0 0
        %453 = vmatprep.subr.bf16.mxu0 0
        %454 = vmatpush1.bf16.msra.mxu0 0
        %455 = vmatprep.subr.bf16.mxu0 0
        %456 = vmatpush1.bf16.msra.mxu0 0
        %457 = vmatprep.subr.bf16.mxu0 0
        %458 = vmatpush1.bf16.msra.mxu0 0
        %459 = vmatprep.subr.bf16.mxu0 0
        %460 = vmatpush1.bf16.msra.mxu0 %v419
        %461 = vmatprep.subr.bf16.mxu0 0
        %462 = vmatpush1.bf16.msra.mxu0 %v418
        %463 = vmatprep.subr.bf16.mxu0 0
        %464 = vmatpush2.bf16.msra.mxu0 0
        %465 = vmatprep.subr.bf16.mxu0 0
        %466 = vmatpush2.bf16.msra.mxu0 0
        %467 = vmatprep.subr.bf16.mxu0 0
        %468 = vmatpush2.bf16.msra.mxu0 0
        %469 = vmatprep.subr.bf16.mxu0 0
        %470 = vmatpush2.bf16.msra.mxu0 0
        %471 = vmatprep.subr.bf16.mxu0 0
        %472 = vmatpush2.bf16.msra.mxu0 0
        %473 = vmatprep.subr.bf16.mxu0 0
        %474 = vmatpush2.bf16.msra.mxu0 0
        %475 = vmatprep.subr.bf16.mxu0 0
        %476 = vmatpush2.bf16.msra.mxu0 0
        %477 = vmatprep.subr.bf16.mxu0 0
        %478 = vmatpush2.bf16.msra.mxu0 0
        %479 = vmatprep.mubr.bf16.mxu0 0
        %480 = vmatmul.mubr.bf16.gmra.mxu0 %v424
        %v481 = vpop.f32.mrf.mxu0
        %v482 = vadd.f32 0.0, %v481
        %v483 = vpop.f32.mrf.mxu0
        %v484 = vpop.f32.mrf.mxu0
        %v485 = vadd.f32 0.0, %v484
        %v486 = vpop.f32.mrf.mxu0
        %487 = vmatprep.mubr.bf16.mxu0 0
        %488 = vmatmul.mubr.bf16.gmra.mxu0 %v427
        %v489 = vpop.f32.mrf.mxu0
        %v490 = vadd.f32 0.0, %v489
        %v491 = vpop.f32.mrf.mxu0
        %v492 = vpop.f32.mrf.mxu0
        %v493 = vadd.f32 0.0, %v492
        %v494 = vpop.f32.mrf.mxu0
        %495 = vmatprep.mubr.bf16.mxu0 0
        %496 = vmatmul.mubr.bf16.gmra.mxu0 %v430
        %v497 = vpop.f32.mrf.mxu0
        %v498 = vadd.f32 0.0, %v497
        %v499 = vpop.f32.mrf.mxu0
        %v500 = vpop.f32.mrf.mxu0
        %v501 = vadd.f32 0.0, %v500
        %v502 = vpop.f32.mrf.mxu0
        %503 = vmatprep.mubr.bf16.mxu0 0
        %504 = vmatmul.mubr.bf16.gmra.mxu0 %v433
        %v505 = vpop.f32.mrf.mxu0
        %v506 = vadd.f32 0.0, %v505
        %v507 = vpop.f32.mrf.mxu0
        %v508 = vpop.f32.mrf.mxu0
        %v509 = vadd.f32 0.0, %v508
        %v510 = vpop.f32.mrf.mxu0
        %511 = vmatprep.mubr.bf16.mxu0 0
        %512 = vmatmul.mubr.bf16.gmra.mxu0 %v436
        %v513 = vpop.f32.mrf.mxu0
        %v514 = vadd.f32 0.0, %v513
        %v515 = vpop.f32.mrf.mxu0
        %v516 = vpop.f32.mrf.mxu0
        %v517 = vadd.f32 0.0, %v516
        %v518 = vpop.f32.mrf.mxu0
        %519 = vmatprep.mubr.bf16.mxu0 0
        %520 = vmatmul.mubr.bf16.gmra.mxu0 %v439
        %v521 = vpop.f32.mrf.mxu0
        %v522 = vadd.f32 0.0, %v521
        %v523 = vpop.f32.mrf.mxu0
        %v524 = vpop.f32.mrf.mxu0
        %v525 = vadd.f32 0.0, %v524
        %v526 = vpop.f32.mrf.mxu0
        %527 = vmatprep.mubr.bf16.mxu0 0
        %528 = vmatmul.mubr.bf16.gmra.mxu0 %v442
        %v529 = vpop.f32.mrf.mxu0
        %v530 = vadd.f32 0.0, %v529
        %v531 = vpop.f32.mrf.mxu0
        %v532 = vpop.f32.mrf.mxu0
        %v533 = vadd.f32 0.0, %v532
        %v534 = vpop.f32.mrf.mxu0
        %535 = vmatprep.mubr.bf16.mxu0 0
        %536 = vmatmul.mubr.bf16.gmra.mxu0 %v445
        %v537 = vpop.f32.mrf.mxu0
        %v538 = vadd.f32 0.0, %v537
        %v539 = vpop.f32.mrf.mxu0
        %v540 = vpop.f32.mrf.mxu0
        %v541 = vadd.f32 0.0, %v540
        %v542 = vpop.f32.mrf.mxu0
        %543 = vdwg.mxu0
        %544 = vmax.xlane.f32.xlu0 %v482
        %v545 = vpop.xlane.xlu0 %544
        %546 = vmax.xlane.f32.xlu0 %v485
        %v547 = vpop.xlane.xlu0 %546
        %548 = vmax.xlane.f32.xlu0 %v490
        %v549 = vpop.xlane.xlu0 %548
        %550 = vmax.xlane.f32.xlu0 %v493
        %v551 = vpop.xlane.xlu0 %550
        %552 = vmax.xlane.f32.xlu0 %v498
        %v553 = vpop.xlane.xlu0 %552
        %554 = vmax.xlane.f32.xlu0 %v501
        %v555 = vpop.xlane.xlu0 %554
        %556 = vmax.xlane.f32.xlu0 %v506
        %v557 = vpop.xlane.xlu0 %556
        %558 = vmax.xlane.f32.xlu0 %v509
        %v559 = vpop.xlane.xlu0 %558
        %560 = vmax.xlane.f32.xlu0 %v514
        %v561 = vpop.xlane.xlu0 %560
        %562 = vmax.xlane.f32.xlu0 %v517
        %v563 = vpop.xlane.xlu0 %562
        %564 = vmax.xlane.f32.xlu0 %v522
        %v565 = vpop.xlane.xlu0 %564
        %566 = vmax.xlane.f32.xlu0 %v525
        %v567 = vpop.xlane.xlu0 %566
        %568 = vmax.xlane.f32.xlu0 %v530
        %v569 = vpop.xlane.xlu0 %568
        %570 = vmax.xlane.f32.xlu0 %v533
        %v571 = vpop.xlane.xlu0 %570
        %572 = vmax.xlane.f32.xlu0 %v538
        %v573 = vpop.xlane.xlu0 %572
        %574 = vmax.xlane.f32.xlu0 %v541
        %v575 = vpop.xlane.xlu0 %574
        %v576 = vsub.f32 %v482, %v545
        %v577 = vsub.f32 %v485, %v547
        %v578 = vsub.f32 %v490, %v549
        %v579 = vsub.f32 %v493, %v551
        %v580 = vsub.f32 %v498, %v553
        %v581 = vsub.f32 %v501, %v555
        %v582 = vsub.f32 %v506, %v557
        %v583 = vsub.f32 %v509, %v559
        %v584 = vsub.f32 %v514, %v561
        %v585 = vsub.f32 %v517, %v563
        %v586 = vsub.f32 %v522, %v565
        %v587 = vsub.f32 %v525, %v567
        %v588 = vsub.f32 %v530, %v569
        %v589 = vsub.f32 %v533, %v571
        %v590 = vsub.f32 %v538, %v573
        %v591 = vsub.f32 %v541, %v575
        %v592 = vmul.f32 %v576, 1.442695
        %v593 = vpow.pop %v592
        %v594 = vmul.f32 %v577, 1.442695
        %v595 = vpow.pop %v594
        %v596 = vmul.f32 %v578, 1.442695
        %v597 = vpow.pop %v596
        %v598 = vmul.f32 %v579, 1.442695
        %v599 = vpow.pop %v598
        %v600 = vmul.f32 %v580, 1.442695
        %v601 = vpow.pop %v600
        %v602 = vmul.f32 %v581, 1.442695
        %v603 = vpow.pop %v602
        %v604 = vmul.f32 %v582, 1.442695
        %v605 = vpow.pop %v604
        %v606 = vmul.f32 %v583, 1.442695
        %v607 = vpow.pop %v606
        %v608 = vmul.f32 %v584, 1.442695
        %v609 = vpow.pop %v608
        %v610 = vmul.f32 %v585, 1.442695
        %v611 = vpow.pop %v610
        %v612 = vmul.f32 %v586, 1.442695
        %v613 = vpow.pop %v612
        %v614 = vmul.f32 %v587, 1.442695
        %v615 = vpow.pop %v614
        %v616 = vmul.f32 %v588, 1.442695
        %v617 = vpow.pop %v616
        %v618 = vmul.f32 %v589, 1.442695
        %v619 = vpow.pop %v618
        %v620 = vmul.f32 %v590, 1.442695
        %v621 = vpow.pop %v620
        %v622 = vmul.f32 %v591, 1.442695
        %v623 = vpow.pop %v622
        %624 = vadd.xlane.f32.xlu0 %v593
        %v625 = vpop.xlane.xlu0 %624
        %626 = vadd.xlane.f32.xlu0 %v595
        %v627 = vpop.xlane.xlu0 %626
        %628 = vadd.xlane.f32.xlu0 %v597
        %v629 = vpop.xlane.xlu0 %628
        %630 = vadd.xlane.f32.xlu0 %v599
        %v631 = vpop.xlane.xlu0 %630
        %632 = vadd.xlane.f32.xlu0 %v601
        %v633 = vpop.xlane.xlu0 %632
        %634 = vadd.xlane.f32.xlu0 %v603
        %v635 = vpop.xlane.xlu0 %634
        %636 = vadd.xlane.f32.xlu0 %v605
        %v637 = vpop.xlane.xlu0 %636
        %638 = vadd.xlane.f32.xlu0 %v607
        %v639 = vpop.xlane.xlu0 %638
        %640 = vadd.xlane.f32.xlu0 %v609
        %v641 = vpop.xlane.xlu0 %640
        %642 = vadd.xlane.f32.xlu0 %v611
        %v643 = vpop.xlane.xlu0 %642
        %644 = vadd.xlane.f32.xlu0 %v613
        %v645 = vpop.xlane.xlu0 %644
        %646 = vadd.xlane.f32.xlu0 %v615
        %v647 = vpop.xlane.xlu0 %646
        %648 = vadd.xlane.f32.xlu0 %v617
        %v649 = vpop.xlane.xlu0 %648
        %650 = vadd.xlane.f32.xlu0 %v619
        %v651 = vpop.xlane.xlu0 %650
        %652 = vadd.xlane.f32.xlu0 %v621
        %v653 = vpop.xlane.xlu0 %652
        %654 = vadd.xlane.f32.xlu0 %v623
        %v655 = vpop.xlane.xlu0 %654
        %v656 = vrcp.pop %v625
        %v657 = vmul.f32 1.0, %v656
        %v658 = vrcp.pop %v627
        %v659 = vmul.f32 1.0, %v658
        %v660 = vrcp.pop %v629
        %v661 = vmul.f32 1.0, %v660
        %v662 = vrcp.pop %v631
        %v663 = vmul.f32 1.0, %v662
        %v664 = vrcp.pop %v633
        %v665 = vmul.f32 1.0, %v664
        %v666 = vrcp.pop %v635
        %v667 = vmul.f32 1.0, %v666
        %v668 = vrcp.pop %v637
        %v669 = vmul.f32 1.0, %v668
        %v670 = vrcp.pop %v639
        %v671 = vmul.f32 1.0, %v670
        %v672 = vrcp.pop %v641
        %v673 = vmul.f32 1.0, %v672
        %v674 = vrcp.pop %v643
        %v675 = vmul.f32 1.0, %v674
        %v676 = vrcp.pop %v645
        %v677 = vmul.f32 1.0, %v676
        %v678 = vrcp.pop %v647
        %v679 = vmul.f32 1.0, %v678
        %v680 = vrcp.pop %v649
        %v681 = vmul.f32 1.0, %v680
        %v682 = vrcp.pop %v651
        %v683 = vmul.f32 1.0, %v682
        %v684 = vrcp.pop %v653
        %v685 = vmul.f32 1.0, %v684
        %v686 = vrcp.pop %v655
        %v687 = vmul.f32 1.0, %v686
        %v688 = vmul.f32 %v593, %v657
        %v689 = vmul.f32 %v595, %v659
        %v690 = vmul.f32 %v597, %v661
        %v691 = vmul.f32 %v599, %v663
        %v692 = vmul.f32 %v601, %v665
        %v693 = vmul.f32 %v603, %v667
        %v694 = vmul.f32 %v605, %v669
        %v695 = vmul.f32 %v607, %v671
        %v696 = vmul.f32 %v609, %v673
        %v697 = vmul.f32 %v611, %v675
        %v698 = vmul.f32 %v613, %v677
        %v699 = vmul.f32 %v615, %v679
        %v700 = vmul.f32 %v617, %v681
        %v701 = vmul.f32 %v619, %v683
        %v702 = vmul.f32 %v621, %v685
        %v703 = vmul.f32 %v623, %v687
        %704 = vst [vmem:[%s323] sm:$0xff] %v688
        %705 = vst [vmem:[%s323 + $0x8] sm:$0xff] %v689
        %706 = vst [vmem:[%s323 + $0x10] sm:$0xff] %v690
        %707 = vst [vmem:[%s323 + $0x18] sm:$0xff] %v691
        %708 = vst [vmem:[%s323 + $0x20] sm:$0xff] %v692
        %709 = vst [vmem:[%s323 + $0x28] sm:$0xff] %v693
        %710 = vst [vmem:[%s323 + $0x30] sm:$0xff] %v694
        %711 = vst [vmem:[%s323 + $0x38] sm:$0xff] %v695
        %712 = vst [vmem:[%s323 + $0x40] sm:$0xff] %v696
        %713 = vst [vmem:[%s323 + $0x48] sm:$0xff] %v697
        %714 = vst [vmem:[%s323 + $0x50] sm:$0xff] %v698
        %715 = vst [vmem:[%s323 + $0x58] sm:$0xff] %v699
        %716 = vst [vmem:[%s323 + $0x60] sm:$0xff] %v700
        %717 = vst [vmem:[%s323 + $0x68] sm:$0xff] %v701
        %718 = vst [vmem:[%s323 + $0x70] sm:$0xff] %v702
        %719 = vst [vmem:[%s323 + $0x78] sm:$0xff] %v703
        %v720 = vpack.c.bf16 %v689, %v688
        %v721 = vpack.c.bf16 %v691, %v690
        %v722 = vpack.c.bf16 %v693, %v692
        %v723 = vpack.c.bf16 %v695, %v694
        %v724 = vpack.c.bf16 %v697, %v696
        %v725 = vpack.c.bf16 %v699, %v698
        %v726 = vpack.c.bf16 %v701, %v700
        %v727 = vpack.c.bf16 %v703, %v702
        %v728 = vld [vmem:[%s343] sm:$0xf]
        %v729 = vld [vmem:[%s343 + $0x4] sm:$0xf]
        %v730 = vld [vmem:[%s343 + $0x8] sm:$0xf]
        %v731 = vld [vmem:[%s343 + $0xc] sm:$0xf]
        %v732 = vld [vmem:[%s343 + $0x10] sm:$0xf]
        %v733 = vld [vmem:[%s343 + $0x14] sm:$0xf]
        %v734 = vld [vmem:[%s343 + $0x18] sm:$0xf]
        %v735 = vld [vmem:[%s343 + $0x1c] sm:$0xf]
        %v736 = vld [vmem:[%s343 + $0x20] sm:$0xf]
        %v737 = vld [vmem:[%s343 + $0x24] sm:$0xf]
        %v738 = vld [vmem:[%s343 + $0x28] sm:$0xf]
        %v739 = vld [vmem:[%s343 + $0x2c] sm:$0xf]
        %v740 = vld [vmem:[%s343 + $0x30] sm:$0xf]
        %v741 = vld [vmem:[%s343 + $0x34] sm:$0xf]
        %v742 = vld [vmem:[%s343 + $0x38] sm:$0xf]
        %v743 = vld [vmem:[%s343 + $0x3c] sm:$0xf]
        %v760 = vunpack.c.l.b16 %v728
        %v761 = vunpack.c.l.b16 %v729
        %v762 = vunpack.c.l.b16 %v730
        %v763 = vunpack.c.l.b16 %v731
        %v764 = vunpack.c.l.b16 %v732
        %v765 = vunpack.c.l.b16 %v733
        %v766 = vunpack.c.l.b16 %v734
        %v767 = vunpack.c.l.b16 %v735
        %v768 = vunpack.c.l.b16 %v736
        %v769 = vunpack.c.l.b16 %v737
        %v770 = vunpack.c.l.b16 %v738
        %v771 = vunpack.c.l.b16 %v739
        %v772 = vunpack.c.l.b16 %v740
        %v773 = vunpack.c.l.b16 %v741
        %v774 = vunpack.c.l.b16 %v742
        %v775 = vunpack.c.l.b16 %v743
        %v776 = vpack.c.b16 %v761, %v760
        %v777 = vpack.c.b16 %v763, %v762
        %v778 = vpack.c.b16 %v765, %v764
        %v779 = vpack.c.b16 %v767, %v766
        %v780 = vpack.c.b16 %v769, %v768
        %v781 = vpack.c.b16 %v771, %v770
        %v782 = vpack.c.b16 %v773, %v772
        %v783 = vpack.c.b16 %v775, %v774
        %792 = vmatprep.subr.bf16.mxu0 0
        %793 = vmatpush1.bf16.msra.mxu0 %v783
        %794 = vmatprep.subr.bf16.mxu0 0
        %795 = vmatpush1.bf16.msra.mxu0 %v782
        %796 = vmatprep.subr.bf16.mxu0 0
        %797 = vmatpush1.bf16.msra.mxu0 %v781
        %798 = vmatprep.subr.bf16.mxu0 0
        %799 = vmatpush1.bf16.msra.mxu0 %v780
        %800 = vmatprep.subr.bf16.mxu0 0
        %801 = vmatpush1.bf16.msra.mxu0 %v779
        %802 = vmatprep.subr.bf16.mxu0 0
        %803 = vmatpush1.bf16.msra.mxu0 %v778
        %804 = vmatprep.subr.bf16.mxu0 0
        %805 = vmatpush1.bf16.msra.mxu0 %v777
        %806 = vmatprep.subr.bf16.mxu0 0
        %807 = vmatpush1.bf16.msra.mxu0 %v776
        %808 = vmatprep.subr.bf16.mxu0 0
        %809 = vmatpush2.bf16.msra.mxu0 0
        %810 = vmatprep.subr.bf16.mxu0 0
        %811 = vmatpush2.bf16.msra.mxu0 0
        %812 = vmatprep.subr.bf16.mxu0 0
        %813 = vmatpush2.bf16.msra.mxu0 0
        %814 = vmatprep.subr.bf16.mxu0 0
        %815 = vmatpush2.bf16.msra.mxu0 0
        %816 = vmatprep.subr.bf16.mxu0 0
        %817 = vmatpush2.bf16.msra.mxu0 0
        %818 = vmatprep.subr.bf16.mxu0 0
        %819 = vmatpush2.bf16.msra.mxu0 0
        %820 = vmatprep.subr.bf16.mxu0 0
        %821 = vmatpush2.bf16.msra.mxu0 0
        %822 = vmatprep.subr.bf16.mxu0 0
        %823 = vmatpush2.bf16.msra.mxu0 0
        %824 = vmatprep.mubr.bf16.mxu0 0
        %825 = vmatmul.mubr.bf16.gmra.mxu0 %v720
        %v826 = vpop.f32.mrf.mxu0
        %v827 = vadd.f32 0.0, %v826
        %v828 = vpop.f32.mrf.mxu0
        %v829 = vpop.f32.mrf.mxu0
        %v830 = vadd.f32 0.0, %v829
        %v831 = vpop.f32.mrf.mxu0
        %832 = vmatprep.mubr.bf16.mxu0 0
        %833 = vmatmul.mubr.bf16.gmra.mxu0 %v721
        %v834 = vpop.f32.mrf.mxu0
        %v835 = vadd.f32 0.0, %v834
        %v836 = vpop.f32.mrf.mxu0
        %v837 = vpop.f32.mrf.mxu0
        %v838 = vadd.f32 0.0, %v837
        %v839 = vpop.f32.mrf.mxu0
        %840 = vmatprep.mubr.bf16.mxu0 0
        %841 = vmatmul.mubr.bf16.gmra.mxu0 %v722
        %v842 = vpop.f32.mrf.mxu0
        %v843 = vadd.f32 0.0, %v842
        %v844 = vpop.f32.mrf.mxu0
        %v845 = vpop.f32.mrf.mxu0
        %v846 = vadd.f32 0.0, %v845
        %v847 = vpop.f32.mrf.mxu0
        %848 = vmatprep.mubr.bf16.mxu0 0
        %849 = vmatmul.mubr.bf16.gmra.mxu0 %v723
        %v850 = vpop.f32.mrf.mxu0
        %v851 = vadd.f32 0.0, %v850
        %v852 = vpop.f32.mrf.mxu0
        %v853 = vpop.f32.mrf.mxu0
        %v854 = vadd.f32 0.0, %v853
        %v855 = vpop.f32.mrf.mxu0
        %856 = vmatprep.mubr.bf16.mxu0 0
        %857 = vmatmul.mubr.bf16.gmra.mxu0 %v724
        %v858 = vpop.f32.mrf.mxu0
        %v859 = vadd.f32 0.0, %v858
        %v860 = vpop.f32.mrf.mxu0
        %v861 = vpop.f32.mrf.mxu0
        %v862 = vadd.f32 0.0, %v861
        %v863 = vpop.f32.mrf.mxu0
        %864 = vmatprep.mubr.bf16.mxu0 0
        %865 = vmatmul.mubr.bf16.gmra.mxu0 %v725
        %v866 = vpop.f32.mrf.mxu0
        %v867 = vadd.f32 0.0, %v866
        %v868 = vpop.f32.mrf.mxu0
        %v869 = vpop.f32.mrf.mxu0
        %v870 = vadd.f32 0.0, %v869
        %v871 = vpop.f32.mrf.mxu0
        %872 = vmatprep.mubr.bf16.mxu0 0
        %873 = vmatmul.mubr.bf16.gmra.mxu0 %v726
        %v874 = vpop.f32.mrf.mxu0
        %v875 = vadd.f32 0.0, %v874
        %v876 = vpop.f32.mrf.mxu0
        %v877 = vpop.f32.mrf.mxu0
        %v878 = vadd.f32 0.0, %v877
        %v879 = vpop.f32.mrf.mxu0
        %880 = vmatprep.mubr.bf16.mxu0 0
        %881 = vmatmul.mubr.bf16.gmra.mxu0 %v727
        %v882 = vpop.f32.mrf.mxu0
        %v883 = vadd.f32 0.0, %v882
        %v884 = vpop.f32.mrf.mxu0
        %v885 = vpop.f32.mrf.mxu0
        %v886 = vadd.f32 0.0, %v885
        %v887 = vpop.f32.mrf.mxu0
        %888 = vdwg.mxu0
        %v889 = vpack.c.bf16 %v830, %v827
        %v890 = vpack.c.bf16 %v838, %v835
        %v891 = vpack.c.bf16 %v846, %v843
        %v892 = vpack.c.bf16 %v854, %v851
        %v893 = vpack.c.bf16 %v862, %v859
        %v894 = vpack.c.bf16 %v870, %v867
        %v895 = vpack.c.bf16 %v878, %v875
        %v896 = vpack.c.bf16 %v886, %v883
        %v897 = vld [vmem:[%s4] sm:$0xf]
        %v898 = vld [vmem:[%s4 + $0x4] sm:$0xf]
        %v899 = vld [vmem:[%s4 + $0x8] sm:$0xf]
        %v900 = vld [vmem:[%s4 + $0xc] sm:$0xf]
        %v901 = vld [vmem:[%s4 + $0x10] sm:$0xf]
        %v902 = vld [vmem:[%s4 + $0x14] sm:$0xf]
        %v903 = vld [vmem:[%s4 + $0x18] sm:$0xf]
        %v904 = vld [vmem:[%s4 + $0x1c] sm:$0xf]
        %v905 = vld [vmem:[%s4 + $0x20] sm:$0xf]
        %v906 = vld [vmem:[%s4 + $0x24] sm:$0xf]
        %v907 = vld [vmem:[%s4 + $0x28] sm:$0xf]
        %v908 = vld [vmem:[%s4 + $0x2c] sm:$0xf]
        %v909 = vld [vmem:[%s4 + $0x30] sm:$0xf]
        %v910 = vld [vmem:[%s4 + $0x34] sm:$0xf]
        %v911 = vld [vmem:[%s4 + $0x38] sm:$0xf]
        %v912 = vld [vmem:[%s4 + $0x3c] sm:$0xf]
        %v913 = vld [vmem:[%s346] sm:$0x1]
        %v915 = vlaneseq
        %v916 = vshrl.u32 %v915, 7
        %v917 = vsub.s32 0, %v916
        %v918 = vrot.slane %v913, %v917
        %v936 = vunpack.c.l.b16 %v897
        %v937 = vunpack.c.l.b16 %v898
        %v938 = vunpack.c.l.b16 %v899
        %v939 = vunpack.c.l.b16 %v900
        %v940 = vunpack.c.l.b16 %v901
        %v941 = vunpack.c.l.b16 %v902
        %v942 = vunpack.c.l.b16 %v903
        %v943 = vunpack.c.l.b16 %v904
        %v944 = vunpack.c.l.b16 %v905
        %v945 = vunpack.c.l.b16 %v906
        %v946 = vunpack.c.l.b16 %v907
        %v947 = vunpack.c.l.b16 %v908
        %v948 = vunpack.c.l.b16 %v909
        %v949 = vunpack.c.l.b16 %v910
        %v950 = vunpack.c.l.b16 %v911
        %v951 = vunpack.c.l.b16 %v912
        %v952 = vpack.c.b16 %v937, %v936
        %v953 = vpack.c.b16 %v939, %v938
        %v954 = vpack.c.b16 %v941, %v940
        %v955 = vpack.c.b16 %v943, %v942
        %v956 = vpack.c.b16 %v945, %v944
        %v957 = vpack.c.b16 %v947, %v946
        %v958 = vpack.c.b16 %v949, %v948
        %v959 = vpack.c.b16 %v951, %v950
        %968 = vmatprep.subr.bf16.mxu0 0
        %969 = vmatpush1.bf16.msra.mxu0 %v959
        %970 = vmatprep.subr.bf16.mxu0 0
        %971 = vmatpush1.bf16.msra.mxu0 %v958
        %972 = vmatprep.subr.bf16.mxu0 0
        %973 = vmatpush1.bf16.msra.mxu0 %v957
        %974 = vmatprep.subr.bf16.mxu0 0
        %975 = vmatpush1.bf16.msra.mxu0 %v956
        %976 = vmatprep.subr.bf16.mxu0 0
        %977 = vmatpush1.bf16.msra.mxu0 %v955
        %978 = vmatprep.subr.bf16.mxu0 0
        %979 = vmatpush1.bf16.msra.mxu0 %v954
        %980 = vmatprep.subr.bf16.mxu0 0
        %981 = vmatpush1.bf16.msra.mxu0 %v953
        %982 = vmatprep.subr.bf16.mxu0 0
        %983 = vmatpush1.bf16.msra.mxu0 %v952
        %984 = vmatprep.subr.bf16.mxu0 0
        %985 = vmatpush2.bf16.msra.mxu0 0
        %986 = vmatprep.subr.bf16.mxu0 0
        %987 = vmatpush2.bf16.msra.mxu0 0
        %988 = vmatprep.subr.bf16.mxu0 0
        %989 = vmatpush2.bf16.msra.mxu0 0
        %990 = vmatprep.subr.bf16.mxu0 0
        %991 = vmatpush2.bf16.msra.mxu0 0
        %992 = vmatprep.subr.bf16.mxu0 0
        %993 = vmatpush2.bf16.msra.mxu0 0
        %994 = vmatprep.subr.bf16.mxu0 0
        %995 = vmatpush2.bf16.msra.mxu0 0
        %996 = vmatprep.subr.bf16.mxu0 0
        %997 = vmatpush2.bf16.msra.mxu0 0
        %998 = vmatprep.subr.bf16.mxu0 0
        %999 = vmatpush2.bf16.msra.mxu0 0
        %1000 = vmatprep.mubr.bf16.mxu0 0
        %1001 = vmatmul.mubr.bf16.gmra.mxu0 %v889
        %v1002 = vpop.f32.mrf.mxu0
        %v1003 = vadd.f32 %v918, %v1002
        %v1004 = vpop.f32.mrf.mxu0
        %v1005 = vpop.f32.mrf.mxu0
        %v1006 = vadd.f32 %v918, %v1005
        %v1007 = vpop.f32.mrf.mxu0
        %1008 = vmatprep.mubr.bf16.mxu0 0
        %1009 = vmatmul.mubr.bf16.gmra.mxu0 %v890
        %v1010 = vpop.f32.mrf.mxu0
        %v1011 = vadd.f32 %v918, %v1010
        %v1012 = vpop.f32.mrf.mxu0
        %v1013 = vpop.f32.mrf.mxu0
        %v1014 = vadd.f32 %v918, %v1013
        %v1015 = vpop.f32.mrf.mxu0
        %1016 = vmatprep.mubr.bf16.mxu0 0
        %1017 = vmatmul.mubr.bf16.gmra.mxu0 %v891
        %v1018 = vpop.f32.mrf.mxu0
        %v1019 = vadd.f32 %v918, %v1018
        %v1020 = vpop.f32.mrf.mxu0
        %v1021 = vpop.f32.mrf.mxu0
        %v1022 = vadd.f32 %v918, %v1021
        %v1023 = vpop.f32.mrf.mxu0
        %1024 = vmatprep.mubr.bf16.mxu0 0
        %1025 = vmatmul.mubr.bf16.gmra.mxu0 %v892
        %v1026 = vpop.f32.mrf.mxu0
        %v1027 = vadd.f32 %v918, %v1026
        %v1028 = vpop.f32.mrf.mxu0
        %v1029 = vpop.f32.mrf.mxu0
        %v1030 = vadd.f32 %v918, %v1029
        %v1031 = vpop.f32.mrf.mxu0
        %1032 = vmatprep.mubr.bf16.mxu0 0
        %1033 = vmatmul.mubr.bf16.gmra.mxu0 %v893
        %v1034 = vpop.f32.mrf.mxu0
        %v1035 = vadd.f32 %v918, %v1034
        %v1036 = vpop.f32.mrf.mxu0
        %v1037 = vpop.f32.mrf.mxu0
        %v1038 = vadd.f32 %v918, %v1037
        %v1039 = vpop.f32.mrf.mxu0
        %1040 = vmatprep.mubr.bf16.mxu0 0
        %1041 = vmatmul.mubr.bf16.gmra.mxu0 %v894
        %v1042 = vpop.f32.mrf.mxu0
        %v1043 = vadd.f32 %v918, %v1042
        %v1044 = vpop.f32.mrf.mxu0
        %v1045 = vpop.f32.mrf.mxu0
        %v1046 = vadd.f32 %v918, %v1045
        %v1047 = vpop.f32.mrf.mxu0
        %1048 = vmatprep.mubr.bf16.mxu0 0
        %1049 = vmatmul.mubr.bf16.gmra.mxu0 %v895
        %v1050 = vpop.f32.mrf.mxu0
        %v1051 = vadd.f32 %v918, %v1050
        %v1052 = vpop.f32.mrf.mxu0
        %v1053 = vpop.f32.mrf.mxu0
        %v1054 = vadd.f32 %v918, %v1053
        %v1055 = vpop.f32.mrf.mxu0
        %1056 = vmatprep.mubr.bf16.mxu0 0
        %1057 = vmatmul.mubr.bf16.gmra.mxu0 %v896
        %v1058 = vpop.f32.mrf.mxu0
        %v1059 = vadd.f32 %v918, %v1058
        %v1060 = vpop.f32.mrf.mxu0
        %v1061 = vpop.f32.mrf.mxu0
        %v1062 = vadd.f32 %v918, %v1061
        %v1063 = vpop.f32.mrf.mxu0
        %1064 = vdwg.mxu0
        %v1065 = vmax.f32 %v1003, 0.0
        %v1066 = vmax.f32 %v1006, 0.0
        %v1067 = vmax.f32 %v1011, 0.0
        %v1068 = vmax.f32 %v1014, 0.0
        %v1069 = vmax.f32 %v1019, 0.0
        %v1070 = vmax.f32 %v1022, 0.0
        %v1071 = vmax.f32 %v1027, 0.0
        %v1072 = vmax.f32 %v1030, 0.0
        %v1073 = vmax.f32 %v1035, 0.0
        %v1074 = vmax.f32 %v1038, 0.0
        %v1075 = vmax.f32 %v1043, 0.0
        %v1076 = vmax.f32 %v1046, 0.0
        %v1077 = vmax.f32 %v1051, 0.0
        %v1078 = vmax.f32 %v1054, 0.0
        %v1079 = vmax.f32 %v1059, 0.0
        %v1080 = vmax.f32 %v1062, 0.0
        %1081 = vst [vmem:[%s316] sm:$0xff] %v1065
        %1082 = vst [vmem:[%s316 + $0x8] sm:$0xff] %v1066
        %1083 = vst [vmem:[%s316 + $0x10] sm:$0xff] %v1067
        %1084 = vst [vmem:[%s316 + $0x18] sm:$0xff] %v1068
        %1085 = vst [vmem:[%s316 + $0x20] sm:$0xff] %v1069
        %1086 = vst [vmem:[%s316 + $0x28] sm:$0xff] %v1070
        %1087 = vst [vmem:[%s316 + $0x30] sm:$0xff] %v1071
        %1088 = vst [vmem:[%s316 + $0x38] sm:$0xff] %v1072
        %1089 = vst [vmem:[%s316 + $0x40] sm:$0xff] %v1073
        %1090 = vst [vmem:[%s316 + $0x48] sm:$0xff] %v1074
        %1091 = vst [vmem:[%s316 + $0x50] sm:$0xff] %v1075
        %1092 = vst [vmem:[%s316 + $0x58] sm:$0xff] %v1076
        %1093 = vst [vmem:[%s316 + $0x60] sm:$0xff] %v1077
        %1094 = vst [vmem:[%s316 + $0x68] sm:$0xff] %v1078
        %1095 = vst [vmem:[%s316 + $0x70] sm:$0xff] %v1079
        %1096 = vst [vmem:[%s316 + $0x78] sm:$0xff] %v1080
        %s1097 = sand.u32 %s173, 1
        %s1098 = scalar_lea.sflag [#allocation3], %s1097
        %s1099 = sand.u32 %s173, 1
        %s1100 = smul.addr %s1099, 128
        %s1101 = scalar_lea.vmem [#allocation2], %s1100
        %s1102 = sand.u32 %s201, 1
        %s1103 = scalar_lea.sflag [#allocation5], %s1102
        %s1104 = sand.u32 %s201, 1
        %s1105 = smul.addr %s1104, 128
        %s1106 = scalar_lea.vmem [#allocation4], %s1105
        // Predicated region
        $region41: #{sadecoder_forward.3} parent=39 // pred_check
          %p1107 = pneg %p183
        $region42: #{sadecoder_forward.3} parent=39 // pred_check_branch
          %1109 = sbr.rel (%p1107) target = $region44
        $region43: #{sadecoder_forward.3} parent=39 // pred_region
          %s1110 = smul.u32 16, %s29
          %s1112 = ssub.s32 2048, 2048
          %1113 = vsyncadd %s1098, %s1112
          %s1114 = smul.addr %s28, 16
          %s1115 = sadd.s32 %s1110, %s1114
          %s1116 = smul.addr %s1115, 128
          %s1117 = scalar_lea.hbm %s5, %s1116
          %s1118 = sshll.u32 %s1101, 4
          %s1119 = int_to_ptr.vmem [resolvable:$true] %s1118
          %1124 = dma.vmem_to_hbm [thread:$0]  %s1119, 2048, %s1117, %s1098, 128, 128, 8
        $region44: #{sadecoder_forward.3} parent=39 // pred_fallthru
          _
        // Predicated region
        $region45: #{sadecoder_forward.3} parent=39 // pred_check
          %p1125 = pneg %p211
        $region46: #{sadecoder_forward.3} parent=39 // pred_check_branch
          %1127 = sbr.rel (%p1125) target = $region48
        $region47: #{sadecoder_forward.3} parent=39 // pred_region
          %s1128 = smul.u32 16, %s29
          %s1130 = ssub.s32 2048, 2048
          %1131 = vsyncadd %s1103, %s1130
          %s1132 = smul.addr %s28, 16
          %s1133 = sadd.s32 %s1128, %s1132
          %s1134 = smul.addr %s1133, 128
          %s1135 = scalar_lea.hbm %s6, %s1134
          %s1136 = sshll.u32 %s1106, 4
          %s1137 = int_to_ptr.vmem [resolvable:$true] %s1136
          %1142 = dma.vmem_to_hbm [thread:$0]  %s1137, 2048, %s1135, %s1103, 128, 128, 8
        $region48: #{sadecoder_forward.3} parent=39 // pred_fallthru
          _
      $region40: #{sadecoder_forward.3} parent=5 // pred_fallthru
        _
      %p1143 = scmp.le.s32.totalorder 2, %s19
      // Predicated region
      $region49: #{sadecoder_forward.3} parent=5 // pred_check
        %p1144 = pneg %p1143
      $region50: #{sadecoder_forward.3} parent=5 // pred_check_branch
        %1146 = sbr.rel (%p1144) target = $region52
      $region51: #{sadecoder_forward.3} parent=5 // pred_region
        %s1147 = ssub.s32 %s19, 2
        // Predicated region
        $region53: #{sadecoder_forward.3} parent=51 // pred_check
          %p1148 = pneg %p189
        $region54: #{sadecoder_forward.3} parent=51 // pred_check_branch
          %1150 = sbr.rel (%p1148) target = $region56
        $region55: #{sadecoder_forward.3} parent=51 // pred_region
          %s1151 = sand.u32 %s174, 1
          %s1152 = scalar_lea.sflag [#allocation3], %s1151
          %s1153 = sand.u32 %s174, 1
          %s1154 = smul.addr %s1153, 128
          %s1155 = scalar_lea.vmem [#allocation2], %s1154
          %1156 = dma.done %s1152, 2048
        $region56: #{sadecoder_forward.3} parent=51 // pred_fallthru
          _
        // Predicated region
        $region57: #{sadecoder_forward.3} parent=51 // pred_check
          %p1157 = pneg %p217
        $region58: #{sadecoder_forward.3} parent=51 // pred_check_branch
          %1159 = sbr.rel (%p1157) target = $region60
        $region59: #{sadecoder_forward.3} parent=51 // pred_region
          %s1160 = sand.u32 %s202, 1
          %s1161 = scalar_lea.sflag [#allocation5], %s1160
          %s1162 = sand.u32 %s202, 1
          %s1163 = smul.addr %s1162, 128
          %s1164 = scalar_lea.vmem [#allocation4], %s1163
          %1165 = dma.done %s1161, 2048
        $region60: #{sadecoder_forward.3} parent=51 // pred_fallthru
          _
      $region52: #{sadecoder_forward.3} parent=5 // pred_fallthru
        _
    $region6: #{sadecoder_forward.3} parent=1 // loop_footer
      %s23 = sadd.s32 1, %s19
    $region7: #{sadecoder_forward.3} parent=1 // loop_footer_branch
      %18 = sbr.rel target = $region3
    $region8: #{sadecoder_forward.3} parent=1 // loop_exit
      _
    %1166 = vsyncpa [#allocation3], 1
    %s1167 = scalar_lea.sflag [#allocation3], 1
    %1168 = vsyncpa %s1167, 1
    %1169 = vsyncpa [#allocation5], 1
    %s1170 = scalar_lea.sflag [#allocation5], 1
    %1171 = vsyncpa %s1170, 1

// kernel: sadecoder_forward.2
$region0: #{sadecoder_forward.2}
  #allocation0 [shape = 'u32[]', space=smem, size = 0x4, offset = 0x4, fixed_abs, tag = 'smem constant byte address 0x4 - core index']
  #allocation1 [shape = 'u32[144,128]{1,0:T(1,128)}', space=vmem, size = 0x12000, scoped, tag = 'internal scratch']
  %s0 = inlined_call_operand.vmem [shape: bf16[2,162,128], index: 0, kind: input, shape index: {}]
  %s1 = inlined_call_operand.vmem [shape: bf16[128,32], index: 1, kind: input, shape index: {}]
  %s2 = inlined_call_operand.vmem [shape: f32[1,32], index: 2, kind: input, shape index: {}]
  %s3 = inlined_call_operand.vmem [shape: bf16[9,128,128], index: 3, kind: input, shape index: {}]
  %s4 = inlined_call_operand.vmem [shape: f32[1,128], index: 4, kind: input, shape index: {}]
  %s5 = inlined_call_operand.vmem [shape: bf16[128,128], index: 5, kind: input, shape index: {}]
  %s6 = inlined_call_operand.vmem [shape: f32[1,128], index: 6, kind: input, shape index: {}]
  %s7 = inlined_call_operand.vmem [shape: bf16[128,32], index: 7, kind: input, shape index: {}]
  %s8 = inlined_call_operand.vmem [shape: f32[1,32], index: 8, kind: input, shape index: {}]
  %s9 = inlined_call_operand.vmem [shape: bf16[32,32], index: 9, kind: input, shape index: {}]
  %s10 = inlined_call_operand.vmem [shape: f32[1,32], index: 10, kind: input, shape index: {}]
  %s11 = inlined_call_operand.vmem [shape: bf16[32,128], index: 11, kind: input, shape index: {}]
  %s12 = inlined_call_operand.vmem [shape: f32[1,128], index: 12, kind: input, shape index: {}]
  %s13 = inlined_call_operand.vmem [shape: bf16[2,128,32], index: 13, kind: output, shape index: {0}]
  %s14 = inlined_call_operand.vmem [shape: bf16[2,32,128], index: 14, kind: output, shape index: {1}]
  %s15 = inlined_call_operand.vmem [shape: bf16[2,128,128], index: 15, kind: output, shape index: {2}]
  %s16 = inlined_call_operand.vmem [shape: f32[2,1,128], index: 16, kind: output, shape index: {3}]
  %17 = xla_tuple %s13, %s14, %s15, %s16
  %s18 = sld [smem:[#allocation0]]
  $region109: #{sadecoder_forward.2} parent=0
    _
  %s20 = ssub.s32 1, %s18
  %s21 = scalar_select 0, %s20, %s18
  loop: start=0, step=1, limit=4
  $region2: #{sadecoder_forward.2} parent=0 // loop_pre_header
    _
  $region3: #{sadecoder_forward.2} parent=0 // loop_header
    %s23 = sphi 0, %s27
    %p24 = scmp.ge.s32.totalorder %s23, 4
    %s33 = sphi 0, %s35
    %s36 = sphi 0, %s33
    %s37 = sphi 0, %s36
    %s53 = sphi 0, %s37
    %s57 = sphi 0, %s57
    %s59 = sphi 0, %s57
    %s60 = sphi 0, %s59
    %s74 = sphi 0, %s60
    %s78 = sphi 0, %s78
    %s80 = sphi 0, %s78
    %s81 = sphi 0, %s80
    %s95 = sphi 0, %s81
    %s99 = sphi 0, %s99
    %s101 = sphi 0, %s99
    %s102 = sphi 0, %s101
    %s116 = sphi 0, %s102
    %s120 = sphi 0, %s120
    %s122 = sphi 0, %s120
    %s123 = sphi 0, %s122
    %s137 = sphi 0, %s123
    %s141 = sphi 0, %s141
    %s143 = sphi 0, %s141
    %s144 = sphi 0, %s143
    %s158 = sphi 0, %s144
    %s162 = sphi 0, %s162
    %s164 = sphi 0, %s162
    %s165 = sphi 0, %s164
    %s179 = sphi 0, %s165
    %s183 = sphi 0, %s183
    %s185 = sphi 0, %s183
    %s186 = sphi 0, %s185
    %s200 = sphi 0, %s186
    %s204 = sphi 0, %s204
    %s206 = sphi 0, %s204
    %s207 = sphi 0, %s206
    %s221 = sphi 0, %s207
    %s225 = sphi 0, %s225
    %s227 = sphi 0, %s225
    %s228 = sphi 0, %s227
    %s242 = sphi 0, %s228
    %s246 = sphi 0, %s246
    %s248 = sphi 0, %s246
    %s249 = sphi 0, %s248
    %s263 = sphi 0, %s249
    %s267 = sphi 0, %s267
    %s269 = sphi 0, %s267
    %s270 = sphi 0, %s269
    %s284 = sphi 0, %s270
    %s288 = sphi 0, %s288
    %s290 = sphi 0, %s288
    %s291 = sphi 0, %s290
    %s305 = sphi 0, %s291
    %s311 = sphi 0, %s313
    %s314 = sphi 0, %s311
    %s315 = sphi 0, %s314
    %s331 = sphi 0, %s315
    %s337 = sphi 0, %s339
    %s340 = sphi 0, %s337
    %s341 = sphi 0, %s340
    %s357 = sphi 0, %s341
    %s363 = sphi 0, %s365
    %s366 = sphi 0, %s363
    %s367 = sphi 0, %s366
    %s383 = sphi 0, %s367
    %s389 = sphi 0, %s391
    %s392 = sphi 0, %s389
    %s393 = sphi 0, %s392
    %s409 = sphi 0, %s393
  $region4: #{sadecoder_forward.2} parent=0 // loop_header_branch
    %26 = sbr.rel (%p24) target = $region8
  $region5: #{sadecoder_forward.2} parent=0 // loop_body
    %s28 = ssub.s32 %s23, 1
    %s29 = ssub.s32 %s23, 2
    %s30 = sadd.s32 %s23, 1
    %s31 = ssub.s32 %s23, %s30
    %p32 = scmp.eq.s32.totalorder %s31, 0
    %s34 = sadd.s32 %s33, 1
    %s35 = scalar_select %p32, %s33, %s34
    %p38 = pneg %p32
    %p39 = scmp.eq.s32.totalorder %s23, 1
    %p40 = por %p38, %p39
    %p41 = scmp.ne.s32.totalorder %s33, %s36
    %p42 = scmp.eq.s32.totalorder %s23, 0
    %p43 = por %p41, %p42
    %p44 = scmp.ne.s32.totalorder %s33, %s36
    %p45 = scmp.eq.s32.totalorder %s28, 1
    %p46 = por %p44, %p45
    %p47 = scmp.ne.s32.totalorder %s36, %s37
    %p48 = scmp.eq.s32.totalorder %s28, 0
    %p49 = por %p47, %p48
    %p50 = scmp.ne.s32.totalorder %s36, %s37
    %p51 = scmp.eq.s32.totalorder %s29, 1
    %p52 = por %p50, %p51
    %p54 = scmp.ne.s32.totalorder %s37, %s53
    %p55 = scmp.eq.s32.totalorder %s29, 0
    %p56 = por %p54, %p55
    %s58 = sadd.s32 %s57, 1
    %p61 = scmp.eq.s32.totalorder %s23, 1
    %p62 = scmp.ne.s32.totalorder %s57, %s59
    %p63 = scmp.eq.s32.totalorder %s23, 0
    %p64 = por %p62, %p63
    %p65 = scmp.ne.s32.totalorder %s57, %s59
    %p66 = scmp.eq.s32.totalorder %s28, 1
    %p67 = por %p65, %p66
    %p68 = scmp.ne.s32.totalorder %s59, %s60
    %p69 = scmp.eq.s32.totalorder %s28, 0
    %p70 = por %p68, %p69
    %p71 = scmp.ne.s32.totalorder %s59, %s60
    %p72 = scmp.eq.s32.totalorder %s29, 1
    %p73 = por %p71, %p72
    %p75 = scmp.ne.s32.totalorder %s60, %s74
    %p76 = scmp.eq.s32.totalorder %s29, 0
    %p77 = por %p75, %p76
    %s79 = sadd.s32 %s78, 1
    %p82 = scmp.eq.s32.totalorder %s23, 1
    %p83 = scmp.ne.s32.totalorder %s78, %s80
    %p84 = scmp.eq.s32.totalorder %s23, 0
    %p85 = por %p83, %p84
    %p86 = scmp.ne.s32.totalorder %s78, %s80
    %p87 = scmp.eq.s32.totalorder %s28, 1
    %p88 = por %p86, %p87
    %p89 = scmp.ne.s32.totalorder %s80, %s81
    %p90 = scmp.eq.s32.totalorder %s28, 0
    %p91 = por %p89, %p90
    %p92 = scmp.ne.s32.totalorder %s80, %s81
    %p93 = scmp.eq.s32.totalorder %s29, 1
    %p94 = por %p92, %p93
    %p96 = scmp.ne.s32.totalorder %s81, %s95
    %p97 = scmp.eq.s32.totalorder %s29, 0
    %p98 = por %p96, %p97
    %s100 = sadd.s32 %s99, 1
    %p103 = scmp.eq.s32.totalorder %s23, 1
    %p104 = scmp.ne.s32.totalorder %s99, %s101
    %p105 = scmp.eq.s32.totalorder %s23, 0
    %p106 = por %p104, %p105
    %p107 = scmp.ne.s32.totalorder %s99, %s101
    %p108 = scmp.eq.s32.totalorder %s28, 1
    %p109 = por %p107, %p108
    %p110 = scmp.ne.s32.totalorder %s101, %s102
    %p111 = scmp.eq.s32.totalorder %s28, 0
    %p112 = por %p110, %p111
    %p113 = scmp.ne.s32.totalorder %s101, %s102
    %p114 = scmp.eq.s32.totalorder %s29, 1
    %p115 = por %p113, %p114
    %p117 = scmp.ne.s32.totalorder %s102, %s116
    %p118 = scmp.eq.s32.totalorder %s29, 0
    %p119 = por %p117, %p118
    %s121 = sadd.s32 %s120, 1
    %p124 = scmp.eq.s32.totalorder %s23, 1
    %p125 = scmp.ne.s32.totalorder %s120, %s122
    %p126 = scmp.eq.s32.totalorder %s23, 0
    %p127 = por %p125, %p126
    %p128 = scmp.ne.s32.totalorder %s120, %s122
    %p129 = scmp.eq.s32.totalorder %s28, 1
    %p130 = por %p128, %p129
    %p131 = scmp.ne.s32.totalorder %s122, %s123
    %p132 = scmp.eq.s32.totalorder %s28, 0
    %p133 = por %p131, %p132
    %p134 = scmp.ne.s32.totalorder %s122, %s123
    %p135 = scmp.eq.s32.totalorder %s29, 1
    %p136 = por %p134, %p135
    %p138 = scmp.ne.s32.totalorder %s123, %s137
    %p139 = scmp.eq.s32.totalorder %s29, 0
    %p140 = por %p138, %p139
    %s142 = sadd.s32 %s141, 1
    %p145 = scmp.eq.s32.totalorder %s23, 1
    %p146 = scmp.ne.s32.totalorder %s141, %s143
    %p147 = scmp.eq.s32.totalorder %s23, 0
    %p148 = por %p146, %p147
    %p149 = scmp.ne.s32.totalorder %s141, %s143
    %p150 = scmp.eq.s32.totalorder %s28, 1
    %p151 = por %p149, %p150
    %p152 = scmp.ne.s32.totalorder %s143, %s144
    %p153 = scmp.eq.s32.totalorder %s28, 0
    %p154 = por %p152, %p153
    %p155 = scmp.ne.s32.totalorder %s143, %s144
    %p156 = scmp.eq.s32.totalorder %s29, 1
    %p157 = por %p155, %p156
    %p159 = scmp.ne.s32.totalorder %s144, %s158
    %p160 = scmp.eq.s32.totalorder %s29, 0
    %p161 = por %p159, %p160
    %s163 = sadd.s32 %s162, 1
    %p166 = scmp.eq.s32.totalorder %s23, 1
    %p167 = scmp.ne.s32.totalorder %s162, %s164
    %p168 = scmp.eq.s32.totalorder %s23, 0
    %p169 = por %p167, %p168
    %p170 = scmp.ne.s32.totalorder %s162, %s164
    %p171 = scmp.eq.s32.totalorder %s28, 1
    %p172 = por %p170, %p171
    %p173 = scmp.ne.s32.totalorder %s164, %s165
    %p174 = scmp.eq.s32.totalorder %s28, 0
    %p175 = por %p173, %p174
    %p176 = scmp.ne.s32.totalorder %s164, %s165
    %p177 = scmp.eq.s32.totalorder %s29, 1
    %p178 = por %p176, %p177
    %p180 = scmp.ne.s32.totalorder %s165, %s179
    %p181 = scmp.eq.s32.totalorder %s29, 0
    %p182 = por %p180, %p181
    %s184 = sadd.s32 %s183, 1
    %p187 = scmp.eq.s32.totalorder %s23, 1
    %p188 = scmp.ne.s32.totalorder %s183, %s185
    %p189 = scmp.eq.s32.totalorder %s23, 0
    %p190 = por %p188, %p189
    %p191 = scmp.ne.s32.totalorder %s183, %s185
    %p192 = scmp.eq.s32.totalorder %s28, 1
    %p193 = por %p191, %p192
    %p194 = scmp.ne.s32.totalorder %s185, %s186
    %p195 = scmp.eq.s32.totalorder %s28, 0
    %p196 = por %p194, %p195
    %p197 = scmp.ne.s32.totalorder %s185, %s186
    %p198 = scmp.eq.s32.totalorder %s29, 1
    %p199 = por %p197, %p198
    %p201 = scmp.ne.s32.totalorder %s186, %s200
    %p202 = scmp.eq.s32.totalorder %s29, 0
    %p203 = por %p201, %p202
    %s205 = sadd.s32 %s204, 1
    %p208 = scmp.eq.s32.totalorder %s23, 1
    %p209 = scmp.ne.s32.totalorder %s204, %s206
    %p210 = scmp.eq.s32.totalorder %s23, 0
    %p211 = por %p209, %p210
    %p212 = scmp.ne.s32.totalorder %s204, %s206
    %p213 = scmp.eq.s32.totalorder %s28, 1
    %p214 = por %p212, %p213
    %p215 = scmp.ne.s32.totalorder %s206, %s207
    %p216 = scmp.eq.s32.totalorder %s28, 0
    %p217 = por %p215, %p216
    %p218 = scmp.ne.s32.totalorder %s206, %s207
    %p219 = scmp.eq.s32.totalorder %s29, 1
    %p220 = por %p218, %p219
    %p222 = scmp.ne.s32.totalorder %s207, %s221
    %p223 = scmp.eq.s32.totalorder %s29, 0
    %p224 = por %p222, %p223
    %s226 = sadd.s32 %s225, 1
    %p229 = scmp.eq.s32.totalorder %s23, 1
    %p230 = scmp.ne.s32.totalorder %s225, %s227
    %p231 = scmp.eq.s32.totalorder %s23, 0
    %p232 = por %p230, %p231
    %p233 = scmp.ne.s32.totalorder %s225, %s227
    %p234 = scmp.eq.s32.totalorder %s28, 1
    %p235 = por %p233, %p234
    %p236 = scmp.ne.s32.totalorder %s227, %s228
    %p237 = scmp.eq.s32.totalorder %s28, 0
    %p238 = por %p236, %p237
    %p239 = scmp.ne.s32.totalorder %s227, %s228
    %p240 = scmp.eq.s32.totalorder %s29, 1
    %p241 = por %p239, %p240
    %p243 = scmp.ne.s32.totalorder %s228, %s242
    %p244 = scmp.eq.s32.totalorder %s29, 0
    %p245 = por %p243, %p244
    %s247 = sadd.s32 %s246, 1
    %p250 = scmp.eq.s32.totalorder %s23, 1
    %p251 = scmp.ne.s32.totalorder %s246, %s248
    %p252 = scmp.eq.s32.totalorder %s23, 0
    %p253 = por %p251, %p252
    %p254 = scmp.ne.s32.totalorder %s246, %s248
    %p255 = scmp.eq.s32.totalorder %s28, 1
    %p256 = por %p254, %p255
    %p257 = scmp.ne.s32.totalorder %s248, %s249
    %p258 = scmp.eq.s32.totalorder %s28, 0
    %p259 = por %p257, %p258
    %p260 = scmp.ne.s32.totalorder %s248, %s249
    %p261 = scmp.eq.s32.totalorder %s29, 1
    %p262 = por %p260, %p261
    %p264 = scmp.ne.s32.totalorder %s249, %s263
    %p265 = scmp.eq.s32.totalorder %s29, 0
    %p266 = por %p264, %p265
    %s268 = sadd.s32 %s267, 1
    %p271 = scmp.eq.s32.totalorder %s23, 1
    %p272 = scmp.ne.s32.totalorder %s267, %s269
    %p273 = scmp.eq.s32.totalorder %s23, 0
    %p274 = por %p272, %p273
    %p275 = scmp.ne.s32.totalorder %s267, %s269
    %p276 = scmp.eq.s32.totalorder %s28, 1
    %p277 = por %p275, %p276
    %p278 = scmp.ne.s32.totalorder %s269, %s270
    %p279 = scmp.eq.s32.totalorder %s28, 0
    %p280 = por %p278, %p279
    %p281 = scmp.ne.s32.totalorder %s269, %s270
    %p282 = scmp.eq.s32.totalorder %s29, 1
    %p283 = por %p281, %p282
    %p285 = scmp.ne.s32.totalorder %s270, %s284
    %p286 = scmp.eq.s32.totalorder %s29, 0
    %p287 = por %p285, %p286
    %s289 = sadd.s32 %s288, 1
    %p292 = scmp.eq.s32.totalorder %s23, 1
    %p293 = scmp.ne.s32.totalorder %s288, %s290
    %p294 = scmp.eq.s32.totalorder %s23, 0
    %p295 = por %p293, %p294
    %p296 = scmp.ne.s32.totalorder %s288, %s290
    %p297 = scmp.eq.s32.totalorder %s28, 1
    %p298 = por %p296, %p297
    %p299 = scmp.ne.s32.totalorder %s290, %s291
    %p300 = scmp.eq.s32.totalorder %s28, 0
    %p301 = por %p299, %p300
    %p302 = scmp.ne.s32.totalorder %s290, %s291
    %p303 = scmp.eq.s32.totalorder %s29, 1
    %p304 = por %p302, %p303
    %p306 = scmp.ne.s32.totalorder %s291, %s305
    %p307 = scmp.eq.s32.totalorder %s29, 0
    %p308 = por %p306, %p307
    %s309 = ssub.s32 %s23, %s30
    %p310 = scmp.eq.s32.totalorder %s309, 0
    %s312 = sadd.s32 %s311, 1
    %s313 = scalar_select %p310, %s311, %s312
    %p316 = pneg %p310
    %p317 = scmp.eq.s32.totalorder %s23, 1
    %p318 = por %p316, %p317
    %p319 = scmp.ne.s32.totalorder %s311, %s314
    %p320 = scmp.eq.s32.totalorder %s23, 0
    %p321 = por %p319, %p320
    %p322 = scmp.ne.s32.totalorder %s311, %s314
    %p323 = scmp.eq.s32.totalorder %s28, 1
    %p324 = por %p322, %p323
    %p325 = scmp.ne.s32.totalorder %s314, %s315
    %p326 = scmp.eq.s32.totalorder %s28, 0
    %p327 = por %p325, %p326
    %p328 = scmp.ne.s32.totalorder %s314, %s315
    %p329 = scmp.eq.s32.totalorder %s29, 1
    %p330 = por %p328, %p329
    %p332 = scmp.ne.s32.totalorder %s315, %s331
    %p333 = scmp.eq.s32.totalorder %s29, 0
    %p334 = por %p332, %p333
    %s335 = ssub.s32 %s23, %s30
    %p336 = scmp.eq.s32.totalorder %s335, 0
    %s338 = sadd.s32 %s337, 1
    %s339 = scalar_select %p336, %s337, %s338
    %p342 = pneg %p336
    %p343 = scmp.eq.s32.totalorder %s23, 1
    %p344 = por %p342, %p343
    %p345 = scmp.ne.s32.totalorder %s337, %s340
    %p346 = scmp.eq.s32.totalorder %s23, 0
    %p347 = por %p345, %p346
    %p348 = scmp.ne.s32.totalorder %s337, %s340
    %p349 = scmp.eq.s32.totalorder %s28, 1
    %p350 = por %p348, %p349
    %p351 = scmp.ne.s32.totalorder %s340, %s341
    %p352 = scmp.eq.s32.totalorder %s28, 0
    %p353 = por %p351, %p352
    %p354 = scmp.ne.s32.totalorder %s340, %s341
    %p355 = scmp.eq.s32.totalorder %s29, 1
    %p356 = por %p354, %p355
    %p358 = scmp.ne.s32.totalorder %s341, %s357
    %p359 = scmp.eq.s32.totalorder %s29, 0
    %p360 = por %p358, %p359
    %s361 = ssub.s32 %s23, %s30
    %p362 = scmp.eq.s32.totalorder %s361, 0
    %s364 = sadd.s32 %s363, 1
    %s365 = scalar_select %p362, %s363, %s364
    %p368 = pneg %p362
    %p369 = scmp.eq.s32.totalorder %s23, 1
    %p370 = por %p368, %p369
    %p371 = scmp.ne.s32.totalorder %s363, %s366
    %p372 = scmp.eq.s32.totalorder %s23, 0
    %p373 = por %p371, %p372
    %p374 = scmp.ne.s32.totalorder %s363, %s366
    %p375 = scmp.eq.s32.totalorder %s28, 1
    %p376 = por %p374, %p375
    %p377 = scmp.ne.s32.totalorder %s366, %s367
    %p378 = scmp.eq.s32.totalorder %s28, 0
    %p379 = por %p377, %p378
    %p380 = scmp.ne.s32.totalorder %s366, %s367
    %p381 = scmp.eq.s32.totalorder %s29, 1
    %p382 = por %p380, %p381
    %p384 = scmp.ne.s32.totalorder %s367, %s383
    %p385 = scmp.eq.s32.totalorder %s29, 0
    %p386 = por %p384, %p385
    %s387 = ssub.s32 %s23, %s30
    %p388 = scmp.eq.s32.totalorder %s387, 0
    %s390 = sadd.s32 %s389, 1
    %s391 = scalar_select %p388, %s389, %s390
    %p394 = pneg %p388
    %p395 = scmp.eq.s32.totalorder %s23, 1
    %p396 = por %p394, %p395
    %p397 = scmp.ne.s32.totalorder %s389, %s392
    %p398 = scmp.eq.s32.totalorder %s23, 0
    %p399 = por %p397, %p398
    %p400 = scmp.ne.s32.totalorder %s389, %s392
    %p401 = scmp.eq.s32.totalorder %s28, 1
    %p402 = por %p400, %p401
    %p403 = scmp.ne.s32.totalorder %s392, %s393
    %p404 = scmp.eq.s32.totalorder %s28, 0
    %p405 = por %p403, %p404
    %p406 = scmp.ne.s32.totalorder %s392, %s393
    %p407 = scmp.eq.s32.totalorder %s29, 1
    %p408 = por %p406, %p407
    %p410 = scmp.ne.s32.totalorder %s393, %s409
    %p411 = scmp.eq.s32.totalorder %s29, 0
    %p412 = por %p410, %p411
    %p413 = scmp.le.s32.totalorder 1, %s23
    %p414 = scmp.lt.s32.totalorder %s23, 3
    %p415 = pnand %p413, %p414
    %p416 = pneg %p415
    // Predicated region
    $region9: #{sadecoder_forward.2} parent=5 // pred_check
      _
    $region10: #{sadecoder_forward.2} parent=5 // pred_check_branch
      %418 = sbr.rel (%p415) target = $region12
    $region11: #{sadecoder_forward.2} parent=5 // pred_region
      %s419 = ssub.s32 %s23, 1
      // Predicated region
      $region13: #{sadecoder_forward.2} parent=11 // pred_check
        %p420 = pneg %p70
      $region14: #{sadecoder_forward.2} parent=11 // pred_check_branch
        %422 = sbr.rel (%p420) target = $region16
      $region15: #{sadecoder_forward.2} parent=11 // pred_region
        _
      $region16: #{sadecoder_forward.2} parent=11 // pred_fallthru
        _
      // Predicated region
      $region17: #{sadecoder_forward.2} parent=11 // pred_check
        %p423 = pneg %p91
      $region18: #{sadecoder_forward.2} parent=11 // pred_check_branch
        %425 = sbr.rel (%p423) target = $region20
      $region19: #{sadecoder_forward.2} parent=11 // pred_region
        _
      $region20: #{sadecoder_forward.2} parent=11 // pred_fallthru
        _
      // Predicated region
      $region21: #{sadecoder_forward.2} parent=11 // pred_check
        %p426 = pneg %p112
      $region22: #{sadecoder_forward.2} parent=11 // pred_check_branch
        %428 = sbr.rel (%p426) target = $region24
      $region23: #{sadecoder_forward.2} parent=11 // pred_region
        _
      $region24: #{sadecoder_forward.2} parent=11 // pred_fallthru
        _
      // Predicated region
      $region25: #{sadecoder_forward.2} parent=11 // pred_check
        %p429 = pneg %p133
      $region26: #{sadecoder_forward.2} parent=11 // pred_check_branch
        %431 = sbr.rel (%p429) target = $region28
      $region27: #{sadecoder_forward.2} parent=11 // pred_region
        _
      $region28: #{sadecoder_forward.2} parent=11 // pred_fallthru
        _
      // Predicated region
      $region29: #{sadecoder_forward.2} parent=11 // pred_check
        %p432 = pneg %p154
      $region30: #{sadecoder_forward.2} parent=11 // pred_check_branch
        %434 = sbr.rel (%p432) target = $region32
      $region31: #{sadecoder_forward.2} parent=11 // pred_region
        _
      $region32: #{sadecoder_forward.2} parent=11 // pred_fallthru
        _
      // Predicated region
      $region33: #{sadecoder_forward.2} parent=11 // pred_check
        %p435 = pneg %p175
      $region34: #{sadecoder_forward.2} parent=11 // pred_check_branch
        %437 = sbr.rel (%p435) target = $region36
      $region35: #{sadecoder_forward.2} parent=11 // pred_region
        _
      $region36: #{sadecoder_forward.2} parent=11 // pred_fallthru
        _
      // Predicated region
      $region37: #{sadecoder_forward.2} parent=11 // pred_check
        %p438 = pneg %p196
      $region38: #{sadecoder_forward.2} parent=11 // pred_check_branch
        %440 = sbr.rel (%p438) target = $region40
      $region39: #{sadecoder_forward.2} parent=11 // pred_region
        _
      $region40: #{sadecoder_forward.2} parent=11 // pred_fallthru
        _
      // Predicated region
      $region41: #{sadecoder_forward.2} parent=11 // pred_check
        %p441 = pneg %p217
      $region42: #{sadecoder_forward.2} parent=11 // pred_check_branch
        %443 = sbr.rel (%p441) target = $region44
      $region43: #{sadecoder_forward.2} parent=11 // pred_region
        _
      $region44: #{sadecoder_forward.2} parent=11 // pred_fallthru
        _
      // Predicated region
      $region45: #{sadecoder_forward.2} parent=11 // pred_check
        %p444 = pneg %p238
      $region46: #{sadecoder_forward.2} parent=11 // pred_check_branch
        %446 = sbr.rel (%p444) target = $region48
      $region47: #{sadecoder_forward.2} parent=11 // pred_region
        _
      $region48: #{sadecoder_forward.2} parent=11 // pred_fallthru
        _
      // Predicated region
      $region49: #{sadecoder_forward.2} parent=11 // pred_check
        %p447 = pneg %p259
      $region50: #{sadecoder_forward.2} parent=11 // pred_check_branch
        %449 = sbr.rel (%p447) target = $region52
      $region51: #{sadecoder_forward.2} parent=11 // pred_region
        _
      $region52: #{sadecoder_forward.2} parent=11 // pred_fallthru
        _
      // Predicated region
      $region53: #{sadecoder_forward.2} parent=11 // pred_check
        %p450 = pneg %p280
      $region54: #{sadecoder_forward.2} parent=11 // pred_check_branch
        %452 = sbr.rel (%p450) target = $region56
      $region55: #{sadecoder_forward.2} parent=11 // pred_region
        _
      $region56: #{sadecoder_forward.2} parent=11 // pred_fallthru
        _
      // Predicated region
      $region57: #{sadecoder_forward.2} parent=11 // pred_check
        %p453 = pneg %p301
      $region58: #{sadecoder_forward.2} parent=11 // pred_check_branch
        %455 = sbr.rel (%p453) target = $region60
      $region59: #{sadecoder_forward.2} parent=11 // pred_region
        _
      $region60: #{sadecoder_forward.2} parent=11 // pred_fallthru
        _
    $region12: #{sadecoder_forward.2} parent=5 // pred_fallthru
      _
    %p456 = scmp.lt.s32.totalorder %s23, 2
    // Predicated region
    $region61: #{sadecoder_forward.2} parent=5 // pred_check
      %p457 = pneg %p456
    $region62: #{sadecoder_forward.2} parent=5 // pred_check_branch
      %459 = sbr.rel (%p457) target = $region64
    $region63: #{sadecoder_forward.2} parent=5 // pred_region
      // Predicated region
      $region65: #{sadecoder_forward.2} parent=63 // pred_check
        %p460 = pneg %p43
      $region66: #{sadecoder_forward.2} parent=63 // pred_check_branch
        %462 = sbr.rel (%p460) target = $region68
      $region67: #{sadecoder_forward.2} parent=63 // pred_region
        %p463 = scmp.lt.s32.totalorder %s23, 1
        %s464 = scalar_select %p463, %s23, 1
        %s465 = smul.addr %s464, 21
        %s466 = smul.addr %s465, 4
        %s467 = scalar_lea.vmem %s0, %s466
      $region68: #{sadecoder_forward.2} parent=63 // pred_fallthru
        _
    $region64: #{sadecoder_forward.2} parent=5 // pred_fallthru
      _
    %p468 = scmp.le.s32.totalorder 1, %s23
    %p469 = scmp.lt.s32.totalorder %s23, 3
    %p470 = pnand %p468, %p469
    %p471 = pneg %p470
    // Predicated region
    $region69: #{sadecoder_forward.2} parent=5 // pred_check
      _
    $region70: #{sadecoder_forward.2} parent=5 // pred_check_branch
      %473 = sbr.rel (%p470) target = $region72
    $region71: #{sadecoder_forward.2} parent=5 // pred_region
      %s474 = ssub.s32 %s23, 1
      %p475 = scmp.lt.s32.totalorder %s28, 1
      %s476 = scalar_select %p475, %s28, 1
      %s477 = smul.addr %s476, 21
      %s478 = smul.addr %s477, 4
      %s479 = scalar_lea.vmem %s0, %s478
      %p480 = pneg %p49
      %p481 = pneg %p46
      %p482 = pneg %p70
      %p483 = pneg %p67
      %p484 = pneg %p91
      %p485 = pneg %p88
      %p486 = pneg %p112
      %p487 = pneg %p109
      %p488 = pneg %p133
      %p489 = pneg %p130
      %p490 = pneg %p154
      %p491 = pneg %p151
      %p492 = pneg %p175
      %p493 = pneg %p172
      %p494 = pneg %p196
      %p495 = pneg %p193
      %p496 = pneg %p217
      %p497 = pneg %p214
      %p498 = pneg %p238
      %p499 = pneg %p235
      %p500 = pneg %p259
      %p501 = pneg %p256
      %p502 = pneg %p280
      %p503 = pneg %p277
      %p504 = pneg %p301
      %p505 = pneg %p298
      %p506 = pneg %p327
      %p507 = pneg %p324
      %p508 = scmp.lt.s32.totalorder %s28, 1
      %s509 = scalar_select %p508, %s28, 1
      %s510 = smul.addr %s509, 16
      %s511 = smul.addr %s510, 4
      %s512 = scalar_lea.vmem %s13, %s511
      %p513 = pneg %p353
      %p514 = pneg %p350
      %p515 = scmp.lt.s32.totalorder %s28, 1
      %s516 = scalar_select %p515, %s28, 1
      %s517 = smul.addr %s516, 4
      %s518 = smul.addr %s517, 4
      %s519 = scalar_lea.vmem %s14, %s518
      %p520 = pneg %p379
      %p521 = pneg %p376
      %p522 = scmp.lt.s32.totalorder %s28, 1
      %s523 = scalar_select %p522, %s28, 1
      %s524 = smul.addr %s523, 16
      %s525 = smul.addr %s524, 4
      %s526 = scalar_lea.vmem %s15, %s525
      %p527 = pneg %p405
      %p528 = pneg %p402
      %p529 = scmp.lt.s32.totalorder %s28, 1
      %s530 = scalar_select %p529, %s28, 1
      %s531 = scalar_lea.vmem %s16, %s530
      %p532 = scmp.lt.s32.totalorder %s28, 1
      %s533 = scalar_select %p532, %s28, 1
      %s534 = smul.addr %s533, 21
      %s535 = smul.addr %s534, 4
      %s536 = scalar_lea.vmem %s0, %s535
      %p537 = scmp.lt.s32.totalorder %s28, 1
      %s538 = scalar_select %p537, %s28, 1
      %s539 = smul.addr %s538, 16
      %s540 = smul.addr %s539, 4
      %s541 = scalar_lea.vmem %s13, %s540
      %p542 = scmp.lt.s32.totalorder %s28, 1
      %s543 = scalar_select %p542, %s28, 1
      %s544 = smul.addr %s543, 4
      %s545 = smul.addr %s544, 4
      %s546 = scalar_lea.vmem %s14, %s545
      %p547 = scmp.lt.s32.totalorder %s28, 1
      %s548 = scalar_select %p547, %s28, 1
      %s549 = smul.addr %s548, 16
      %s550 = smul.addr %s549, 4
      %s551 = scalar_lea.vmem %s15, %s550
      %p552 = scmp.lt.s32.totalorder %s28, 1
      %s553 = scalar_select %p552, %s28, 1
      %s554 = scalar_lea.vmem %s16, %s553
      %v558 = vld [vmem:[%s536] sm:$0xf]
      %v559 = vld [vmem:[%s536 + $0x4] sm:$0xf]
      %v560 = vld [vmem:[%s536 + $0x8] sm:$0xf]
      %v561 = vld [vmem:[%s536 + $0xc] sm:$0xf]
      %v562 = vld [vmem:[%s536 + $0x10] sm:$0xf]
      %v563 = vld [vmem:[%s536 + $0x14] sm:$0xf]
      %v564 = vld [vmem:[%s536 + $0x18] sm:$0xf]
      %v565 = vld [vmem:[%s536 + $0x1c] sm:$0xf]
      %v566 = vld [vmem:[%s536 + $0x20] sm:$0xf]
      %v567 = vld [vmem:[%s536 + $0x24] sm:$0xf]
      %v568 = vld [vmem:[%s536 + $0x28] sm:$0xf]
      %v569 = vld [vmem:[%s536 + $0x2c] sm:$0xf]
      %v570 = vld [vmem:[%s536 + $0x30] sm:$0xf]
      %v571 = vld [vmem:[%s536 + $0x34] sm:$0xf]
      %v572 = vld [vmem:[%s536 + $0x38] sm:$0xf]
      %v573 = vld [vmem:[%s536 + $0x3c] sm:$0xf]
      %v574 = vld [vmem:[%s536 + $0x40] sm:$0xf]
      %v575 = vld [vmem:[%s536 + $0x44] sm:$0xf]
      %v576 = vld [vmem:[%s536 + $0x48] sm:$0xf]
      %v577 = vld [vmem:[%s536 + $0x4c] sm:$0xf]
      %v578 = vld [vmem:[%s536 + $0x50] sm:$0x1]
      %v579 = vunpack.c.l.bf16 %v560
      %v580 = vunpack.c.l.bf16 %v561
      %v581 = vunpack.c.l.bf16 %v562
      %v582 = vunpack.c.l.bf16 %v563
      %v583 = vunpack.c.l.bf16 %v564
      %v584 = vunpack.c.l.bf16 %v565
      %v585 = vunpack.c.l.bf16 %v566
      %v586 = vunpack.c.l.bf16 %v567
      %v587 = vunpack.c.l.bf16 %v568
      %v588 = vunpack.c.l.bf16 %v569
      %v589 = vunpack.c.l.bf16 %v570
      %v590 = vunpack.c.l.bf16 %v571
      %v591 = vunpack.c.l.bf16 %v572
      %v592 = vunpack.c.l.bf16 %v573
      %v593 = vunpack.c.l.bf16 %v574
      %v594 = vunpack.c.l.bf16 %v575
      %v595 = vunpack.c.l.bf16 %v576
      %vm613 = vcmask 1046528
      %v614 = vrot.slane %v579, 1
      %v615 = vrot.slane %v580, 1
      %v616 = vsel %vm613, %v614, %v615
      %v617 = vrot.slane %v581, 1
      %v618 = vsel %vm613, %v615, %v617
      %v619 = vrot.slane %v582, 1
      %v620 = vsel %vm613, %v617, %v619
      %v621 = vrot.slane %v583, 1
      %v622 = vsel %vm613, %v619, %v621
      %v623 = vrot.slane %v584, 1
      %v624 = vsel %vm613, %v621, %v623
      %v625 = vrot.slane %v585, 1
      %v626 = vsel %vm613, %v623, %v625
      %v627 = vrot.slane %v586, 1
      %v628 = vsel %vm613, %v625, %v627
      %v629 = vrot.slane %v587, 1
      %v630 = vsel %vm613, %v627, %v629
      %v631 = vrot.slane %v588, 1
      %v632 = vsel %vm613, %v629, %v631
      %v633 = vrot.slane %v589, 1
      %v634 = vsel %vm613, %v631, %v633
      %v635 = vrot.slane %v590, 1
      %v636 = vsel %vm613, %v633, %v635
      %v637 = vrot.slane %v591, 1
      %v638 = vsel %vm613, %v635, %v637
      %v639 = vrot.slane %v592, 1
      %v640 = vsel %vm613, %v637, %v639
      %v641 = vrot.slane %v593, 1
      %v642 = vsel %vm613, %v639, %v641
      %v643 = vrot.slane %v594, 1
      %v644 = vsel %vm613, %v641, %v643
      %v645 = vrot.slane %v595, 1
      %v646 = vsel %vm613, %v643, %v645
      %v663 = vadd.f32 %v616, %v618
      %v664 = vadd.f32 %v663, %v620
      %v665 = vadd.f32 %v664, %v622
      %v666 = vadd.f32 %v665, %v624
      %v667 = vadd.f32 %v666, %v626
      %v668 = vadd.f32 %v667, %v628
      %v669 = vadd.f32 %v668, %v630
      %v670 = vadd.f32 %v669, %v632
      %v671 = vadd.f32 %v670, %v634
      %v672 = vadd.f32 %v671, %v636
      %v673 = vadd.f32 %v672, %v638
      %v674 = vadd.f32 %v673, %v640
      %v675 = vadd.f32 %v674, %v642
      %v676 = vadd.f32 %v675, %v644
      %v677 = vadd.f32 %v676, %v646
      %v678 = vrot.slane %v677, 4
      %v679 = vadd.f32 %v677, %v678
      %v680 = vrot.slane %v679, 2
      %v681 = vadd.f32 %v679, %v680
      %v682 = vrot.slane %v681, 1
      %v683 = vadd.f32 %v681, %v682
      %v684 = vrcp.pop 128.0
      %v685 = vmul.f32 %v683, %v684
      %v686 = vpack.c.bf16 %v685, %v685
      %v687 = vld [vmem:[%s7] sm:$0xf]
      %v688 = vld [vmem:[%s7 + $0x4] sm:$0xf]
      %v689 = vld [vmem:[%s7 + $0x8] sm:$0xf]
      %v690 = vld [vmem:[%s7 + $0xc] sm:$0xf]
      %v691 = vld [vmem:[%s7 + $0x10] sm:$0xf]
      %v692 = vld [vmem:[%s7 + $0x14] sm:$0xf]
      %v693 = vld [vmem:[%s7 + $0x18] sm:$0xf]
      %v694 = vld [vmem:[%s7 + $0x1c] sm:$0xf]
      %v695 = vld [vmem:[%s7 + $0x20] sm:$0xf]
      %v696 = vld [vmem:[%s7 + $0x24] sm:$0xf]
      %v697 = vld [vmem:[%s7 + $0x28] sm:$0xf]
      %v698 = vld [vmem:[%s7 + $0x2c] sm:$0xf]
      %v699 = vld [vmem:[%s7 + $0x30] sm:$0xf]
      %v700 = vld [vmem:[%s7 + $0x34] sm:$0xf]
      %v701 = vld [vmem:[%s7 + $0x38] sm:$0xf]
      %v702 = vld [vmem:[%s7 + $0x3c] sm:$0xf]
      %v703 = vld [vmem:[%s8] sm:$0x1]
      %v720 = vunpack.c.l.b16 %v687
      %v721 = vunpack.c.l.b16 %v688
      %v722 = vunpack.c.l.b16 %v689
      %v723 = vunpack.c.l.b16 %v690
      %v724 = vunpack.c.l.b16 %v691
      %v725 = vunpack.c.l.b16 %v692
      %v726 = vunpack.c.l.b16 %v693
      %v727 = vunpack.c.l.b16 %v694
      %v728 = vunpack.c.l.b16 %v695
      %v729 = vunpack.c.l.b16 %v696
      %v730 = vunpack.c.l.b16 %v697
      %v731 = vunpack.c.l.b16 %v698
      %v732 = vunpack.c.l.b16 %v699
      %v733 = vunpack.c.l.b16 %v700
      %v734 = vunpack.c.l.b16 %v701
      %v735 = vunpack.c.l.b16 %v702
      %v736 = vpack.c.b16 %v721, %v720
      %v737 = vpack.c.b16 %v723, %v722
      %v738 = vpack.c.b16 %v725, %v724
      %v739 = vpack.c.b16 %v727, %v726
      %v740 = vpack.c.b16 %v729, %v728
      %v741 = vpack.c.b16 %v731, %v730
      %v742 = vpack.c.b16 %v733, %v732
      %v743 = vpack.c.b16 %v735, %v734
      %752 = vmatprep.subr.bf16.mxu0 0
      %753 = vmatpush1.bf16.msra.mxu0 %v743
      %754 = vmatprep.subr.bf16.mxu0 0
      %755 = vmatpush1.bf16.msra.mxu0 %v742
      %756 = vmatprep.subr.bf16.mxu0 0
      %757 = vmatpush1.bf16.msra.mxu0 %v741
      %758 = vmatprep.subr.bf16.mxu0 0
      %759 = vmatpush1.bf16.msra.mxu0 %v740
      %760 = vmatprep.subr.bf16.mxu0 0
      %761 = vmatpush1.bf16.msra.mxu0 %v739
      %762 = vmatprep.subr.bf16.mxu0 0
      %763 = vmatpush1.bf16.msra.mxu0 %v738
      %764 = vmatprep.subr.bf16.mxu0 0
      %765 = vmatpush1.bf16.msra.mxu0 %v737
      %766 = vmatprep.subr.bf16.mxu0 0
      %767 = vmatpush1.bf16.msra.mxu0 %v736
      %768 = vmatprep.subr.bf16.mxu0 0
      %769 = vmatpush2.bf16.msra.mxu0 0
      %770 = vmatprep.subr.bf16.mxu0 0
      %771 = vmatpush2.bf16.msra.mxu0 0
      %772 = vmatprep.subr.bf16.mxu0 0
      %773 = vmatpush2.bf16.msra.mxu0 0
      %774 = vmatprep.subr.bf16.mxu0 0
      %775 = vmatpush2.bf16.msra.mxu0 0
      %776 = vmatprep.subr.bf16.mxu0 0
      %777 = vmatpush2.bf16.msra.mxu0 0
      %778 = vmatprep.subr.bf16.mxu0 0
      %779 = vmatpush2.bf16.msra.mxu0 0
      %780 = vmatprep.subr.bf16.mxu0 0
      %781 = vmatpush2.bf16.msra.mxu0 0
      %782 = vmatprep.subr.bf16.mxu0 0
      %783 = vmatpush2.bf16.msra.mxu0 0
      %784 = vmatprep.mubr.bf16.mxu0 0
      %785 = vmatmul.mubr.bf16.gmra.mxu0 %v686
      %v786 = vpop.f32.mrf.mxu0
      %v787 = vadd.f32 %v703, %v786
      %v788 = vpop.f32.mrf.mxu0
      %v789 = vpop.f32.mrf.mxu0
      %v790 = vpop.f32.mrf.mxu0
      %791 = vdwg.mxu0
      %v792 = vmax.f32 %v787, 0.0
      %v793 = vpack.c.bf16 %v792, %v792
      %v794 = vld [vmem:[%s9] sm:$0xf]
      %v795 = vld [vmem:[%s9 + $0x4] sm:$0xf]
      %v796 = vld [vmem:[%s9 + $0x8] sm:$0xf]
      %v797 = vld [vmem:[%s9 + $0xc] sm:$0xf]
      %v798 = vld [vmem:[%s10] sm:$0x1]
      %v803 = vunpack.c.l.b16 %v794
      %v804 = vunpack.c.l.b16 %v795
      %v805 = vunpack.c.l.b16 %v796
      %v806 = vunpack.c.l.b16 %v797
      %v807 = vpack.c.b16 %v804, %v803
      %v808 = vpack.c.b16 %v806, %v805
      %vm811 = vcmask 261120
      %v813 = vsel %vm811, %v793, 0
      %815 = vmatprep.subr.bf16.mxu0 0
      %816 = vmatpush1.bf16.msra.mxu0 0
      %817 = vmatprep.subr.bf16.mxu0 0
      %818 = vmatpush1.bf16.msra.mxu0 0
      %819 = vmatprep.subr.bf16.mxu0 0
      %820 = vmatpush1.bf16.msra.mxu0 0
      %821 = vmatprep.subr.bf16.mxu0 0
      %822 = vmatpush1.bf16.msra.mxu0 0
      %823 = vmatprep.subr.bf16.mxu0 0
      %824 = vmatpush1.bf16.msra.mxu0 0
      %825 = vmatprep.subr.bf16.mxu0 0
      %826 = vmatpush1.bf16.msra.mxu0 0
      %827 = vmatprep.subr.bf16.mxu0 0
      %828 = vmatpush1.bf16.msra.mxu0 %v808
      %829 = vmatprep.subr.bf16.mxu0 0
      %830 = vmatpush1.bf16.msra.mxu0 %v807
      %831 = vmatprep.subr.bf16.mxu0 0
      %832 = vmatpush2.bf16.msra.mxu0 0
      %833 = vmatprep.subr.bf16.mxu0 0
      %834 = vmatpush2.bf16.msra.mxu0 0
      %835 = vmatprep.subr.bf16.mxu0 0
      %836 = vmatpush2.bf16.msra.mxu0 0
      %837 = vmatprep.subr.bf16.mxu0 0
      %838 = vmatpush2.bf16.msra.mxu0 0
      %839 = vmatprep.subr.bf16.mxu0 0
      %840 = vmatpush2.bf16.msra.mxu0 0
      %841 = vmatprep.subr.bf16.mxu0 0
      %842 = vmatpush2.bf16.msra.mxu0 0
      %843 = vmatprep.subr.bf16.mxu0 0
      %844 = vmatpush2.bf16.msra.mxu0 0
      %845 = vmatprep.subr.bf16.mxu0 0
      %846 = vmatpush2.bf16.msra.mxu0 0
      %847 = vmatprep.mubr.bf16.mxu0 0
      %848 = vmatmul.mubr.bf16.gmra.mxu0 %v813
      %v849 = vpop.f32.mrf.mxu0
      %v850 = vadd.f32 %v798, %v849
      %v851 = vpop.f32.mrf.mxu0
      %v852 = vpop.f32.mrf.mxu0
      %v853 = vpop.f32.mrf.mxu0
      %854 = vdwg.mxu0
      %v855 = vmax.f32 %v850, 0.0
      %v856 = vpack.c.bf16 %v855, %v855
      %v857 = vld [vmem:[%s11] sm:$0xf]
      %v858 = vld [vmem:[%s11 + $0x4] sm:$0xf]
      %v859 = vld [vmem:[%s11 + $0x8] sm:$0xf]
      %v860 = vld [vmem:[%s11 + $0xc] sm:$0xf]
      %v861 = vld [vmem:[%s12] sm:$0x1]
      %v866 = vunpack.c.l.b16 %v857
      %v867 = vunpack.c.l.b16 %v858
      %v868 = vunpack.c.l.b16 %v859
      %v869 = vunpack.c.l.b16 %v860
      %v870 = vpack.c.b16 %v867, %v866
      %v871 = vpack.c.b16 %v869, %v868
      %v875 = vsel %vm811, %v856, 0
      %877 = vmatprep.subr.bf16.mxu0 0
      %878 = vmatpush1.bf16.msra.mxu0 0
      %879 = vmatprep.subr.bf16.mxu0 0
      %880 = vmatpush1.bf16.msra.mxu0 0
      %881 = vmatprep.subr.bf16.mxu0 0
      %882 = vmatpush1.bf16.msra.mxu0 0
      %883 = vmatprep.subr.bf16.mxu0 0
      %884 = vmatpush1.bf16.msra.mxu0 0
      %885 = vmatprep.subr.bf16.mxu0 0
      %886 = vmatpush1.bf16.msra.mxu0 0
      %887 = vmatprep.subr.bf16.mxu0 0
      %888 = vmatpush1.bf16.msra.mxu0 0
      %889 = vmatprep.subr.bf16.mxu0 0
      %890 = vmatpush1.bf16.msra.mxu0 %v871
      %891 = vmatprep.subr.bf16.mxu0 0
      %892 = vmatpush1.bf16.msra.mxu0 %v870
      %893 = vmatprep.subr.bf16.mxu0 0
      %894 = vmatpush2.bf16.msra.mxu0 0
      %895 = vmatprep.subr.bf16.mxu0 0
      %896 = vmatpush2.bf16.msra.mxu0 0
      %897 = vmatprep.subr.bf16.mxu0 0
      %898 = vmatpush2.bf16.msra.mxu0 0
      %899 = vmatprep.subr.bf16.mxu0 0
      %900 = vmatpush2.bf16.msra.mxu0 0
      %901 = vmatprep.subr.bf16.mxu0 0
      %902 = vmatpush2.bf16.msra.mxu0 0
      %903 = vmatprep.subr.bf16.mxu0 0
      %904 = vmatpush2.bf16.msra.mxu0 0
      %905 = vmatprep.subr.bf16.mxu0 0
      %906 = vmatpush2.bf16.msra.mxu0 0
      %907 = vmatprep.subr.bf16.mxu0 0
      %908 = vmatpush2.bf16.msra.mxu0 0
      %909 = vmatprep.mubr.bf16.mxu0 0
      %910 = vmatmul.mubr.bf16.gmra.mxu0 %v875
      %v911 = vpop.f32.mrf.mxu0
      %v912 = vadd.f32 %v861, %v911
      %v913 = vpop.f32.mrf.mxu0
      %v914 = vpop.f32.mrf.mxu0
      %v915 = vpop.f32.mrf.mxu0
      %916 = vdwg.mxu0
      %917 = vst [vmem:[%s554] sm:$0x1] %v912
      %v918 = vld [vmem:[%s1] sm:$0xf]
      %v919 = vld [vmem:[%s1 + $0x4] sm:$0xf]
      %v920 = vld [vmem:[%s1 + $0x8] sm:$0xf]
      %v921 = vld [vmem:[%s1 + $0xc] sm:$0xf]
      %v922 = vld [vmem:[%s1 + $0x10] sm:$0xf]
      %v923 = vld [vmem:[%s1 + $0x14] sm:$0xf]
      %v924 = vld [vmem:[%s1 + $0x18] sm:$0xf]
      %v925 = vld [vmem:[%s1 + $0x1c] sm:$0xf]
      %v926 = vld [vmem:[%s1 + $0x20] sm:$0xf]
      %v927 = vld [vmem:[%s1 + $0x24] sm:$0xf]
      %v928 = vld [vmem:[%s1 + $0x28] sm:$0xf]
      %v929 = vld [vmem:[%s1 + $0x2c] sm:$0xf]
      %v930 = vld [vmem:[%s1 + $0x30] sm:$0xf]
      %v931 = vld [vmem:[%s1 + $0x34] sm:$0xf]
      %v932 = vld [vmem:[%s1 + $0x38] sm:$0xf]
      %v933 = vld [vmem:[%s1 + $0x3c] sm:$0xf]
      %v934 = vld [vmem:[%s2] sm:$0x1]
      %v936 = vlaneseq
      %v937 = vshrl.u32 %v936, 7
      %v938 = vsub.s32 0, %v937
      %v939 = vrot.slane %v934, %v938
      %v958 = vunpack.c.l.b16 %v560
      %v959 = vunpack.c.l.b16 %v561
      %v960 = vunpack.c.l.b16 %v562
      %v961 = vunpack.c.l.b16 %v563
      %v962 = vunpack.c.l.b16 %v564
      %v963 = vunpack.c.l.b16 %v565
      %v964 = vunpack.c.l.b16 %v566
      %v965 = vunpack.c.l.b16 %v567
      %v966 = vunpack.c.l.b16 %v568
      %v967 = vunpack.c.l.b16 %v569
      %v968 = vunpack.c.l.b16 %v570
      %v969 = vunpack.c.l.b16 %v571
      %v970 = vunpack.c.l.b16 %v572
      %v971 = vunpack.c.l.b16 %v573
      %v972 = vunpack.c.l.b16 %v574
      %v973 = vunpack.c.l.b16 %v575
      %v974 = vunpack.c.l.b16 %v576
      %v975 = vpack.c.b16 %v959, %v958
      %v976 = vpack.c.b16 %v961, %v960
      %v977 = vpack.c.b16 %v963, %v962
      %v978 = vpack.c.b16 %v965, %v964
      %v979 = vpack.c.b16 %v967, %v966
      %v980 = vpack.c.b16 %v969, %v968
      %v981 = vpack.c.b16 %v971, %v970
      %v982 = vpack.c.b16 %v973, %v972
      %v983 = vpack.c.b16 %v974, %v974
      %vm984 = vsmask.f32 7424
      %v986 = vshrl.u32 %v975, 16
      %v988 = vshll.u32 %v975, 16
      %v990 = vrot.slane %v988, 1
      %v991 = vor.u32 %v986, %v990
      %v993 = vshll.u32 %v976, 16
      %v995 = vrot.slane %v993, 1
      %v996 = vsel %vm984, %v991, %v995
      %v997 = vshrl.u32 %v976, 16
      %v999 = vor.u32 %v997, %v995
      %v1001 = vshll.u32 %v977, 16
      %v1003 = vrot.slane %v1001, 1
      %v1004 = vsel %vm984, %v999, %v1003
      %v1005 = vshrl.u32 %v977, 16
      %v1007 = vor.u32 %v1005, %v1003
      %v1009 = vshll.u32 %v978, 16
      %v1011 = vrot.slane %v1009, 1
      %v1012 = vsel %vm984, %v1007, %v1011
      %v1013 = vshrl.u32 %v978, 16
      %v1015 = vor.u32 %v1013, %v1011
      %v1017 = vshll.u32 %v979, 16
      %v1019 = vrot.slane %v1017, 1
      %v1020 = vsel %vm984, %v1015, %v1019
      %v1021 = vshrl.u32 %v979, 16
      %v1023 = vor.u32 %v1021, %v1019
      %v1025 = vshll.u32 %v980, 16
      %v1027 = vrot.slane %v1025, 1
      %v1028 = vsel %vm984, %v1023, %v1027
      %v1029 = vshrl.u32 %v980, 16
      %v1031 = vor.u32 %v1029, %v1027
      %v1033 = vshll.u32 %v981, 16
      %v1035 = vrot.slane %v1033, 1
      %v1036 = vsel %vm984, %v1031, %v1035
      %v1037 = vshrl.u32 %v981, 16
      %v1039 = vor.u32 %v1037, %v1035
      %v1041 = vshll.u32 %v982, 16
      %v1043 = vrot.slane %v1041, 1
      %v1044 = vsel %vm984, %v1039, %v1043
      %v1045 = vshrl.u32 %v982, 16
      %v1047 = vor.u32 %v1045, %v1043
      %v1049 = vshll.u32 %v983, 16
      %v1051 = vrot.slane %v1049, 1
      %v1052 = vsel %vm984, %v1047, %v1051
      %v1077 = vunpack.c.l.b16 %v918
      %v1078 = vunpack.c.l.b16 %v919
      %v1079 = vunpack.c.l.b16 %v920
      %v1080 = vunpack.c.l.b16 %v921
      %v1081 = vunpack.c.l.b16 %v922
      %v1082 = vunpack.c.l.b16 %v923
      %v1083 = vunpack.c.l.b16 %v924
      %v1084 = vunpack.c.l.b16 %v925
      %v1085 = vunpack.c.l.b16 %v926
      %v1086 = vunpack.c.l.b16 %v927
      %v1087 = vunpack.c.l.b16 %v928
      %v1088 = vunpack.c.l.b16 %v929
      %v1089 = vunpack.c.l.b16 %v930
      %v1090 = vunpack.c.l.b16 %v931
      %v1091 = vunpack.c.l.b16 %v932
      %v1092 = vunpack.c.l.b16 %v933
      %v1093 = vpack.c.b16 %v1078, %v1077
      %v1094 = vpack.c.b16 %v1080, %v1079
      %v1095 = vpack.c.b16 %v1082, %v1081
      %v1096 = vpack.c.b16 %v1084, %v1083
      %v1097 = vpack.c.b16 %v1086, %v1085
      %v1098 = vpack.c.b16 %v1088, %v1087
      %v1099 = vpack.c.b16 %v1090, %v1089
      %v1100 = vpack.c.b16 %v1092, %v1091
      %1109 = vmatprep.subr.bf16.mxu0 0
      %1110 = vmatpush1.bf16.msra.mxu0 %v1100
      %1111 = vmatprep.subr.bf16.mxu0 0
      %1112 = vmatpush1.bf16.msra.mxu0 %v1099
      %1113 = vmatprep.subr.bf16.mxu0 0
      %1114 = vmatpush1.bf16.msra.mxu0 %v1098
      %1115 = vmatprep.subr.bf16.mxu0 0
      %1116 = vmatpush1.bf16.msra.mxu0 %v1097
      %1117 = vmatprep.subr.bf16.mxu0 0
      %1118 = vmatpush1.bf16.msra.mxu0 %v1096
      %1119 = vmatprep.subr.bf16.mxu0 0
      %1120 = vmatpush1.bf16.msra.mxu0 %v1095
      %1121 = vmatprep.subr.bf16.mxu0 0
      %1122 = vmatpush1.bf16.msra.mxu0 %v1094
      %1123 = vmatprep.subr.bf16.mxu0 0
      %1124 = vmatpush1.bf16.msra.mxu0 %v1093
      %1125 = vmatprep.subr.bf16.mxu0 0
      %1126 = vmatpush2.bf16.msra.mxu0 0
      %1127 = vmatprep.subr.bf16.mxu0 0
      %1128 = vmatpush2.bf16.msra.mxu0 0
      %1129 = vmatprep.subr.bf16.mxu0 0
      %1130 = vmatpush2.bf16.msra.mxu0 0
      %1131 = vmatprep.subr.bf16.mxu0 0
      %1132 = vmatpush2.bf16.msra.mxu0 0
      %1133 = vmatprep.subr.bf16.mxu0 0
      %1134 = vmatpush2.bf16.msra.mxu0 0
      %1135 = vmatprep.subr.bf16.mxu0 0
      %1136 = vmatpush2.bf16.msra.mxu0 0
      %1137 = vmatprep.subr.bf16.mxu0 0
      %1138 = vmatpush2.bf16.msra.mxu0 0
      %1139 = vmatprep.subr.bf16.mxu0 0
      %1140 = vmatpush2.bf16.msra.mxu0 0
      %1141 = vmatprep.mubr.bf16.mxu0 0
      %1142 = vmatmul.mubr.bf16.gmra.mxu0 %v996
      %v1143 = vpop.f32.mrf.mxu0
      %v1144 = vadd.f32 %v939, %v1143
      %v1145 = vpop.f32.mrf.mxu0
      %v1146 = vpop.f32.mrf.mxu0
      %v1147 = vadd.f32 %v939, %v1146
      %v1148 = vpop.f32.mrf.mxu0
      %1149 = vmatprep.mubr.bf16.mxu0 0
      %1150 = vmatmul.mubr.bf16.gmra.mxu0 %v1004
      %v1151 = vpop.f32.mrf.mxu0
      %v1152 = vadd.f32 %v939, %v1151
      %v1153 = vpop.f32.mrf.mxu0
      %v1154 = vpop.f32.mrf.mxu0
      %v1155 = vadd.f32 %v939, %v1154
      %v1156 = vpop.f32.mrf.mxu0
      %1157 = vmatprep.mubr.bf16.mxu0 0
      %1158 = vmatmul.mubr.bf16.gmra.mxu0 %v1012
      %v1159 = vpop.f32.mrf.mxu0
      %v1160 = vadd.f32 %v939, %v1159
      %v1161 = vpop.f32.mrf.mxu0
      %v1162 = vpop.f32.mrf.mxu0
      %v1163 = vadd.f32 %v939, %v1162
      %v1164 = vpop.f32.mrf.mxu0
      %1165 = vmatprep.mubr.bf16.mxu0 0
      %1166 = vmatmul.mubr.bf16.gmra.mxu0 %v1020
      %v1167 = vpop.f32.mrf.mxu0
      %v1168 = vadd.f32 %v939, %v1167
      %v1169 = vpop.f32.mrf.mxu0
      %v1170 = vpop.f32.mrf.mxu0
      %v1171 = vadd.f32 %v939, %v1170
      %v1172 = vpop.f32.mrf.mxu0
      %1173 = vmatprep.mubr.bf16.mxu0 0
      %1174 = vmatmul.mubr.bf16.gmra.mxu0 %v1028
      %v1175 = vpop.f32.mrf.mxu0
      %v1176 = vadd.f32 %v939, %v1175
      %v1177 = vpop.f32.mrf.mxu0
      %v1178 = vpop.f32.mrf.mxu0
      %v1179 = vadd.f32 %v939, %v1178
      %v1180 = vpop.f32.mrf.mxu0
      %1181 = vmatprep.mubr.bf16.mxu0 0
      %1182 = vmatmul.mubr.bf16.gmra.mxu0 %v1036
      %v1183 = vpop.f32.mrf.mxu0
      %v1184 = vadd.f32 %v939, %v1183
      %v1185 = vpop.f32.mrf.mxu0
      %v1186 = vpop.f32.mrf.mxu0
      %v1187 = vadd.f32 %v939, %v1186
      %v1188 = vpop.f32.mrf.mxu0
      %1189 = vmatprep.mubr.bf16.mxu0 0
      %1190 = vmatmul.mubr.bf16.gmra.mxu0 %v1044
      %v1191 = vpop.f32.mrf.mxu0
      %v1192 = vadd.f32 %v939, %v1191
      %v1193 = vpop.f32.mrf.mxu0
      %v1194 = vpop.f32.mrf.mxu0
      %v1195 = vadd.f32 %v939, %v1194
      %v1196 = vpop.f32.mrf.mxu0
      %1197 = vmatprep.mubr.bf16.mxu0 0
      %1198 = vmatmul.mubr.bf16.gmra.mxu0 %v1052
      %v1199 = vpop.f32.mrf.mxu0
      %v1200 = vadd.f32 %v939, %v1199
      %v1201 = vpop.f32.mrf.mxu0
      %v1202 = vpop.f32.mrf.mxu0
      %v1203 = vadd.f32 %v939, %v1202
      %v1204 = vpop.f32.mrf.mxu0
      %1205 = vdwg.mxu0
      %v1206 = vmax.f32 %v1144, 0.0
      %v1207 = vmax.f32 %v1147, 0.0
      %v1208 = vmax.f32 %v1152, 0.0
      %v1209 = vmax.f32 %v1155, 0.0
      %v1210 = vmax.f32 %v1160, 0.0
      %v1211 = vmax.f32 %v1163, 0.0
      %v1212 = vmax.f32 %v1168, 0.0
      %v1213 = vmax.f32 %v1171, 0.0
      %v1214 = vmax.f32 %v1176, 0.0
      %v1215 = vmax.f32 %v1179, 0.0
      %v1216 = vmax.f32 %v1184, 0.0
      %v1217 = vmax.f32 %v1187, 0.0
      %v1218 = vmax.f32 %v1192, 0.0
      %v1219 = vmax.f32 %v1195, 0.0
      %v1220 = vmax.f32 %v1200, 0.0
      %v1221 = vmax.f32 %v1203, 0.0
      %1222 = vxpose.xlu0.b32.start [1/16] %v1206, 128
      %1223 = vxpose.xlu0.b32.cont [2/16] %v1207, 128
      %1224 = vxpose.xlu0.b32.cont [3/16] %v1208, 128
      %1225 = vxpose.xlu0.b32.cont [4/16] %v1209, 128
      %1226 = vxpose.xlu0.b32.cont [5/16] %v1210, 128
      %1227 = vxpose.xlu0.b32.cont [6/16] %v1211, 128
      %1228 = vxpose.xlu0.b32.cont [7/16] %v1212, 128
      %1229 = vxpose.xlu0.b32.cont [8/16] %v1213, 128
      %1230 = vxpose.xlu0.b32.cont [9/16] %v1214, 128
      %1231 = vxpose.xlu0.b32.cont [10/16] %v1215, 128
      %1232 = vxpose.xlu0.b32.cont [11/16] %v1216, 128
      %1233 = vxpose.xlu0.b32.cont [12/16] %v1217, 128
      %1234 = vxpose.xlu0.b32.cont [13/16] %v1218, 128
      %1235 = vxpose.xlu0.b32.cont [14/16] %v1219, 128
      %1236 = vxpose.xlu0.b32.cont [15/16] %v1220, 128
      %1237 = vxpose.xlu0.b32.end [16/16] %v1221, 128
      %v1238 = vpop.trf.xlu0
      %v1239 = vpop.trf.xlu0
      %v1240 = vpop.trf.xlu0
      %v1241 = vpop.trf.xlu0
      %v1242 = vpop.trf.xlu0
      %v1243 = vpop.trf.xlu0
      %v1244 = vpop.trf.xlu0
      %v1245 = vpop.trf.xlu0
      %v1246 = vpop.trf.xlu0
      %v1247 = vpop.trf.xlu0
      %v1248 = vpop.trf.xlu0
      %v1249 = vpop.trf.xlu0
      %v1250 = vpop.trf.xlu0
      %v1251 = vpop.trf.xlu0
      %v1252 = vpop.trf.xlu0
      %v1253 = vpop.trf.xlu0
      %v1254 = vpack.c.bf16 %v1239, %v1238
      %v1255 = vpack.c.bf16 %v1241, %v1240
      %v1258 = vunpack.c.l.b16 %v1254
      %v1259 = vunpack.c.h.b16 %v1254
      %v1260 = vunpack.c.l.b16 %v1255
      %v1261 = vunpack.c.h.b16 %v1255
      %v1262 = vpack.c.b16 %v1258, %v1258
      %v1263 = vpack.c.b16 %v1259, %v1259
      %v1264 = vpack.c.b16 %v1260, %v1260
      %v1265 = vpack.c.b16 %v1261, %v1261
      %1270 = vst [vmem:[%s546] sm:$0xf] %v1262
      %1271 = vst [vmem:[%s546 + $0x4] sm:$0xf] %v1263
      %1272 = vst [vmem:[%s546 + $0x8] sm:$0xf] %v1264
      %1273 = vst [vmem:[%s546 + $0xc] sm:$0xf] %v1265
      %v1274 = vmul.f32 %v1206, 0.17677669
      %v1275 = vmul.f32 %v1207, 0.17677669
      %v1276 = vmul.f32 %v1208, 0.17677669
      %v1277 = vmul.f32 %v1209, 0.17677669
      %v1278 = vmul.f32 %v1210, 0.17677669
      %v1279 = vmul.f32 %v1211, 0.17677669
      %v1280 = vmul.f32 %v1212, 0.17677669
      %v1281 = vmul.f32 %v1213, 0.17677669
      %v1282 = vmul.f32 %v1214, 0.17677669
      %v1283 = vmul.f32 %v1215, 0.17677669
      %v1284 = vmul.f32 %v1216, 0.17677669
      %v1285 = vmul.f32 %v1217, 0.17677669
      %v1286 = vmul.f32 %v1218, 0.17677669
      %v1287 = vmul.f32 %v1219, 0.17677669
      %v1288 = vmul.f32 %v1220, 0.17677669
      %v1289 = vmul.f32 %v1221, 0.17677669
      %v1290 = vpack.c.bf16 %v1275, %v1274
      %v1291 = vpack.c.bf16 %v1277, %v1276
      %v1292 = vpack.c.bf16 %v1279, %v1278
      %v1293 = vpack.c.bf16 %v1281, %v1280
      %v1294 = vpack.c.bf16 %v1283, %v1282
      %v1295 = vpack.c.bf16 %v1285, %v1284
      %v1296 = vpack.c.bf16 %v1287, %v1286
      %v1297 = vpack.c.bf16 %v1289, %v1288
      %v1306 = vunpack.c.l.b16 %v1290
      %v1307 = vunpack.c.h.b16 %v1290
      %v1308 = vunpack.c.l.b16 %v1291
      %v1309 = vunpack.c.h.b16 %v1291
      %v1310 = vunpack.c.l.b16 %v1292
      %v1311 = vunpack.c.h.b16 %v1292
      %v1312 = vunpack.c.l.b16 %v1293
      %v1313 = vunpack.c.h.b16 %v1293
      %v1314 = vunpack.c.l.b16 %v1294
      %v1315 = vunpack.c.h.b16 %v1294
      %v1316 = vunpack.c.l.b16 %v1295
      %v1317 = vunpack.c.h.b16 %v1295
      %v1318 = vunpack.c.l.b16 %v1296
      %v1319 = vunpack.c.h.b16 %v1296
      %v1320 = vunpack.c.l.b16 %v1297
      %v1321 = vunpack.c.h.b16 %v1297
      %v1322 = vpack.c.b16 %v1306, %v1306
      %v1323 = vpack.c.b16 %v1307, %v1307
      %v1324 = vpack.c.b16 %v1308, %v1308
      %v1325 = vpack.c.b16 %v1309, %v1309
      %v1326 = vpack.c.b16 %v1310, %v1310
      %v1327 = vpack.c.b16 %v1311, %v1311
      %v1328 = vpack.c.b16 %v1312, %v1312
      %v1329 = vpack.c.b16 %v1313, %v1313
      %v1330 = vpack.c.b16 %v1314, %v1314
      %v1331 = vpack.c.b16 %v1315, %v1315
      %v1332 = vpack.c.b16 %v1316, %v1316
      %v1333 = vpack.c.b16 %v1317, %v1317
      %v1334 = vpack.c.b16 %v1318, %v1318
      %v1335 = vpack.c.b16 %v1319, %v1319
      %v1336 = vpack.c.b16 %v1320, %v1320
      %v1337 = vpack.c.b16 %v1321, %v1321
      %vm1354 = vcmask 257024
      %1355 = vst.msk [vmem:[%s541] sm:$0xf] %vm1354, %v1322
      %1356 = vst.msk [vmem:[%s541 + $0x4] sm:$0xf] %vm1354, %v1323
      %1357 = vst.msk [vmem:[%s541 + $0x8] sm:$0xf] %vm1354, %v1324
      %1358 = vst.msk [vmem:[%s541 + $0xc] sm:$0xf] %vm1354, %v1325
      %1359 = vst.msk [vmem:[%s541 + $0x10] sm:$0xf] %vm1354, %v1326
      %1360 = vst.msk [vmem:[%s541 + $0x14] sm:$0xf] %vm1354, %v1327
      %1361 = vst.msk [vmem:[%s541 + $0x18] sm:$0xf] %vm1354, %v1328
      %1362 = vst.msk [vmem:[%s541 + $0x1c] sm:$0xf] %vm1354, %v1329
      %1363 = vst.msk [vmem:[%s541 + $0x20] sm:$0xf] %vm1354, %v1330
      %1364 = vst.msk [vmem:[%s541 + $0x24] sm:$0xf] %vm1354, %v1331
      %1365 = vst.msk [vmem:[%s541 + $0x28] sm:$0xf] %vm1354, %v1332
      %1366 = vst.msk [vmem:[%s541 + $0x2c] sm:$0xf] %vm1354, %v1333
      %1367 = vst.msk [vmem:[%s541 + $0x30] sm:$0xf] %vm1354, %v1334
      %1368 = vst.msk [vmem:[%s541 + $0x34] sm:$0xf] %vm1354, %v1335
      %1369 = vst.msk [vmem:[%s541 + $0x38] sm:$0xf] %vm1354, %v1336
      %1370 = vst.msk [vmem:[%s541 + $0x3c] sm:$0xf] %vm1354, %v1337
      %v1371 = vlaneseq
      %v1372 = vshrl.u32 %v1371, 7
      %v1373 = vadd.s32 %v1372, 8
      %v1374 = vadd.s32 %v1372, 16
      %v1375 = vadd.s32 %v1372, 24
      %v1376 = vadd.s32 %v1372, 32
      %v1377 = vadd.s32 %v1372, 40
      %v1378 = vadd.s32 %v1372, 48
      %v1379 = vadd.s32 %v1372, 56
      %v1380 = vadd.s32 %v1372, 64
      %v1381 = vadd.s32 %v1372, 72
      %v1382 = vadd.s32 %v1372, 80
      %v1383 = vadd.s32 %v1372, 88
      %v1384 = vadd.s32 %v1372, 96
      %v1385 = vadd.s32 %v1372, 104
      %v1386 = vadd.s32 %v1372, 112
      %v1387 = vadd.s32 %v1372, 120
      %vm1388 = vcmp.lt.s32.totalorder %v1372, 0
      %v1389 = vsub.s32 0, %v1372
      %v1390 = vsel %vm1388, %v1389, %v1372
      %v1391 = vshrl.u32 %v1390, 4
      %v1392 = vand.u32 %v1390, 15
      %v1393 = vsub.s32 0, %v1392
      %v1394 = vsel %vm1388, %v1393, %v1392
      %vm1395 = vcmp.lt.s32.totalorder %v1373, 0
      %v1396 = vsub.s32 0, %v1373
      %v1397 = vsel %vm1395, %v1396, %v1373
      %v1398 = vshrl.u32 %v1397, 4
      %v1399 = vand.u32 %v1397, 15
      %v1400 = vsub.s32 0, %v1399
      %v1401 = vsel %vm1395, %v1400, %v1399
      %vm1402 = vcmp.lt.s32.totalorder %v1374, 0
      %v1403 = vsub.s32 0, %v1374
      %v1404 = vsel %vm1402, %v1403, %v1374
      %v1405 = vshrl.u32 %v1404, 4
      %v1406 = vand.u32 %v1404, 15
      %v1407 = vsub.s32 0, %v1406
      %v1408 = vsel %vm1402, %v1407, %v1406
      %vm1409 = vcmp.lt.s32.totalorder %v1375, 0
      %v1410 = vsub.s32 0, %v1375
      %v1411 = vsel %vm1409, %v1410, %v1375
      %v1412 = vshrl.u32 %v1411, 4
      %v1413 = vand.u32 %v1411, 15
      %v1414 = vsub.s32 0, %v1413
      %v1415 = vsel %vm1409, %v1414, %v1413
      %vm1416 = vcmp.lt.s32.totalorder %v1376, 0
      %v1417 = vsub.s32 0, %v1376
      %v1418 = vsel %vm1416, %v1417, %v1376
      %v1419 = vshrl.u32 %v1418, 4
      %v1420 = vand.u32 %v1418, 15
      %v1421 = vsub.s32 0, %v1420
      %v1422 = vsel %vm1416, %v1421, %v1420
      %vm1423 = vcmp.lt.s32.totalorder %v1377, 0
      %v1424 = vsub.s32 0, %v1377
      %v1425 = vsel %vm1423, %v1424, %v1377
      %v1426 = vshrl.u32 %v1425, 4
      %v1427 = vand.u32 %v1425, 15
      %v1428 = vsub.s32 0, %v1427
      %v1429 = vsel %vm1423, %v1428, %v1427
      %vm1430 = vcmp.lt.s32.totalorder %v1378, 0
      %v1431 = vsub.s32 0, %v1378
      %v1432 = vsel %vm1430, %v1431, %v1378
      %v1433 = vshrl.u32 %v1432, 4
      %v1434 = vand.u32 %v1432, 15
      %v1435 = vsub.s32 0, %v1434
      %v1436 = vsel %vm1430, %v1435, %v1434
      %vm1437 = vcmp.lt.s32.totalorder %v1379, 0
      %v1438 = vsub.s32 0, %v1379
      %v1439 = vsel %vm1437, %v1438, %v1379
      %v1440 = vshrl.u32 %v1439, 4
      %v1441 = vand.u32 %v1439, 15
      %v1442 = vsub.s32 0, %v1441
      %v1443 = vsel %vm1437, %v1442, %v1441
      %vm1444 = vcmp.lt.s32.totalorder %v1380, 0
      %v1445 = vsub.s32 0, %v1380
      %v1446 = vsel %vm1444, %v1445, %v1380
      %v1447 = vshrl.u32 %v1446, 4
      %v1448 = vand.u32 %v1446, 15
      %v1449 = vsub.s32 0, %v1448
      %v1450 = vsel %vm1444, %v1449, %v1448
      %vm1451 = vcmp.lt.s32.totalorder %v1381, 0
      %v1452 = vsub.s32 0, %v1381
      %v1453 = vsel %vm1451, %v1452, %v1381
      %v1454 = vshrl.u32 %v1453, 4
      %v1455 = vand.u32 %v1453, 15
      %v1456 = vsub.s32 0, %v1455
      %v1457 = vsel %vm1451, %v1456, %v1455
      %vm1458 = vcmp.lt.s32.totalorder %v1382, 0
      %v1459 = vsub.s32 0, %v1382
      %v1460 = vsel %vm1458, %v1459, %v1382
      %v1461 = vshrl.u32 %v1460, 4
      %v1462 = vand.u32 %v1460, 15
      %v1463 = vsub.s32 0, %v1462
      %v1464 = vsel %vm1458, %v1463, %v1462
      %vm1465 = vcmp.lt.s32.totalorder %v1383, 0
      %v1466 = vsub.s32 0, %v1383
      %v1467 = vsel %vm1465, %v1466, %v1383
      %v1468 = vshrl.u32 %v1467, 4
      %v1469 = vand.u32 %v1467, 15
      %v1470 = vsub.s32 0, %v1469
      %v1471 = vsel %vm1465, %v1470, %v1469
      %vm1472 = vcmp.lt.s32.totalorder %v1384, 0
      %v1473 = vsub.s32 0, %v1384
      %v1474 = vsel %vm1472, %v1473, %v1384
      %v1475 = vshrl.u32 %v1474, 4
      %v1476 = vand.u32 %v1474, 15
      %v1477 = vsub.s32 0, %v1476
      %v1478 = vsel %vm1472, %v1477, %v1476
      %vm1479 = vcmp.lt.s32.totalorder %v1385, 0
      %v1480 = vsub.s32 0, %v1385
      %v1481 = vsel %vm1479, %v1480, %v1385
      %v1482 = vshrl.u32 %v1481, 4
      %v1483 = vand.u32 %v1481, 15
      %v1484 = vsub.s32 0, %v1483
      %v1485 = vsel %vm1479, %v1484, %v1483
      %vm1486 = vcmp.lt.s32.totalorder %v1386, 0
      %v1487 = vsub.s32 0, %v1386
      %v1488 = vsel %vm1486, %v1487, %v1386
      %v1489 = vshrl.u32 %v1488, 4
      %v1490 = vand.u32 %v1488, 15
      %v1491 = vsub.s32 0, %v1490
      %v1492 = vsel %vm1486, %v1491, %v1490
      %vm1493 = vcmp.lt.s32.totalorder %v1387, 0
      %v1494 = vsub.s32 0, %v1387
      %v1495 = vsel %vm1493, %v1494, %v1387
      %v1496 = vshrl.u32 %v1495, 4
      %v1497 = vand.u32 %v1495, 15
      %v1498 = vsub.s32 0, %v1497
      %v1499 = vsel %vm1493, %v1498, %v1497
      %vm1500 = vcmp.ne.s32.totalorder %v1394, 0
      %vm1501 = vcmp.ne.s32.totalorder %v1401, 0
      %vm1502 = vcmp.ne.s32.totalorder %v1408, 0
      %vm1503 = vcmp.ne.s32.totalorder %v1415, 0
      %vm1504 = vcmp.ne.s32.totalorder %v1422, 0
      %vm1505 = vcmp.ne.s32.totalorder %v1429, 0
      %vm1506 = vcmp.ne.s32.totalorder %v1436, 0
      %vm1507 = vcmp.ne.s32.totalorder %v1443, 0
      %vm1508 = vcmp.ne.s32.totalorder %v1450, 0
      %vm1509 = vcmp.ne.s32.totalorder %v1457, 0
      %vm1510 = vcmp.ne.s32.totalorder %v1464, 0
      %vm1511 = vcmp.ne.s32.totalorder %v1471, 0
      %vm1512 = vcmp.ne.s32.totalorder %v1478, 0
      %vm1513 = vcmp.ne.s32.totalorder %v1485, 0
      %vm1514 = vcmp.ne.s32.totalorder %v1492, 0
      %vm1515 = vcmp.ne.s32.totalorder %v1499, 0
      %vm1516 = vcmp.lt.s32.totalorder %v1394, 0
      %vm1517 = vcmp.lt.s32.totalorder %v1401, 0
      %vm1518 = vcmp.lt.s32.totalorder %v1408, 0
      %vm1519 = vcmp.lt.s32.totalorder %v1415, 0
      %vm1520 = vcmp.lt.s32.totalorder %v1422, 0
      %vm1521 = vcmp.lt.s32.totalorder %v1429, 0
      %vm1522 = vcmp.lt.s32.totalorder %v1436, 0
      %vm1523 = vcmp.lt.s32.totalorder %v1443, 0
      %vm1524 = vcmp.lt.s32.totalorder %v1450, 0
      %vm1525 = vcmp.lt.s32.totalorder %v1457, 0
      %vm1526 = vcmp.lt.s32.totalorder %v1464, 0
      %vm1527 = vcmp.lt.s32.totalorder %v1471, 0
      %vm1528 = vcmp.lt.s32.totalorder %v1478, 0
      %vm1529 = vcmp.lt.s32.totalorder %v1485, 0
      %vm1530 = vcmp.lt.s32.totalorder %v1492, 0
      %vm1531 = vcmp.lt.s32.totalorder %v1499, 0
      %vm1532 = vmand %vm1516, %vm1500
      %vm1533 = vmand %vm1517, %vm1501
      %vm1534 = vmand %vm1518, %vm1502
      %vm1535 = vmand %vm1519, %vm1503
      %vm1536 = vmand %vm1520, %vm1504
      %vm1537 = vmand %vm1521, %vm1505
      %vm1538 = vmand %vm1522, %vm1506
      %vm1539 = vmand %vm1523, %vm1507
      %vm1540 = vmand %vm1524, %vm1508
      %vm1541 = vmand %vm1525, %vm1509
      %vm1542 = vmand %vm1526, %vm1510
      %vm1543 = vmand %vm1527, %vm1511
      %vm1544 = vmand %vm1528, %vm1512
      %vm1545 = vmand %vm1529, %vm1513
      %vm1546 = vmand %vm1530, %vm1514
      %vm1547 = vmand %vm1531, %vm1515
      %v1548 = vadd.s32 %v1394, 16
      %v1549 = vadd.s32 %v1401, 16
      %v1550 = vadd.s32 %v1408, 16
      %v1551 = vadd.s32 %v1415, 16
      %v1552 = vadd.s32 %v1422, 16
      %v1553 = vadd.s32 %v1429, 16
      %v1554 = vadd.s32 %v1436, 16
      %v1555 = vadd.s32 %v1443, 16
      %v1556 = vadd.s32 %v1450, 16
      %v1557 = vadd.s32 %v1457, 16
      %v1558 = vadd.s32 %v1464, 16
      %v1559 = vadd.s32 %v1471, 16
      %v1560 = vadd.s32 %v1478, 16
      %v1561 = vadd.s32 %v1485, 16
      %v1562 = vadd.s32 %v1492, 16
      %v1563 = vadd.s32 %v1499, 16
      %v1564 = vsel %vm1532, %v1548, %v1394
      %v1565 = vsel %vm1533, %v1549, %v1401
      %v1566 = vsel %vm1534, %v1550, %v1408
      %v1567 = vsel %vm1535, %v1551, %v1415
      %v1568 = vsel %vm1536, %v1552, %v1422
      %v1569 = vsel %vm1537, %v1553, %v1429
      %v1570 = vsel %vm1538, %v1554, %v1436
      %v1571 = vsel %vm1539, %v1555, %v1443
      %v1572 = vsel %vm1540, %v1556, %v1450
      %v1573 = vsel %vm1541, %v1557, %v1457
      %v1574 = vsel %vm1542, %v1558, %v1464
      %v1575 = vsel %vm1543, %v1559, %v1471
      %v1576 = vsel %vm1544, %v1560, %v1478
      %v1577 = vsel %vm1545, %v1561, %v1485
      %v1578 = vsel %vm1546, %v1562, %v1492
      %v1579 = vsel %vm1547, %v1563, %v1499
      %vm1580 = vcmp.ge.s32.totalorder %v1564, 1
      %vm1581 = vcmp.ge.s32.totalorder %v1565, 1
      %vm1582 = vcmp.ge.s32.totalorder %v1566, 1
      %vm1583 = vcmp.ge.s32.totalorder %v1567, 1
      %vm1584 = vcmp.ge.s32.totalorder %v1568, 1
      %vm1585 = vcmp.ge.s32.totalorder %v1569, 1
      %vm1586 = vcmp.ge.s32.totalorder %v1570, 1
      %vm1587 = vcmp.ge.s32.totalorder %v1571, 1
      %vm1588 = vcmp.ge.s32.totalorder %v1572, 1
      %vm1589 = vcmp.ge.s32.totalorder %v1573, 1
      %vm1590 = vcmp.ge.s32.totalorder %v1574, 1
      %vm1591 = vcmp.ge.s32.totalorder %v1575, 1
      %vm1592 = vcmp.ge.s32.totalorder %v1576, 1
      %vm1593 = vcmp.ge.s32.totalorder %v1577, 1
      %vm1594 = vcmp.ge.s32.totalorder %v1578, 1
      %vm1595 = vcmp.ge.s32.totalorder %v1579, 1
      %vm1596 = vcmp.le.s32.totalorder %v1564, 14
      %vm1597 = vcmp.le.s32.totalorder %v1565, 14
      %vm1598 = vcmp.le.s32.totalorder %v1566, 14
      %vm1599 = vcmp.le.s32.totalorder %v1567, 14
      %vm1600 = vcmp.le.s32.totalorder %v1568, 14
      %vm1601 = vcmp.le.s32.totalorder %v1569, 14
      %vm1602 = vcmp.le.s32.totalorder %v1570, 14
      %vm1603 = vcmp.le.s32.totalorder %v1571, 14
      %vm1604 = vcmp.le.s32.totalorder %v1572, 14
      %vm1605 = vcmp.le.s32.totalorder %v1573, 14
      %vm1606 = vcmp.le.s32.totalorder %v1574, 14
      %vm1607 = vcmp.le.s32.totalorder %v1575, 14
      %vm1608 = vcmp.le.s32.totalorder %v1576, 14
      %vm1609 = vcmp.le.s32.totalorder %v1577, 14
      %vm1610 = vcmp.le.s32.totalorder %v1578, 14
      %vm1611 = vcmp.le.s32.totalorder %v1579, 14
      %v1612 = vsel %vm1580, 1, 0
      %v1613 = vsel %vm1581, 1, 0
      %v1614 = vsel %vm1582, 1, 0
      %v1615 = vsel %vm1583, 1, 0
      %v1616 = vsel %vm1584, 1, 0
      %v1617 = vsel %vm1585, 1, 0
      %v1618 = vsel %vm1586, 1, 0
      %v1619 = vsel %vm1587, 1, 0
      %v1620 = vsel %vm1588, 1, 0
      %v1621 = vsel %vm1589, 1, 0
      %v1622 = vsel %vm1590, 1, 0
      %v1623 = vsel %vm1591, 1, 0
      %v1624 = vsel %vm1592, 1, 0
      %v1625 = vsel %vm1593, 1, 0
      %v1626 = vsel %vm1594, 1, 0
      %v1627 = vsel %vm1595, 1, 0
      %vm1628 = vcmp.eq.s32.totalorder %v1612, 1
      %vm1629 = vcmp.eq.s32.totalorder %v1613, 1
      %vm1630 = vcmp.eq.s32.totalorder %v1614, 1
      %vm1631 = vcmp.eq.s32.totalorder %v1615, 1
      %vm1632 = vcmp.eq.s32.totalorder %v1616, 1
      %vm1633 = vcmp.eq.s32.totalorder %v1617, 1
      %vm1634 = vcmp.eq.s32.totalorder %v1618, 1
      %vm1635 = vcmp.eq.s32.totalorder %v1619, 1
      %vm1636 = vcmp.eq.s32.totalorder %v1620, 1
      %vm1637 = vcmp.eq.s32.totalorder %v1621, 1
      %vm1638 = vcmp.eq.s32.totalorder %v1622, 1
      %vm1639 = vcmp.eq.s32.totalorder %v1623, 1
      %vm1640 = vcmp.eq.s32.totalorder %v1624, 1
      %vm1641 = vcmp.eq.s32.totalorder %v1625, 1
      %vm1642 = vcmp.eq.s32.totalorder %v1626, 1
      %vm1643 = vcmp.eq.s32.totalorder %v1627, 1
      %vm1644 = vmpackc.low %vm1628, %vm1628
      %vm1645 = vmpackc.low %vm1629, %vm1629
      %vm1646 = vmpackc.low %vm1630, %vm1630
      %vm1647 = vmpackc.low %vm1631, %vm1631
      %vm1648 = vmpackc.low %vm1632, %vm1632
      %vm1649 = vmpackc.low %vm1633, %vm1633
      %vm1650 = vmpackc.low %vm1634, %vm1634
      %vm1651 = vmpackc.low %vm1635, %vm1635
      %vm1652 = vmpackc.low %vm1636, %vm1636
      %vm1653 = vmpackc.low %vm1637, %vm1637
      %vm1654 = vmpackc.low %vm1638, %vm1638
      %vm1655 = vmpackc.low %vm1639, %vm1639
      %vm1656 = vmpackc.low %vm1640, %vm1640
      %vm1657 = vmpackc.low %vm1641, %vm1641
      %vm1658 = vmpackc.low %vm1642, %vm1642
      %vm1659 = vmpackc.low %vm1643, %vm1643
      %v1660 = vsel %vm1644, %v558, 0
      %v1661 = vsel %vm1645, %v559, 0
      %v1662 = vsel %vm1646, %v560, 0
      %v1663 = vsel %vm1647, %v561, 0
      %v1664 = vsel %vm1648, %v562, 0
      %v1665 = vsel %vm1649, %v563, 0
      %v1666 = vsel %vm1650, %v564, 0
      %v1667 = vsel %vm1651, %v565, 0
      %v1668 = vsel %vm1652, %v566, 0
      %v1669 = vsel %vm1653, %v567, 0
      %v1670 = vsel %vm1654, %v568, 0
      %v1671 = vsel %vm1655, %v569, 0
      %v1672 = vsel %vm1656, %v570, 0
      %v1673 = vsel %vm1657, %v571, 0
      %v1674 = vsel %vm1658, %v572, 0
      %v1675 = vsel %vm1659, %v573, 0
      %v1676 = vld [vmem:[%s3] sm:$0xf]
      %v1677 = vld [vmem:[%s3 + $0x4] sm:$0xf]
      %v1678 = vld [vmem:[%s3 + $0x8] sm:$0xf]
      %v1679 = vld [vmem:[%s3 + $0xc] sm:$0xf]
      %v1680 = vld [vmem:[%s3 + $0x10] sm:$0xf]
      %v1681 = vld [vmem:[%s3 + $0x14] sm:$0xf]
      %v1682 = vld [vmem:[%s3 + $0x18] sm:$0xf]
      %v1683 = vld [vmem:[%s3 + $0x1c] sm:$0xf]
      %v1684 = vld [vmem:[%s3 + $0x20] sm:$0xf]
      %v1685 = vld [vmem:[%s3 + $0x24] sm:$0xf]
      %v1686 = vld [vmem:[%s3 + $0x28] sm:$0xf]
      %v1687 = vld [vmem:[%s3 + $0x2c] sm:$0xf]
      %v1688 = vld [vmem:[%s3 + $0x30] sm:$0xf]
      %v1689 = vld [vmem:[%s3 + $0x34] sm:$0xf]
      %v1690 = vld [vmem:[%s3 + $0x38] sm:$0xf]
      %v1691 = vld [vmem:[%s3 + $0x3c] sm:$0xf]
      %s1692 = scalar_lea.vmem %s3, 64
      %v1693 = vld [vmem:[%s1692] sm:$0xf]
      %v1694 = vld [vmem:[%s1692 + $0x4] sm:$0xf]
      %v1695 = vld [vmem:[%s1692 + $0x8] sm:$0xf]
      %v1696 = vld [vmem:[%s1692 + $0xc] sm:$0xf]
      %v1697 = vld [vmem:[%s1692 + $0x10] sm:$0xf]
      %v1698 = vld [vmem:[%s1692 + $0x14] sm:$0xf]
      %v1699 = vld [vmem:[%s1692 + $0x18] sm:$0xf]
      %v1700 = vld [vmem:[%s1692 + $0x1c] sm:$0xf]
      %v1701 = vld [vmem:[%s1692 + $0x20] sm:$0xf]
      %v1702 = vld [vmem:[%s1692 + $0x24] sm:$0xf]
      %v1703 = vld [vmem:[%s1692 + $0x28] sm:$0xf]
      %v1704 = vld [vmem:[%s1692 + $0x2c] sm:$0xf]
      %v1705 = vld [vmem:[%s1692 + $0x30] sm:$0xf]
      %v1706 = vld [vmem:[%s1692 + $0x34] sm:$0xf]
      %v1707 = vld [vmem:[%s1692 + $0x38] sm:$0xf]
      %v1708 = vld [vmem:[%s1692 + $0x3c] sm:$0xf]
      %v1711 = vunpack.c.l.b16 %v558
      %v1712 = vunpack.c.l.b16 %v559
      %v1713 = vpack.c.b16 %v1712, %v1711
      %v1714 = vpack.c.b16 %v972, %v972
      %v1716 = vshrl.u32 %v1713, 16
      %v1718 = vshll.u32 %v1713, 16
      %v1720 = vrot.slane %v1718, 1
      %v1721 = vor.u32 %v1716, %v1720
      %v1722 = vsel %vm984, %v1721, %v990
      %v1724 = vshll.u32 %v1714, 16
      %v1726 = vrot.slane %v1724, 1
      %v1727 = vsel %vm984, %v1039, %v1726
      %v1746 = vunpack.c.l.b16 %v1693
      %v1747 = vunpack.c.l.b16 %v1694
      %v1748 = vunpack.c.l.b16 %v1695
      %v1749 = vunpack.c.l.b16 %v1696
      %v1750 = vunpack.c.l.b16 %v1697
      %v1751 = vunpack.c.l.b16 %v1698
      %v1752 = vunpack.c.l.b16 %v1699
      %v1753 = vunpack.c.l.b16 %v1700
      %v1754 = vunpack.c.l.b16 %v1701
      %v1755 = vunpack.c.l.b16 %v1702
      %v1756 = vunpack.c.l.b16 %v1703
      %v1757 = vunpack.c.l.b16 %v1704
      %v1758 = vunpack.c.l.b16 %v1705
      %v1759 = vunpack.c.l.b16 %v1706
      %v1760 = vunpack.c.l.b16 %v1707
      %v1761 = vunpack.c.l.b16 %v1708
      %v1762 = vpack.c.b16 %v1747, %v1746
      %v1763 = vpack.c.b16 %v1749, %v1748
      %v1764 = vpack.c.b16 %v1751, %v1750
      %v1765 = vpack.c.b16 %v1753, %v1752
      %v1766 = vpack.c.b16 %v1755, %v1754
      %v1767 = vpack.c.b16 %v1757, %v1756
      %v1768 = vpack.c.b16 %v1759, %v1758
      %v1769 = vpack.c.b16 %v1761, %v1760
      %1778 = vmatprep.subr.bf16.mxu0 0
      %1779 = vmatpush1.bf16.msra.mxu0 %v1769
      %1780 = vmatprep.subr.bf16.mxu0 0
      %1781 = vmatpush1.bf16.msra.mxu0 %v1768
      %1782 = vmatprep.subr.bf16.mxu0 0
      %1783 = vmatpush1.bf16.msra.mxu0 %v1767
      %1784 = vmatprep.subr.bf16.mxu0 0
      %1785 = vmatpush1.bf16.msra.mxu0 %v1766
      %1786 = vmatprep.subr.bf16.mxu0 0
      %1787 = vmatpush1.bf16.msra.mxu0 %v1765
      %1788 = vmatprep.subr.bf16.mxu0 0
      %1789 = vmatpush1.bf16.msra.mxu0 %v1764
      %1790 = vmatprep.subr.bf16.mxu0 0
      %1791 = vmatpush1.bf16.msra.mxu0 %v1763
      %1792 = vmatprep.subr.bf16.mxu0 0
      %1793 = vmatpush1.bf16.msra.mxu0 %v1762
      %1794 = vmatprep.subr.bf16.mxu0 0
      %1795 = vmatpush2.bf16.msra.mxu0 0
      %1796 = vmatprep.subr.bf16.mxu0 0
      %1797 = vmatpush2.bf16.msra.mxu0 0
      %1798 = vmatprep.subr.bf16.mxu0 0
      %1799 = vmatpush2.bf16.msra.mxu0 0
      %1800 = vmatprep.subr.bf16.mxu0 0
      %1801 = vmatpush2.bf16.msra.mxu0 0
      %1802 = vmatprep.subr.bf16.mxu0 0
      %1803 = vmatpush2.bf16.msra.mxu0 0
      %1804 = vmatprep.subr.bf16.mxu0 0
      %1805 = vmatpush2.bf16.msra.mxu0 0
      %1806 = vmatprep.subr.bf16.mxu0 0
      %1807 = vmatpush2.bf16.msra.mxu0 0
      %1808 = vmatprep.subr.bf16.mxu0 0
      %1809 = vmatpush2.bf16.msra.mxu0 0
      %1810 = vmatprep.mubr.bf16.mxu0 0
      %1811 = vmatmul.mubr.bf16.gmra.mxu0 %v1722
      %v1812 = vpop.f32.mrf.mxu0
      %v1813 = vadd.f32 0.0, %v1812
      %v1814 = vpop.f32.mrf.mxu0
      %v1815 = vpop.f32.mrf.mxu0
      %v1816 = vadd.f32 0.0, %v1815
      %v1817 = vpop.f32.mrf.mxu0
      %1818 = vmatprep.mubr.bf16.mxu0 0
      %1819 = vmatmul.mubr.bf16.gmra.mxu0 %v996
      %v1820 = vpop.f32.mrf.mxu0
      %v1821 = vadd.f32 0.0, %v1820
      %v1822 = vpop.f32.mrf.mxu0
      %v1823 = vpop.f32.mrf.mxu0
      %v1824 = vadd.f32 0.0, %v1823
      %v1825 = vpop.f32.mrf.mxu0
      %1826 = vmatprep.mubr.bf16.mxu0 0
      %1827 = vmatmul.mubr.bf16.gmra.mxu0 %v1004
      %v1828 = vpop.f32.mrf.mxu0
      %v1829 = vadd.f32 0.0, %v1828
      %v1830 = vpop.f32.mrf.mxu0
      %v1831 = vpop.f32.mrf.mxu0
      %v1832 = vadd.f32 0.0, %v1831
      %v1833 = vpop.f32.mrf.mxu0
      %1834 = vmatprep.mubr.bf16.mxu0 0
      %1835 = vmatmul.mubr.bf16.gmra.mxu0 %v1012
      %v1836 = vpop.f32.mrf.mxu0
      %v1837 = vadd.f32 0.0, %v1836
      %v1838 = vpop.f32.mrf.mxu0
      %v1839 = vpop.f32.mrf.mxu0
      %v1840 = vadd.f32 0.0, %v1839
      %v1841 = vpop.f32.mrf.mxu0
      %1842 = vmatprep.mubr.bf16.mxu0 0
      %1843 = vmatmul.mubr.bf16.gmra.mxu0 %v1020
      %v1844 = vpop.f32.mrf.mxu0
      %v1845 = vadd.f32 0.0, %v1844
      %v1846 = vpop.f32.mrf.mxu0
      %v1847 = vpop.f32.mrf.mxu0
      %v1848 = vadd.f32 0.0, %v1847
      %v1849 = vpop.f32.mrf.mxu0
      %1850 = vmatprep.mubr.bf16.mxu0 0
      %1851 = vmatmul.mubr.bf16.gmra.mxu0 %v1028
      %v1852 = vpop.f32.mrf.mxu0
      %v1853 = vadd.f32 0.0, %v1852
      %v1854 = vpop.f32.mrf.mxu0
      %v1855 = vpop.f32.mrf.mxu0
      %v1856 = vadd.f32 0.0, %v1855
      %v1857 = vpop.f32.mrf.mxu0
      %1858 = vmatprep.mubr.bf16.mxu0 0
      %1859 = vmatmul.mubr.bf16.gmra.mxu0 %v1036
      %v1860 = vpop.f32.mrf.mxu0
      %v1861 = vadd.f32 0.0, %v1860
      %v1862 = vpop.f32.mrf.mxu0
      %v1863 = vpop.f32.mrf.mxu0
      %v1864 = vadd.f32 0.0, %v1863
      %v1865 = vpop.f32.mrf.mxu0
      %1866 = vmatprep.mubr.bf16.mxu0 0
      %1867 = vmatmul.mubr.bf16.gmra.mxu0 %v1727
      %v1868 = vpop.f32.mrf.mxu0
      %v1869 = vadd.f32 0.0, %v1868
      %v1870 = vpop.f32.mrf.mxu0
      %v1871 = vpop.f32.mrf.mxu0
      %v1872 = vadd.f32 0.0, %v1871
      %v1873 = vpop.f32.mrf.mxu0
      %1874 = vdwg.mxu0
      %v1891 = vunpack.c.l.b16 %v1660
      %v1892 = vunpack.c.l.b16 %v1661
      %v1893 = vunpack.c.l.b16 %v1662
      %v1894 = vunpack.c.l.b16 %v1663
      %v1895 = vunpack.c.l.b16 %v1664
      %v1896 = vunpack.c.l.b16 %v1665
      %v1897 = vunpack.c.l.b16 %v1666
      %v1898 = vunpack.c.l.b16 %v1667
      %v1899 = vunpack.c.l.b16 %v1668
      %v1900 = vunpack.c.l.b16 %v1669
      %v1901 = vunpack.c.l.b16 %v1670
      %v1902 = vunpack.c.l.b16 %v1671
      %v1903 = vunpack.c.l.b16 %v1672
      %v1904 = vunpack.c.l.b16 %v1673
      %v1905 = vunpack.c.l.b16 %v1674
      %v1906 = vunpack.c.l.b16 %v1675
      %v1907 = vpack.c.b16 %v1892, %v1891
      %v1908 = vpack.c.b16 %v1894, %v1893
      %v1909 = vpack.c.b16 %v1896, %v1895
      %v1910 = vpack.c.b16 %v1898, %v1897
      %v1911 = vpack.c.b16 %v1900, %v1899
      %v1912 = vpack.c.b16 %v1902, %v1901
      %v1913 = vpack.c.b16 %v1904, %v1903
      %v1914 = vpack.c.b16 %v1906, %v1905
      %v1939 = vunpack.c.l.b16 %v1676
      %v1940 = vunpack.c.l.b16 %v1677
      %v1941 = vunpack.c.l.b16 %v1678
      %v1942 = vunpack.c.l.b16 %v1679
      %v1943 = vunpack.c.l.b16 %v1680
      %v1944 = vunpack.c.l.b16 %v1681
      %v1945 = vunpack.c.l.b16 %v1682
      %v1946 = vunpack.c.l.b16 %v1683
      %v1947 = vunpack.c.l.b16 %v1684
      %v1948 = vunpack.c.l.b16 %v1685
      %v1949 = vunpack.c.l.b16 %v1686
      %v1950 = vunpack.c.l.b16 %v1687
      %v1951 = vunpack.c.l.b16 %v1688
      %v1952 = vunpack.c.l.b16 %v1689
      %v1953 = vunpack.c.l.b16 %v1690
      %v1954 = vunpack.c.l.b16 %v1691
      %v1955 = vpack.c.b16 %v1940, %v1939
      %v1956 = vpack.c.b16 %v1942, %v1941
      %v1957 = vpack.c.b16 %v1944, %v1943
      %v1958 = vpack.c.b16 %v1946, %v1945
      %v1959 = vpack.c.b16 %v1948, %v1947
      %v1960 = vpack.c.b16 %v1950, %v1949
      %v1961 = vpack.c.b16 %v1952, %v1951
      %v1962 = vpack.c.b16 %v1954, %v1953
      %1971 = vmatprep.subr.bf16.mxu0 0
      %1972 = vmatpush1.bf16.msra.mxu0 %v1962
      %1973 = vmatprep.subr.bf16.mxu0 0
      %1974 = vmatpush1.bf16.msra.mxu0 %v1961
      %1975 = vmatprep.subr.bf16.mxu0 0
      %1976 = vmatpush1.bf16.msra.mxu0 %v1960
      %1977 = vmatprep.subr.bf16.mxu0 0
      %1978 = vmatpush1.bf16.msra.mxu0 %v1959
      %1979 = vmatprep.subr.bf16.mxu0 0
      %1980 = vmatpush1.bf16.msra.mxu0 %v1958
      %1981 = vmatprep.subr.bf16.mxu0 0
      %1982 = vmatpush1.bf16.msra.mxu0 %v1957
      %1983 = vmatprep.subr.bf16.mxu0 0
      %1984 = vmatpush1.bf16.msra.mxu0 %v1956
      %1985 = vmatprep.subr.bf16.mxu0 0
      %1986 = vmatpush1.bf16.msra.mxu0 %v1955
      %1987 = vmatprep.subr.bf16.mxu0 0
      %1988 = vmatpush2.bf16.msra.mxu0 0
      %1989 = vmatprep.subr.bf16.mxu0 0
      %1990 = vmatpush2.bf16.msra.mxu0 0
      %1991 = vmatprep.subr.bf16.mxu0 0
      %1992 = vmatpush2.bf16.msra.mxu0 0
      %1993 = vmatprep.subr.bf16.mxu0 0
      %1994 = vmatpush2.bf16.msra.mxu0 0
      %1995 = vmatprep.subr.bf16.mxu0 0
      %1996 = vmatpush2.bf16.msra.mxu0 0
      %1997 = vmatprep.subr.bf16.mxu0 0
      %1998 = vmatpush2.bf16.msra.mxu0 0
      %1999 = vmatprep.subr.bf16.mxu0 0
      %2000 = vmatpush2.bf16.msra.mxu0 0
      %2001 = vmatprep.subr.bf16.mxu0 0
      %2002 = vmatpush2.bf16.msra.mxu0 0
      %2003 = vmatprep.mubr.bf16.mxu0 0
      %2004 = vmatmul.mubr.bf16.gmra.mxu0 %v1907
      %v2005 = vpop.f32.mrf.mxu0
      %v2006 = vadd.f32 %v1813, %v2005
      %v2007 = vpop.f32.mrf.mxu0
      %v2008 = vpop.f32.mrf.mxu0
      %v2009 = vadd.f32 %v1816, %v2008
      %v2010 = vpop.f32.mrf.mxu0
      %2011 = vmatprep.mubr.bf16.mxu0 0
      %2012 = vmatmul.mubr.bf16.gmra.mxu0 %v1908
      %v2013 = vpop.f32.mrf.mxu0
      %v2014 = vadd.f32 %v1821, %v2013
      %v2015 = vpop.f32.mrf.mxu0
      %v2016 = vpop.f32.mrf.mxu0
      %v2017 = vadd.f32 %v1824, %v2016
      %v2018 = vpop.f32.mrf.mxu0
      %2019 = vmatprep.mubr.bf16.mxu0 0
      %2020 = vmatmul.mubr.bf16.gmra.mxu0 %v1909
      %v2021 = vpop.f32.mrf.mxu0
      %v2022 = vadd.f32 %v1829, %v2021
      %v2023 = vpop.f32.mrf.mxu0
      %v2024 = vpop.f32.mrf.mxu0
      %v2025 = vadd.f32 %v1832, %v2024
      %v2026 = vpop.f32.mrf.mxu0
      %2027 = vmatprep.mubr.bf16.mxu0 0
      %2028 = vmatmul.mubr.bf16.gmra.mxu0 %v1910
      %v2029 = vpop.f32.mrf.mxu0
      %v2030 = vadd.f32 %v1837, %v2029
      %v2031 = vpop.f32.mrf.mxu0
      %v2032 = vpop.f32.mrf.mxu0
      %v2033 = vadd.f32 %v1840, %v2032
      %v2034 = vpop.f32.mrf.mxu0
      %2035 = vmatprep.mubr.bf16.mxu0 0
      %2036 = vmatmul.mubr.bf16.gmra.mxu0 %v1911
      %v2037 = vpop.f32.mrf.mxu0
      %v2038 = vadd.f32 %v1845, %v2037
      %v2039 = vpop.f32.mrf.mxu0
      %v2040 = vpop.f32.mrf.mxu0
      %v2041 = vadd.f32 %v1848, %v2040
      %v2042 = vpop.f32.mrf.mxu0
      %2043 = vmatprep.mubr.bf16.mxu0 0
      %2044 = vmatmul.mubr.bf16.gmra.mxu0 %v1912
      %v2045 = vpop.f32.mrf.mxu0
      %v2046 = vadd.f32 %v1853, %v2045
      %v2047 = vpop.f32.mrf.mxu0
      %v2048 = vpop.f32.mrf.mxu0
      %v2049 = vadd.f32 %v1856, %v2048
      %v2050 = vpop.f32.mrf.mxu0
      %2051 = vmatprep.mubr.bf16.mxu0 0
      %2052 = vmatmul.mubr.bf16.gmra.mxu0 %v1913
      %v2053 = vpop.f32.mrf.mxu0
      %v2054 = vadd.f32 %v1861, %v2053
      %v2055 = vpop.f32.mrf.mxu0
      %v2056 = vpop.f32.mrf.mxu0
      %v2057 = vadd.f32 %v1864, %v2056
      %v2058 = vpop.f32.mrf.mxu0
      %2059 = vmatprep.mubr.bf16.mxu0 0
      %2060 = vmatmul.mubr.bf16.gmra.mxu0 %v1914
      %v2061 = vpop.f32.mrf.mxu0
      %v2062 = vadd.f32 %v1869, %v2061
      %v2063 = vpop.f32.mrf.mxu0
      %v2064 = vpop.f32.mrf.mxu0
      %v2065 = vadd.f32 %v1872, %v2064
      %v2066 = vpop.f32.mrf.mxu0
      %2067 = vdwg.mxu0
      %v2068 = vsel %vm1596, 1, 0
      %v2069 = vsel %vm1597, 1, 0
      %v2070 = vsel %vm1598, 1, 0
      %v2071 = vsel %vm1599, 1, 0
      %v2072 = vsel %vm1600, 1, 0
      %v2073 = vsel %vm1601, 1, 0
      %v2074 = vsel %vm1602, 1, 0
      %v2075 = vsel %vm1603, 1, 0
      %v2076 = vsel %vm1604, 1, 0
      %v2077 = vsel %vm1605, 1, 0
      %v2078 = vsel %vm1606, 1, 0
      %v2079 = vsel %vm1607, 1, 0
      %v2080 = vsel %vm1608, 1, 0
      %v2081 = vsel %vm1609, 1, 0
      %v2082 = vsel %vm1610, 1, 0
      %v2083 = vsel %vm1611, 1, 0
      %vm2084 = vcmp.eq.s32.totalorder %v2068, 1
      %vm2085 = vcmp.eq.s32.totalorder %v2069, 1
      %vm2086 = vcmp.eq.s32.totalorder %v2070, 1
      %vm2087 = vcmp.eq.s32.totalorder %v2071, 1
      %vm2088 = vcmp.eq.s32.totalorder %v2072, 1
      %vm2089 = vcmp.eq.s32.totalorder %v2073, 1
      %vm2090 = vcmp.eq.s32.totalorder %v2074, 1
      %vm2091 = vcmp.eq.s32.totalorder %v2075, 1
      %vm2092 = vcmp.eq.s32.totalorder %v2076, 1
      %vm2093 = vcmp.eq.s32.totalorder %v2077, 1
      %vm2094 = vcmp.eq.s32.totalorder %v2078, 1
      %vm2095 = vcmp.eq.s32.totalorder %v2079, 1
      %vm2096 = vcmp.eq.s32.totalorder %v2080, 1
      %vm2097 = vcmp.eq.s32.totalorder %v2081, 1
      %vm2098 = vcmp.eq.s32.totalorder %v2082, 1
      %vm2099 = vcmp.eq.s32.totalorder %v2083, 1
      %vm2100 = vmpackc.low %vm2084, %vm2084
      %vm2101 = vmpackc.low %vm2085, %vm2085
      %vm2102 = vmpackc.low %vm2086, %vm2086
      %vm2103 = vmpackc.low %vm2087, %vm2087
      %vm2104 = vmpackc.low %vm2088, %vm2088
      %vm2105 = vmpackc.low %vm2089, %vm2089
      %vm2106 = vmpackc.low %vm2090, %vm2090
      %vm2107 = vmpackc.low %vm2091, %vm2091
      %vm2108 = vmpackc.low %vm2092, %vm2092
      %vm2109 = vmpackc.low %vm2093, %vm2093
      %vm2110 = vmpackc.low %vm2094, %vm2094
      %vm2111 = vmpackc.low %vm2095, %vm2095
      %vm2112 = vmpackc.low %vm2096, %vm2096
      %vm2113 = vmpackc.low %vm2097, %vm2097
      %vm2114 = vmpackc.low %vm2098, %vm2098
      %vm2115 = vmpackc.low %vm2099, %vm2099
      %v2116 = vsel %vm2100, 65537, 0
      %v2117 = vsel %vm2101, 65537, 0
      %v2118 = vsel %vm2102, 65537, 0
      %v2119 = vsel %vm2103, 65537, 0
      %v2120 = vsel %vm2104, 65537, 0
      %v2121 = vsel %vm2105, 65537, 0
      %v2122 = vsel %vm2106, 65537, 0
      %v2123 = vsel %vm2107, 65537, 0
      %v2124 = vsel %vm2108, 65537, 0
      %v2125 = vsel %vm2109, 65537, 0
      %v2126 = vsel %vm2110, 65537, 0
      %v2127 = vsel %vm2111, 65537, 0
      %v2128 = vsel %vm2112, 65537, 0
      %v2129 = vsel %vm2113, 65537, 0
      %v2130 = vsel %vm2114, 65537, 0
      %v2131 = vsel %vm2115, 65537, 0
      %vm2132 = vcmask 1040384
      %vm2133 = vcmask 1044484
      %vm2134 = vmor %vm2132, %vm2133
      %v2135 = vrot.slane %v2116, 7
      %v2136 = vrot.slane %v2135, 4
      %v2137 = vrot.slane %v2117, 7
      %v2138 = vsel %vm2134, %v2136, %v2137
      %v2139 = vrot.slane %v2137, 4
      %v2140 = vrot.slane %v2118, 7
      %v2141 = vsel %vm2134, %v2139, %v2140
      %v2142 = vrot.slane %v2140, 4
      %v2143 = vrot.slane %v2119, 7
      %v2144 = vsel %vm2134, %v2142, %v2143
      %v2145 = vrot.slane %v2143, 4
      %v2146 = vrot.slane %v2120, 7
      %v2147 = vsel %vm2134, %v2145, %v2146
      %v2148 = vrot.slane %v2146, 4
      %v2149 = vrot.slane %v2121, 7
      %v2150 = vsel %vm2134, %v2148, %v2149
      %v2151 = vrot.slane %v2149, 4
      %v2152 = vrot.slane %v2122, 7
      %v2153 = vsel %vm2134, %v2151, %v2152
      %v2154 = vrot.slane %v2152, 4
      %v2155 = vrot.slane %v2123, 7
      %v2156 = vsel %vm2134, %v2154, %v2155
      %v2157 = vrot.slane %v2155, 4
      %v2158 = vrot.slane %v2124, 7
      %v2159 = vsel %vm2134, %v2157, %v2158
      %v2160 = vrot.slane %v2158, 4
      %v2161 = vrot.slane %v2125, 7
      %v2162 = vsel %vm2134, %v2160, %v2161
      %v2163 = vrot.slane %v2161, 4
      %v2164 = vrot.slane %v2126, 7
      %v2165 = vsel %vm2134, %v2163, %v2164
      %v2166 = vrot.slane %v2164, 4
      %v2167 = vrot.slane %v2127, 7
      %v2168 = vsel %vm2134, %v2166, %v2167
      %v2169 = vrot.slane %v2167, 4
      %v2170 = vrot.slane %v2128, 7
      %v2171 = vsel %vm2134, %v2169, %v2170
      %v2172 = vrot.slane %v2170, 4
      %v2173 = vrot.slane %v2129, 7
      %v2174 = vsel %vm2134, %v2172, %v2173
      %v2175 = vrot.slane %v2173, 4
      %v2176 = vrot.slane %v2130, 7
      %v2177 = vsel %vm2134, %v2175, %v2176
      %v2178 = vrot.slane %v2176, 4
      %v2179 = vrot.slane %v2131, 7
      %v2180 = vsel %vm2134, %v2178, %v2179
      %v2181 = vrot.slane %v2179, 4
      %vm2182 = vcmp.ne.s16.totalorder %v2135, 0
      %vm2183 = vcmp.ne.s16.totalorder %v2138, 0
      %vm2184 = vcmp.ne.s16.totalorder %v2141, 0
      %vm2185 = vcmp.ne.s16.totalorder %v2144, 0
      %vm2186 = vcmp.ne.s16.totalorder %v2147, 0
      %vm2187 = vcmp.ne.s16.totalorder %v2150, 0
      %vm2188 = vcmp.ne.s16.totalorder %v2153, 0
      %vm2189 = vcmp.ne.s16.totalorder %v2156, 0
      %vm2190 = vcmp.ne.s16.totalorder %v2159, 0
      %vm2191 = vcmp.ne.s16.totalorder %v2162, 0
      %vm2192 = vcmp.ne.s16.totalorder %v2165, 0
      %vm2193 = vcmp.ne.s16.totalorder %v2168, 0
      %vm2194 = vcmp.ne.s16.totalorder %v2171, 0
      %vm2195 = vcmp.ne.s16.totalorder %v2174, 0
      %vm2196 = vcmp.ne.s16.totalorder %v2177, 0
      %vm2197 = vcmp.ne.s16.totalorder %v2180, 0
      %vm2198 = vcmp.ne.s16.totalorder %v2181, 0
      %v2199 = vsel %vm2182, %v558, 0
      %v2200 = vsel %vm2183, %v559, 0
      %v2201 = vsel %vm2184, %v560, 0
      %v2202 = vsel %vm2185, %v561, 0
      %v2203 = vsel %vm2186, %v562, 0
      %v2204 = vsel %vm2187, %v563, 0
      %v2205 = vsel %vm2188, %v564, 0
      %v2206 = vsel %vm2189, %v565, 0
      %v2207 = vsel %vm2190, %v566, 0
      %v2208 = vsel %vm2191, %v567, 0
      %v2209 = vsel %vm2192, %v568, 0
      %v2210 = vsel %vm2193, %v569, 0
      %v2211 = vsel %vm2194, %v570, 0
      %v2212 = vsel %vm2195, %v571, 0
      %v2213 = vsel %vm2196, %v572, 0
      %v2214 = vsel %vm2197, %v573, 0
      %v2215 = vsel %vm2198, %v574, 0
      %s2216 = scalar_lea.vmem %s3, 128
      %v2217 = vld [vmem:[%s2216] sm:$0xf]
      %v2218 = vld [vmem:[%s2216 + $0x4] sm:$0xf]
      %v2219 = vld [vmem:[%s2216 + $0x8] sm:$0xf]
      %v2220 = vld [vmem:[%s2216 + $0xc] sm:$0xf]
      %v2221 = vld [vmem:[%s2216 + $0x10] sm:$0xf]
      %v2222 = vld [vmem:[%s2216 + $0x14] sm:$0xf]
      %v2223 = vld [vmem:[%s2216 + $0x18] sm:$0xf]
      %v2224 = vld [vmem:[%s2216 + $0x1c] sm:$0xf]
      %v2225 = vld [vmem:[%s2216 + $0x20] sm:$0xf]
      %v2226 = vld [vmem:[%s2216 + $0x24] sm:$0xf]
      %v2227 = vld [vmem:[%s2216 + $0x28] sm:$0xf]
      %v2228 = vld [vmem:[%s2216 + $0x2c] sm:$0xf]
      %v2229 = vld [vmem:[%s2216 + $0x30] sm:$0xf]
      %v2230 = vld [vmem:[%s2216 + $0x34] sm:$0xf]
      %v2231 = vld [vmem:[%s2216 + $0x38] sm:$0xf]
      %v2232 = vld [vmem:[%s2216 + $0x3c] sm:$0xf]
      %v2250 = vunpack.c.l.b16 %v2199
      %v2251 = vunpack.c.l.b16 %v2200
      %v2252 = vunpack.c.l.b16 %v2201
      %v2253 = vunpack.c.l.b16 %v2202
      %v2254 = vunpack.c.l.b16 %v2203
      %v2255 = vunpack.c.l.b16 %v2204
      %v2256 = vunpack.c.l.b16 %v2205
      %v2257 = vunpack.c.l.b16 %v2206
      %v2258 = vunpack.c.l.b16 %v2207
      %v2259 = vunpack.c.l.b16 %v2208
      %v2260 = vunpack.c.l.b16 %v2209
      %v2261 = vunpack.c.l.b16 %v2210
      %v2262 = vunpack.c.l.b16 %v2211
      %v2263 = vunpack.c.l.b16 %v2212
      %v2264 = vunpack.c.l.b16 %v2213
      %v2265 = vunpack.c.l.b16 %v2214
      %v2266 = vunpack.c.l.b16 %v2215
      %v2267 = vpack.c.b16 %v2251, %v2250
      %v2268 = vpack.c.b16 %v2253, %v2252
      %v2269 = vpack.c.b16 %v2255, %v2254
      %v2270 = vpack.c.b16 %v2257, %v2256
      %v2271 = vpack.c.b16 %v2259, %v2258
      %v2272 = vpack.c.b16 %v2261, %v2260
      %v2273 = vpack.c.b16 %v2263, %v2262
      %v2274 = vpack.c.b16 %v2265, %v2264
      %v2275 = vpack.c.b16 %v2266, %v2266
      %vm2276 = vcmask 1046528
      %v2277 = vrot.slane %v2267, 1
      %v2278 = vrot.slane %v2268, 1
      %v2279 = vsel %vm2276, %v2277, %v2278
      %v2280 = vrot.slane %v2269, 1
      %v2281 = vsel %vm2276, %v2278, %v2280
      %v2282 = vrot.slane %v2270, 1
      %v2283 = vsel %vm2276, %v2280, %v2282
      %v2284 = vrot.slane %v2271, 1
      %v2285 = vsel %vm2276, %v2282, %v2284
      %v2286 = vrot.slane %v2272, 1
      %v2287 = vsel %vm2276, %v2284, %v2286
      %v2288 = vrot.slane %v2273, 1
      %v2289 = vsel %vm2276, %v2286, %v2288
      %v2290 = vrot.slane %v2274, 1
      %v2291 = vsel %vm2276, %v2288, %v2290
      %v2292 = vrot.slane %v2275, 1
      %v2293 = vsel %vm2276, %v2290, %v2292
      %v2318 = vunpack.c.l.b16 %v2217
      %v2319 = vunpack.c.l.b16 %v2218
      %v2320 = vunpack.c.l.b16 %v2219
      %v2321 = vunpack.c.l.b16 %v2220
      %v2322 = vunpack.c.l.b16 %v2221
      %v2323 = vunpack.c.l.b16 %v2222
      %v2324 = vunpack.c.l.b16 %v2223
      %v2325 = vunpack.c.l.b16 %v2224
      %v2326 = vunpack.c.l.b16 %v2225
      %v2327 = vunpack.c.l.b16 %v2226
      %v2328 = vunpack.c.l.b16 %v2227
      %v2329 = vunpack.c.l.b16 %v2228
      %v2330 = vunpack.c.l.b16 %v2229
      %v2331 = vunpack.c.l.b16 %v2230
      %v2332 = vunpack.c.l.b16 %v2231
      %v2333 = vunpack.c.l.b16 %v2232
      %v2334 = vpack.c.b16 %v2319, %v2318
      %v2335 = vpack.c.b16 %v2321, %v2320
      %v2336 = vpack.c.b16 %v2323, %v2322
      %v2337 = vpack.c.b16 %v2325, %v2324
      %v2338 = vpack.c.b16 %v2327, %v2326
      %v2339 = vpack.c.b16 %v2329, %v2328
      %v2340 = vpack.c.b16 %v2331, %v2330
      %v2341 = vpack.c.b16 %v2333, %v2332
      %2350 = vmatprep.subr.bf16.mxu0 0
      %2351 = vmatpush1.bf16.msra.mxu0 %v2341
      %2352 = vmatprep.subr.bf16.mxu0 0
      %2353 = vmatpush1.bf16.msra.mxu0 %v2340
      %2354 = vmatprep.subr.bf16.mxu0 0
      %2355 = vmatpush1.bf16.msra.mxu0 %v2339
      %2356 = vmatprep.subr.bf16.mxu0 0
      %2357 = vmatpush1.bf16.msra.mxu0 %v2338
      %2358 = vmatprep.subr.bf16.mxu0 0
      %2359 = vmatpush1.bf16.msra.mxu0 %v2337
      %2360 = vmatprep.subr.bf16.mxu0 0
      %2361 = vmatpush1.bf16.msra.mxu0 %v2336
      %2362 = vmatprep.subr.bf16.mxu0 0
      %2363 = vmatpush1.bf16.msra.mxu0 %v2335
      %2364 = vmatprep.subr.bf16.mxu0 0
      %2365 = vmatpush1.bf16.msra.mxu0 %v2334
      %2366 = vmatprep.subr.bf16.mxu0 0
      %2367 = vmatpush2.bf16.msra.mxu0 0
      %2368 = vmatprep.subr.bf16.mxu0 0
      %2369 = vmatpush2.bf16.msra.mxu0 0
      %2370 = vmatprep.subr.bf16.mxu0 0
      %2371 = vmatpush2.bf16.msra.mxu0 0
      %2372 = vmatprep.subr.bf16.mxu0 0
      %2373 = vmatpush2.bf16.msra.mxu0 0
      %2374 = vmatprep.subr.bf16.mxu0 0
      %2375 = vmatpush2.bf16.msra.mxu0 0
      %2376 = vmatprep.subr.bf16.mxu0 0
      %2377 = vmatpush2.bf16.msra.mxu0 0
      %2378 = vmatprep.subr.bf16.mxu0 0
      %2379 = vmatpush2.bf16.msra.mxu0 0
      %2380 = vmatprep.subr.bf16.mxu0 0
      %2381 = vmatpush2.bf16.msra.mxu0 0
      %2382 = vmatprep.mubr.bf16.mxu0 0
      %2383 = vmatmul.mubr.bf16.gmra.mxu0 %v2279
      %v2384 = vpop.f32.mrf.mxu0
      %v2385 = vadd.f32 0.0, %v2384
      %v2386 = vpop.f32.mrf.mxu0
      %v2387 = vpop.f32.mrf.mxu0
      %v2388 = vadd.f32 0.0, %v2387
      %v2389 = vpop.f32.mrf.mxu0
      %2390 = vmatprep.mubr.bf16.mxu0 0
      %2391 = vmatmul.mubr.bf16.gmra.mxu0 %v2281
      %v2392 = vpop.f32.mrf.mxu0
      %v2393 = vadd.f32 0.0, %v2392
      %v2394 = vpop.f32.mrf.mxu0
      %v2395 = vpop.f32.mrf.mxu0
      %v2396 = vadd.f32 0.0, %v2395
      %v2397 = vpop.f32.mrf.mxu0
      %2398 = vmatprep.mubr.bf16.mxu0 0
      %2399 = vmatmul.mubr.bf16.gmra.mxu0 %v2283
      %v2400 = vpop.f32.mrf.mxu0
      %v2401 = vadd.f32 0.0, %v2400
      %v2402 = vpop.f32.mrf.mxu0
      %v2403 = vpop.f32.mrf.mxu0
      %v2404 = vadd.f32 0.0, %v2403
      %v2405 = vpop.f32.mrf.mxu0
      %2406 = vmatprep.mubr.bf16.mxu0 0
      %2407 = vmatmul.mubr.bf16.gmra.mxu0 %v2285
      %v2408 = vpop.f32.mrf.mxu0
      %v2409 = vadd.f32 0.0, %v2408
      %v2410 = vpop.f32.mrf.mxu0
      %v2411 = vpop.f32.mrf.mxu0
      %v2412 = vadd.f32 0.0, %v2411
      %v2413 = vpop.f32.mrf.mxu0
      %2414 = vmatprep.mubr.bf16.mxu0 0
      %2415 = vmatmul.mubr.bf16.gmra.mxu0 %v2287
      %v2416 = vpop.f32.mrf.mxu0
      %v2417 = vadd.f32 0.0, %v2416
      %v2418 = vpop.f32.mrf.mxu0
      %v2419 = vpop.f32.mrf.mxu0
      %v2420 = vadd.f32 0.0, %v2419
      %v2421 = vpop.f32.mrf.mxu0
      %2422 = vmatprep.mubr.bf16.mxu0 0
      %2423 = vmatmul.mubr.bf16.gmra.mxu0 %v2289
      %v2424 = vpop.f32.mrf.mxu0
      %v2425 = vadd.f32 0.0, %v2424
      %v2426 = vpop.f32.mrf.mxu0
      %v2427 = vpop.f32.mrf.mxu0
      %v2428 = vadd.f32 0.0, %v2427
      %v2429 = vpop.f32.mrf.mxu0
      %2430 = vmatprep.mubr.bf16.mxu0 0
      %2431 = vmatmul.mubr.bf16.gmra.mxu0 %v2291
      %v2432 = vpop.f32.mrf.mxu0
      %v2433 = vadd.f32 0.0, %v2432
      %v2434 = vpop.f32.mrf.mxu0
      %v2435 = vpop.f32.mrf.mxu0
      %v2436 = vadd.f32 0.0, %v2435
      %v2437 = vpop.f32.mrf.mxu0
      %2438 = vmatprep.mubr.bf16.mxu0 0
      %2439 = vmatmul.mubr.bf16.gmra.mxu0 %v2293
      %v2440 = vpop.f32.mrf.mxu0
      %v2441 = vadd.f32 0.0, %v2440
      %v2442 = vpop.f32.mrf.mxu0
      %v2443 = vpop.f32.mrf.mxu0
      %v2444 = vadd.f32 0.0, %v2443
      %v2445 = vpop.f32.mrf.mxu0
      %2446 = vdwg.mxu0
      %v2447 = vadd.f32 %v2006, %v2385
      %v2448 = vadd.f32 %v2009, %v2388
      %v2449 = vadd.f32 %v2014, %v2393
      %v2450 = vadd.f32 %v2017, %v2396
      %v2451 = vadd.f32 %v2022, %v2401
      %v2452 = vadd.f32 %v2025, %v2404
      %v2453 = vadd.f32 %v2030, %v2409
      %v2454 = vadd.f32 %v2033, %v2412
      %v2455 = vadd.f32 %v2038, %v2417
      %v2456 = vadd.f32 %v2041, %v2420
      %v2457 = vadd.f32 %v2046, %v2425
      %v2458 = vadd.f32 %v2049, %v2428
      %v2459 = vadd.f32 %v2054, %v2433
      %v2460 = vadd.f32 %v2057, %v2436
      %v2461 = vadd.f32 %v2062, %v2441
      %v2462 = vadd.f32 %v2065, %v2444
      %v2463 = vsel %vm1644, %v560, 0
      %v2464 = vsel %vm1645, %v561, 0
      %v2465 = vsel %vm1646, %v562, 0
      %v2466 = vsel %vm1647, %v563, 0
      %v2467 = vsel %vm1648, %v564, 0
      %v2468 = vsel %vm1649, %v565, 0
      %v2469 = vsel %vm1650, %v566, 0
      %v2470 = vsel %vm1651, %v567, 0
      %v2471 = vsel %vm1652, %v568, 0
      %v2472 = vsel %vm1653, %v569, 0
      %v2473 = vsel %vm1654, %v570, 0
      %v2474 = vsel %vm1655, %v571, 0
      %v2475 = vsel %vm1656, %v572, 0
      %v2476 = vsel %vm1657, %v573, 0
      %v2477 = vsel %vm1658, %v574, 0
      %v2478 = vsel %vm1659, %v575, 0
      %s2479 = scalar_lea.vmem %s3, 192
      %v2480 = vld [vmem:[%s2479] sm:$0xf]
      %v2481 = vld [vmem:[%s2479 + $0x4] sm:$0xf]
      %v2482 = vld [vmem:[%s2479 + $0x8] sm:$0xf]
      %v2483 = vld [vmem:[%s2479 + $0xc] sm:$0xf]
      %v2484 = vld [vmem:[%s2479 + $0x10] sm:$0xf]
      %v2485 = vld [vmem:[%s2479 + $0x14] sm:$0xf]
      %v2486 = vld [vmem:[%s2479 + $0x18] sm:$0xf]
      %v2487 = vld [vmem:[%s2479 + $0x1c] sm:$0xf]
      %v2488 = vld [vmem:[%s2479 + $0x20] sm:$0xf]
      %v2489 = vld [vmem:[%s2479 + $0x24] sm:$0xf]
      %v2490 = vld [vmem:[%s2479 + $0x28] sm:$0xf]
      %v2491 = vld [vmem:[%s2479 + $0x2c] sm:$0xf]
      %v2492 = vld [vmem:[%s2479 + $0x30] sm:$0xf]
      %v2493 = vld [vmem:[%s2479 + $0x34] sm:$0xf]
      %v2494 = vld [vmem:[%s2479 + $0x38] sm:$0xf]
      %v2495 = vld [vmem:[%s2479 + $0x3c] sm:$0xf]
      %v2512 = vunpack.c.l.b16 %v2463
      %v2513 = vunpack.c.l.b16 %v2464
      %v2514 = vunpack.c.l.b16 %v2465
      %v2515 = vunpack.c.l.b16 %v2466
      %v2516 = vunpack.c.l.b16 %v2467
      %v2517 = vunpack.c.l.b16 %v2468
      %v2518 = vunpack.c.l.b16 %v2469
      %v2519 = vunpack.c.l.b16 %v2470
      %v2520 = vunpack.c.l.b16 %v2471
      %v2521 = vunpack.c.l.b16 %v2472
      %v2522 = vunpack.c.l.b16 %v2473
      %v2523 = vunpack.c.l.b16 %v2474
      %v2524 = vunpack.c.l.b16 %v2475
      %v2525 = vunpack.c.l.b16 %v2476
      %v2526 = vunpack.c.l.b16 %v2477
      %v2527 = vunpack.c.l.b16 %v2478
      %v2528 = vpack.c.b16 %v2513, %v2512
      %v2529 = vpack.c.b16 %v2515, %v2514
      %v2530 = vpack.c.b16 %v2517, %v2516
      %v2531 = vpack.c.b16 %v2519, %v2518
      %v2532 = vpack.c.b16 %v2521, %v2520
      %v2533 = vpack.c.b16 %v2523, %v2522
      %v2534 = vpack.c.b16 %v2525, %v2524
      %v2535 = vpack.c.b16 %v2527, %v2526
      %v2560 = vunpack.c.l.b16 %v2480
      %v2561 = vunpack.c.l.b16 %v2481
      %v2562 = vunpack.c.l.b16 %v2482
      %v2563 = vunpack.c.l.b16 %v2483
      %v2564 = vunpack.c.l.b16 %v2484
      %v2565 = vunpack.c.l.b16 %v2485
      %v2566 = vunpack.c.l.b16 %v2486
      %v2567 = vunpack.c.l.b16 %v2487
      %v2568 = vunpack.c.l.b16 %v2488
      %v2569 = vunpack.c.l.b16 %v2489
      %v2570 = vunpack.c.l.b16 %v2490
      %v2571 = vunpack.c.l.b16 %v2491
      %v2572 = vunpack.c.l.b16 %v2492
      %v2573 = vunpack.c.l.b16 %v2493
      %v2574 = vunpack.c.l.b16 %v2494
      %v2575 = vunpack.c.l.b16 %v2495
      %v2576 = vpack.c.b16 %v2561, %v2560
      %v2577 = vpack.c.b16 %v2563, %v2562
      %v2578 = vpack.c.b16 %v2565, %v2564
      %v2579 = vpack.c.b16 %v2567, %v2566
      %v2580 = vpack.c.b16 %v2569, %v2568
      %v2581 = vpack.c.b16 %v2571, %v2570
      %v2582 = vpack.c.b16 %v2573, %v2572
      %v2583 = vpack.c.b16 %v2575, %v2574
      %2592 = vmatprep.subr.bf16.mxu0 0
      %2593 = vmatpush1.bf16.msra.mxu0 %v2583
      %2594 = vmatprep.subr.bf16.mxu0 0
      %2595 = vmatpush1.bf16.msra.mxu0 %v2582
      %2596 = vmatprep.subr.bf16.mxu0 0
      %2597 = vmatpush1.bf16.msra.mxu0 %v2581
      %2598 = vmatprep.subr.bf16.mxu0 0
      %2599 = vmatpush1.bf16.msra.mxu0 %v2580
      %2600 = vmatprep.subr.bf16.mxu0 0
      %2601 = vmatpush1.bf16.msra.mxu0 %v2579
      %2602 = vmatprep.subr.bf16.mxu0 0
      %2603 = vmatpush1.bf16.msra.mxu0 %v2578
      %2604 = vmatprep.subr.bf16.mxu0 0
      %2605 = vmatpush1.bf16.msra.mxu0 %v2577
      %2606 = vmatprep.subr.bf16.mxu0 0
      %2607 = vmatpush1.bf16.msra.mxu0 %v2576
      %2608 = vmatprep.subr.bf16.mxu0 0
      %2609 = vmatpush2.bf16.msra.mxu0 0
      %2610 = vmatprep.subr.bf16.mxu0 0
      %2611 = vmatpush2.bf16.msra.mxu0 0
      %2612 = vmatprep.subr.bf16.mxu0 0
      %2613 = vmatpush2.bf16.msra.mxu0 0
      %2614 = vmatprep.subr.bf16.mxu0 0
      %2615 = vmatpush2.bf16.msra.mxu0 0
      %2616 = vmatprep.subr.bf16.mxu0 0
      %2617 = vmatpush2.bf16.msra.mxu0 0
      %2618 = vmatprep.subr.bf16.mxu0 0
      %2619 = vmatpush2.bf16.msra.mxu0 0
      %2620 = vmatprep.subr.bf16.mxu0 0
      %2621 = vmatpush2.bf16.msra.mxu0 0
      %2622 = vmatprep.subr.bf16.mxu0 0
      %2623 = vmatpush2.bf16.msra.mxu0 0
      %2624 = vmatprep.mubr.bf16.mxu0 0
      %2625 = vmatmul.mubr.bf16.gmra.mxu0 %v2528
      %v2626 = vpop.f32.mrf.mxu0
      %v2627 = vadd.f32 0.0, %v2626
      %v2628 = vpop.f32.mrf.mxu0
      %v2629 = vpop.f32.mrf.mxu0
      %v2630 = vadd.f32 0.0, %v2629
      %v2631 = vpop.f32.mrf.mxu0
      %2632 = vmatprep.mubr.bf16.mxu0 0
      %2633 = vmatmul.mubr.bf16.gmra.mxu0 %v2529
      %v2634 = vpop.f32.mrf.mxu0
      %v2635 = vadd.f32 0.0, %v2634
      %v2636 = vpop.f32.mrf.mxu0
      %v2637 = vpop.f32.mrf.mxu0
      %v2638 = vadd.f32 0.0, %v2637
      %v2639 = vpop.f32.mrf.mxu0
      %2640 = vmatprep.mubr.bf16.mxu0 0
      %2641 = vmatmul.mubr.bf16.gmra.mxu0 %v2530
      %v2642 = vpop.f32.mrf.mxu0
      %v2643 = vadd.f32 0.0, %v2642
      %v2644 = vpop.f32.mrf.mxu0
      %v2645 = vpop.f32.mrf.mxu0
      %v2646 = vadd.f32 0.0, %v2645
      %v2647 = vpop.f32.mrf.mxu0
      %2648 = vmatprep.mubr.bf16.mxu0 0
      %2649 = vmatmul.mubr.bf16.gmra.mxu0 %v2531
      %v2650 = vpop.f32.mrf.mxu0
      %v2651 = vadd.f32 0.0, %v2650
      %v2652 = vpop.f32.mrf.mxu0
      %v2653 = vpop.f32.mrf.mxu0
      %v2654 = vadd.f32 0.0, %v2653
      %v2655 = vpop.f32.mrf.mxu0
      %2656 = vmatprep.mubr.bf16.mxu0 0
      %2657 = vmatmul.mubr.bf16.gmra.mxu0 %v2532
      %v2658 = vpop.f32.mrf.mxu0
      %v2659 = vadd.f32 0.0, %v2658
      %v2660 = vpop.f32.mrf.mxu0
      %v2661 = vpop.f32.mrf.mxu0
      %v2662 = vadd.f32 0.0, %v2661
      %v2663 = vpop.f32.mrf.mxu0
      %2664 = vmatprep.mubr.bf16.mxu0 0
      %2665 = vmatmul.mubr.bf16.gmra.mxu0 %v2533
      %v2666 = vpop.f32.mrf.mxu0
      %v2667 = vadd.f32 0.0, %v2666
      %v2668 = vpop.f32.mrf.mxu0
      %v2669 = vpop.f32.mrf.mxu0
      %v2670 = vadd.f32 0.0, %v2669
      %v2671 = vpop.f32.mrf.mxu0
      %2672 = vmatprep.mubr.bf16.mxu0 0
      %2673 = vmatmul.mubr.bf16.gmra.mxu0 %v2534
      %v2674 = vpop.f32.mrf.mxu0
      %v2675 = vadd.f32 0.0, %v2674
      %v2676 = vpop.f32.mrf.mxu0
      %v2677 = vpop.f32.mrf.mxu0
      %v2678 = vadd.f32 0.0, %v2677
      %v2679 = vpop.f32.mrf.mxu0
      %2680 = vmatprep.mubr.bf16.mxu0 0
      %2681 = vmatmul.mubr.bf16.gmra.mxu0 %v2535
      %v2682 = vpop.f32.mrf.mxu0
      %v2683 = vadd.f32 0.0, %v2682
      %v2684 = vpop.f32.mrf.mxu0
      %v2685 = vpop.f32.mrf.mxu0
      %v2686 = vadd.f32 0.0, %v2685
      %v2687 = vpop.f32.mrf.mxu0
      %2688 = vdwg.mxu0
      %v2689 = vadd.f32 %v2447, %v2627
      %v2690 = vadd.f32 %v2448, %v2630
      %v2691 = vadd.f32 %v2449, %v2635
      %v2692 = vadd.f32 %v2450, %v2638
      %v2693 = vadd.f32 %v2451, %v2643
      %v2694 = vadd.f32 %v2452, %v2646
      %v2695 = vadd.f32 %v2453, %v2651
      %v2696 = vadd.f32 %v2454, %v2654
      %v2697 = vadd.f32 %v2455, %v2659
      %v2698 = vadd.f32 %v2456, %v2662
      %v2699 = vadd.f32 %v2457, %v2667
      %v2700 = vadd.f32 %v2458, %v2670
      %v2701 = vadd.f32 %v2459, %v2675
      %v2702 = vadd.f32 %v2460, %v2678
      %v2703 = vadd.f32 %v2461, %v2683
      %v2704 = vadd.f32 %v2462, %v2686
      %s2705 = scalar_lea.vmem %s3, 256
      %v2706 = vld [vmem:[%s2705] sm:$0xf]
      %v2707 = vld [vmem:[%s2705 + $0x4] sm:$0xf]
      %v2708 = vld [vmem:[%s2705 + $0x8] sm:$0xf]
      %v2709 = vld [vmem:[%s2705 + $0xc] sm:$0xf]
      %v2710 = vld [vmem:[%s2705 + $0x10] sm:$0xf]
      %v2711 = vld [vmem:[%s2705 + $0x14] sm:$0xf]
      %v2712 = vld [vmem:[%s2705 + $0x18] sm:$0xf]
      %v2713 = vld [vmem:[%s2705 + $0x1c] sm:$0xf]
      %v2714 = vld [vmem:[%s2705 + $0x20] sm:$0xf]
      %v2715 = vld [vmem:[%s2705 + $0x24] sm:$0xf]
      %v2716 = vld [vmem:[%s2705 + $0x28] sm:$0xf]
      %v2717 = vld [vmem:[%s2705 + $0x2c] sm:$0xf]
      %v2718 = vld [vmem:[%s2705 + $0x30] sm:$0xf]
      %v2719 = vld [vmem:[%s2705 + $0x34] sm:$0xf]
      %v2720 = vld [vmem:[%s2705 + $0x38] sm:$0xf]
      %v2721 = vld [vmem:[%s2705 + $0x3c] sm:$0xf]
      %v2738 = vunpack.c.l.b16 %v2706
      %v2739 = vunpack.c.l.b16 %v2707
      %v2740 = vunpack.c.l.b16 %v2708
      %v2741 = vunpack.c.l.b16 %v2709
      %v2742 = vunpack.c.l.b16 %v2710
      %v2743 = vunpack.c.l.b16 %v2711
      %v2744 = vunpack.c.l.b16 %v2712
      %v2745 = vunpack.c.l.b16 %v2713
      %v2746 = vunpack.c.l.b16 %v2714
      %v2747 = vunpack.c.l.b16 %v2715
      %v2748 = vunpack.c.l.b16 %v2716
      %v2749 = vunpack.c.l.b16 %v2717
      %v2750 = vunpack.c.l.b16 %v2718
      %v2751 = vunpack.c.l.b16 %v2719
      %v2752 = vunpack.c.l.b16 %v2720
      %v2753 = vunpack.c.l.b16 %v2721
      %v2754 = vpack.c.b16 %v2739, %v2738
      %v2755 = vpack.c.b16 %v2741, %v2740
      %v2756 = vpack.c.b16 %v2743, %v2742
      %v2757 = vpack.c.b16 %v2745, %v2744
      %v2758 = vpack.c.b16 %v2747, %v2746
      %v2759 = vpack.c.b16 %v2749, %v2748
      %v2760 = vpack.c.b16 %v2751, %v2750
      %v2761 = vpack.c.b16 %v2753, %v2752
      %2770 = vmatprep.subr.bf16.mxu0 0
      %2771 = vmatpush1.bf16.msra.mxu0 %v2761
      %2772 = vmatprep.subr.bf16.mxu0 0
      %2773 = vmatpush1.bf16.msra.mxu0 %v2760
      %2774 = vmatprep.subr.bf16.mxu0 0
      %2775 = vmatpush1.bf16.msra.mxu0 %v2759
      %2776 = vmatprep.subr.bf16.mxu0 0
      %2777 = vmatpush1.bf16.msra.mxu0 %v2758
      %2778 = vmatprep.subr.bf16.mxu0 0
      %2779 = vmatpush1.bf16.msra.mxu0 %v2757
      %2780 = vmatprep.subr.bf16.mxu0 0
      %2781 = vmatpush1.bf16.msra.mxu0 %v2756
      %2782 = vmatprep.subr.bf16.mxu0 0
      %2783 = vmatpush1.bf16.msra.mxu0 %v2755
      %2784 = vmatprep.subr.bf16.mxu0 0
      %2785 = vmatpush1.bf16.msra.mxu0 %v2754
      %2786 = vmatprep.subr.bf16.mxu0 0
      %2787 = vmatpush2.bf16.msra.mxu0 0
      %2788 = vmatprep.subr.bf16.mxu0 0
      %2789 = vmatpush2.bf16.msra.mxu0 0
      %2790 = vmatprep.subr.bf16.mxu0 0
      %2791 = vmatpush2.bf16.msra.mxu0 0
      %2792 = vmatprep.subr.bf16.mxu0 0
      %2793 = vmatpush2.bf16.msra.mxu0 0
      %2794 = vmatprep.subr.bf16.mxu0 0
      %2795 = vmatpush2.bf16.msra.mxu0 0
      %2796 = vmatprep.subr.bf16.mxu0 0
      %2797 = vmatpush2.bf16.msra.mxu0 0
      %2798 = vmatprep.subr.bf16.mxu0 0
      %2799 = vmatpush2.bf16.msra.mxu0 0
      %2800 = vmatprep.subr.bf16.mxu0 0
      %2801 = vmatpush2.bf16.msra.mxu0 0
      %2802 = vmatprep.mubr.bf16.mxu0 0
      %2803 = vmatmul.mubr.bf16.gmra.mxu0 %v996
      %v2804 = vpop.f32.mrf.mxu0
      %v2805 = vadd.f32 0.0, %v2804
      %v2806 = vpop.f32.mrf.mxu0
      %v2807 = vpop.f32.mrf.mxu0
      %v2808 = vadd.f32 0.0, %v2807
      %v2809 = vpop.f32.mrf.mxu0
      %2810 = vmatprep.mubr.bf16.mxu0 0
      %2811 = vmatmul.mubr.bf16.gmra.mxu0 %v1004
      %v2812 = vpop.f32.mrf.mxu0
      %v2813 = vadd.f32 0.0, %v2812
      %v2814 = vpop.f32.mrf.mxu0
      %v2815 = vpop.f32.mrf.mxu0
      %v2816 = vadd.f32 0.0, %v2815
      %v2817 = vpop.f32.mrf.mxu0
      %2818 = vmatprep.mubr.bf16.mxu0 0
      %2819 = vmatmul.mubr.bf16.gmra.mxu0 %v1012
      %v2820 = vpop.f32.mrf.mxu0
      %v2821 = vadd.f32 0.0, %v2820
      %v2822 = vpop.f32.mrf.mxu0
      %v2823 = vpop.f32.mrf.mxu0
      %v2824 = vadd.f32 0.0, %v2823
      %v2825 = vpop.f32.mrf.mxu0
      %2826 = vmatprep.mubr.bf16.mxu0 0
      %2827 = vmatmul.mubr.bf16.gmra.mxu0 %v1020
      %v2828 = vpop.f32.mrf.mxu0
      %v2829 = vadd.f32 0.0, %v2828
      %v2830 = vpop.f32.mrf.mxu0
      %v2831 = vpop.f32.mrf.mxu0
      %v2832 = vadd.f32 0.0, %v2831
      %v2833 = vpop.f32.mrf.mxu0
      %2834 = vmatprep.mubr.bf16.mxu0 0
      %2835 = vmatmul.mubr.bf16.gmra.mxu0 %v1028
      %v2836 = vpop.f32.mrf.mxu0
      %v2837 = vadd.f32 0.0, %v2836
      %v2838 = vpop.f32.mrf.mxu0
      %v2839 = vpop.f32.mrf.mxu0
      %v2840 = vadd.f32 0.0, %v2839
      %v2841 = vpop.f32.mrf.mxu0
      %2842 = vmatprep.mubr.bf16.mxu0 0
      %2843 = vmatmul.mubr.bf16.gmra.mxu0 %v1036
      %v2844 = vpop.f32.mrf.mxu0
      %v2845 = vadd.f32 0.0, %v2844
      %v2846 = vpop.f32.mrf.mxu0
      %v2847 = vpop.f32.mrf.mxu0
      %v2848 = vadd.f32 0.0, %v2847
      %v2849 = vpop.f32.mrf.mxu0
      %2850 = vmatprep.mubr.bf16.mxu0 0
      %2851 = vmatmul.mubr.bf16.gmra.mxu0 %v1044
      %v2852 = vpop.f32.mrf.mxu0
      %v2853 = vadd.f32 0.0, %v2852
      %v2854 = vpop.f32.mrf.mxu0
      %v2855 = vpop.f32.mrf.mxu0
      %v2856 = vadd.f32 0.0, %v2855
      %v2857 = vpop.f32.mrf.mxu0
      %2858 = vmatprep.mubr.bf16.mxu0 0
      %2859 = vmatmul.mubr.bf16.gmra.mxu0 %v1052
      %v2860 = vpop.f32.mrf.mxu0
      %v2861 = vadd.f32 0.0, %v2860
      %v2862 = vpop.f32.mrf.mxu0
      %v2863 = vpop.f32.mrf.mxu0
      %v2864 = vadd.f32 0.0, %v2863
      %v2865 = vpop.f32.mrf.mxu0
      %2866 = vdwg.mxu0
      %v2867 = vadd.f32 %v2689, %v2805
      %v2868 = vadd.f32 %v2690, %v2808
      %v2869 = vadd.f32 %v2691, %v2813
      %v2870 = vadd.f32 %v2692, %v2816
      %v2871 = vadd.f32 %v2693, %v2821
      %v2872 = vadd.f32 %v2694, %v2824
      %v2873 = vadd.f32 %v2695, %v2829
      %v2874 = vadd.f32 %v2696, %v2832
      %v2875 = vadd.f32 %v2697, %v2837
      %v2876 = vadd.f32 %v2698, %v2840
      %v2877 = vadd.f32 %v2699, %v2845
      %v2878 = vadd.f32 %v2700, %v2848
      %v2879 = vadd.f32 %v2701, %v2853
      %v2880 = vadd.f32 %v2702, %v2856
      %v2881 = vadd.f32 %v2703, %v2861
      %v2882 = vadd.f32 %v2704, %v2864
      %v2883 = vsel %vm2182, %v560, 0
      %v2884 = vsel %vm2183, %v561, 0
      %v2885 = vsel %vm2184, %v562, 0
      %v2886 = vsel %vm2185, %v563, 0
      %v2887 = vsel %vm2186, %v564, 0
      %v2888 = vsel %vm2187, %v565, 0
      %v2889 = vsel %vm2188, %v566, 0
      %v2890 = vsel %vm2189, %v567, 0
      %v2891 = vsel %vm2190, %v568, 0
      %v2892 = vsel %vm2191, %v569, 0
      %v2893 = vsel %vm2192, %v570, 0
      %v2894 = vsel %vm2193, %v571, 0
      %v2895 = vsel %vm2194, %v572, 0
      %v2896 = vsel %vm2195, %v573, 0
      %v2897 = vsel %vm2196, %v574, 0
      %v2898 = vsel %vm2197, %v575, 0
      %v2899 = vsel %vm2198, %v576, 0
      %s2900 = scalar_lea.vmem %s3, 320
      %v2901 = vld [vmem:[%s2900] sm:$0xf]
      %v2902 = vld [vmem:[%s2900 + $0x4] sm:$0xf]
      %v2903 = vld [vmem:[%s2900 + $0x8] sm:$0xf]
      %v2904 = vld [vmem:[%s2900 + $0xc] sm:$0xf]
      %v2905 = vld [vmem:[%s2900 + $0x10] sm:$0xf]
      %v2906 = vld [vmem:[%s2900 + $0x14] sm:$0xf]
      %v2907 = vld [vmem:[%s2900 + $0x18] sm:$0xf]
      %v2908 = vld [vmem:[%s2900 + $0x1c] sm:$0xf]
      %v2909 = vld [vmem:[%s2900 + $0x20] sm:$0xf]
      %v2910 = vld [vmem:[%s2900 + $0x24] sm:$0xf]
      %v2911 = vld [vmem:[%s2900 + $0x28] sm:$0xf]
      %v2912 = vld [vmem:[%s2900 + $0x2c] sm:$0xf]
      %v2913 = vld [vmem:[%s2900 + $0x30] sm:$0xf]
      %v2914 = vld [vmem:[%s2900 + $0x34] sm:$0xf]
      %v2915 = vld [vmem:[%s2900 + $0x38] sm:$0xf]
      %v2916 = vld [vmem:[%s2900 + $0x3c] sm:$0xf]
      %v2934 = vunpack.c.l.b16 %v2883
      %v2935 = vunpack.c.l.b16 %v2884
      %v2936 = vunpack.c.l.b16 %v2885
      %v2937 = vunpack.c.l.b16 %v2886
      %v2938 = vunpack.c.l.b16 %v2887
      %v2939 = vunpack.c.l.b16 %v2888
      %v2940 = vunpack.c.l.b16 %v2889
      %v2941 = vunpack.c.l.b16 %v2890
      %v2942 = vunpack.c.l.b16 %v2891
      %v2943 = vunpack.c.l.b16 %v2892
      %v2944 = vunpack.c.l.b16 %v2893
      %v2945 = vunpack.c.l.b16 %v2894
      %v2946 = vunpack.c.l.b16 %v2895
      %v2947 = vunpack.c.l.b16 %v2896
      %v2948 = vunpack.c.l.b16 %v2897
      %v2949 = vunpack.c.l.b16 %v2898
      %v2950 = vunpack.c.l.b16 %v2899
      %v2951 = vpack.c.b16 %v2935, %v2934
      %v2952 = vpack.c.b16 %v2937, %v2936
      %v2953 = vpack.c.b16 %v2939, %v2938
      %v2954 = vpack.c.b16 %v2941, %v2940
      %v2955 = vpack.c.b16 %v2943, %v2942
      %v2956 = vpack.c.b16 %v2945, %v2944
      %v2957 = vpack.c.b16 %v2947, %v2946
      %v2958 = vpack.c.b16 %v2949, %v2948
      %v2959 = vpack.c.b16 %v2950, %v2950
      %v2960 = vrot.slane %v2951, 1
      %v2961 = vrot.slane %v2952, 1
      %v2962 = vsel %vm2276, %v2960, %v2961
      %v2963 = vrot.slane %v2953, 1
      %v2964 = vsel %vm2276, %v2961, %v2963
      %v2965 = vrot.slane %v2954, 1
      %v2966 = vsel %vm2276, %v2963, %v2965
      %v2967 = vrot.slane %v2955, 1
      %v2968 = vsel %vm2276, %v2965, %v2967
      %v2969 = vrot.slane %v2956, 1
      %v2970 = vsel %vm2276, %v2967, %v2969
      %v2971 = vrot.slane %v2957, 1
      %v2972 = vsel %vm2276, %v2969, %v2971
      %v2973 = vrot.slane %v2958, 1
      %v2974 = vsel %vm2276, %v2971, %v2973
      %v2975 = vrot.slane %v2959, 1
      %v2976 = vsel %vm2276, %v2973, %v2975
      %v3001 = vunpack.c.l.b16 %v2901
      %v3002 = vunpack.c.l.b16 %v2902
      %v3003 = vunpack.c.l.b16 %v2903
      %v3004 = vunpack.c.l.b16 %v2904
      %v3005 = vunpack.c.l.b16 %v2905
      %v3006 = vunpack.c.l.b16 %v2906
      %v3007 = vunpack.c.l.b16 %v2907
      %v3008 = vunpack.c.l.b16 %v2908
      %v3009 = vunpack.c.l.b16 %v2909
      %v3010 = vunpack.c.l.b16 %v2910
      %v3011 = vunpack.c.l.b16 %v2911
      %v3012 = vunpack.c.l.b16 %v2912
      %v3013 = vunpack.c.l.b16 %v2913
      %v3014 = vunpack.c.l.b16 %v2914
      %v3015 = vunpack.c.l.b16 %v2915
      %v3016 = vunpack.c.l.b16 %v2916
      %v3017 = vpack.c.b16 %v3002, %v3001
      %v3018 = vpack.c.b16 %v3004, %v3003
      %v3019 = vpack.c.b16 %v3006, %v3005
      %v3020 = vpack.c.b16 %v3008, %v3007
      %v3021 = vpack.c.b16 %v3010, %v3009
      %v3022 = vpack.c.b16 %v3012, %v3011
      %v3023 = vpack.c.b16 %v3014, %v3013
      %v3024 = vpack.c.b16 %v3016, %v3015
      %3033 = vmatprep.subr.bf16.mxu0 0
      %3034 = vmatpush1.bf16.msra.mxu0 %v3024
      %3035 = vmatprep.subr.bf16.mxu0 0
      %3036 = vmatpush1.bf16.msra.mxu0 %v3023
      %3037 = vmatprep.subr.bf16.mxu0 0
      %3038 = vmatpush1.bf16.msra.mxu0 %v3022
      %3039 = vmatprep.subr.bf16.mxu0 0
      %3040 = vmatpush1.bf16.msra.mxu0 %v3021
      %3041 = vmatprep.subr.bf16.mxu0 0
      %3042 = vmatpush1.bf16.msra.mxu0 %v3020
      %3043 = vmatprep.subr.bf16.mxu0 0
      %3044 = vmatpush1.bf16.msra.mxu0 %v3019
      %3045 = vmatprep.subr.bf16.mxu0 0
      %3046 = vmatpush1.bf16.msra.mxu0 %v3018
      %3047 = vmatprep.subr.bf16.mxu0 0
      %3048 = vmatpush1.bf16.msra.mxu0 %v3017
      %3049 = vmatprep.subr.bf16.mxu0 0
      %3050 = vmatpush2.bf16.msra.mxu0 0
      %3051 = vmatprep.subr.bf16.mxu0 0
      %3052 = vmatpush2.bf16.msra.mxu0 0
      %3053 = vmatprep.subr.bf16.mxu0 0
      %3054 = vmatpush2.bf16.msra.mxu0 0
      %3055 = vmatprep.subr.bf16.mxu0 0
      %3056 = vmatpush2.bf16.msra.mxu0 0
      %3057 = vmatprep.subr.bf16.mxu0 0
      %3058 = vmatpush2.bf16.msra.mxu0 0
      %3059 = vmatprep.subr.bf16.mxu0 0
      %3060 = vmatpush2.bf16.msra.mxu0 0
      %3061 = vmatprep.subr.bf16.mxu0 0
      %3062 = vmatpush2.bf16.msra.mxu0 0
      %3063 = vmatprep.subr.bf16.mxu0 0
      %3064 = vmatpush2.bf16.msra.mxu0 0
      %3065 = vmatprep.mubr.bf16.mxu0 0
      %3066 = vmatmul.mubr.bf16.gmra.mxu0 %v2962
      %v3067 = vpop.f32.mrf.mxu0
      %v3068 = vadd.f32 0.0, %v3067
      %v3069 = vpop.f32.mrf.mxu0
      %v3070 = vpop.f32.mrf.mxu0
      %v3071 = vadd.f32 0.0, %v3070
      %v3072 = vpop.f32.mrf.mxu0
      %3073 = vmatprep.mubr.bf16.mxu0 0
      %3074 = vmatmul.mubr.bf16.gmra.mxu0 %v2964
      %v3075 = vpop.f32.mrf.mxu0
      %v3076 = vadd.f32 0.0, %v3075
      %v3077 = vpop.f32.mrf.mxu0
      %v3078 = vpop.f32.mrf.mxu0
      %v3079 = vadd.f32 0.0, %v3078
      %v3080 = vpop.f32.mrf.mxu0
      %3081 = vmatprep.mubr.bf16.mxu0 0
      %3082 = vmatmul.mubr.bf16.gmra.mxu0 %v2966
      %v3083 = vpop.f32.mrf.mxu0
      %v3084 = vadd.f32 0.0, %v3083
      %v3085 = vpop.f32.mrf.mxu0
      %v3086 = vpop.f32.mrf.mxu0
      %v3087 = vadd.f32 0.0, %v3086
      %v3088 = vpop.f32.mrf.mxu0
      %3089 = vmatprep.mubr.bf16.mxu0 0
      %3090 = vmatmul.mubr.bf16.gmra.mxu0 %v2968
      %v3091 = vpop.f32.mrf.mxu0
      %v3092 = vadd.f32 0.0, %v3091
      %v3093 = vpop.f32.mrf.mxu0
      %v3094 = vpop.f32.mrf.mxu0
      %v3095 = vadd.f32 0.0, %v3094
      %v3096 = vpop.f32.mrf.mxu0
      %3097 = vmatprep.mubr.bf16.mxu0 0
      %3098 = vmatmul.mubr.bf16.gmra.mxu0 %v2970
      %v3099 = vpop.f32.mrf.mxu0
      %v3100 = vadd.f32 0.0, %v3099
      %v3101 = vpop.f32.mrf.mxu0
      %v3102 = vpop.f32.mrf.mxu0
      %v3103 = vadd.f32 0.0, %v3102
      %v3104 = vpop.f32.mrf.mxu0
      %3105 = vmatprep.mubr.bf16.mxu0 0
      %3106 = vmatmul.mubr.bf16.gmra.mxu0 %v2972
      %v3107 = vpop.f32.mrf.mxu0
      %v3108 = vadd.f32 0.0, %v3107
      %v3109 = vpop.f32.mrf.mxu0
      %v3110 = vpop.f32.mrf.mxu0
      %v3111 = vadd.f32 0.0, %v3110
      %v3112 = vpop.f32.mrf.mxu0
      %3113 = vmatprep.mubr.bf16.mxu0 0
      %3114 = vmatmul.mubr.bf16.gmra.mxu0 %v2974
      %v3115 = vpop.f32.mrf.mxu0
      %v3116 = vadd.f32 0.0, %v3115
      %v3117 = vpop.f32.mrf.mxu0
      %v3118 = vpop.f32.mrf.mxu0
      %v3119 = vadd.f32 0.0, %v3118
      %v3120 = vpop.f32.mrf.mxu0
      %3121 = vmatprep.mubr.bf16.mxu0 0
      %3122 = vmatmul.mubr.bf16.gmra.mxu0 %v2976
      %v3123 = vpop.f32.mrf.mxu0
      %v3124 = vadd.f32 0.0, %v3123
      %v3125 = vpop.f32.mrf.mxu0
      %v3126 = vpop.f32.mrf.mxu0
      %v3127 = vadd.f32 0.0, %v3126
      %v3128 = vpop.f32.mrf.mxu0
      %3129 = vdwg.mxu0
      %v3130 = vadd.f32 %v2867, %v3068
      %v3131 = vadd.f32 %v2868, %v3071
      %v3132 = vadd.f32 %v2869, %v3076
      %v3133 = vadd.f32 %v2870, %v3079
      %v3134 = vadd.f32 %v2871, %v3084
      %v3135 = vadd.f32 %v2872, %v3087
      %v3136 = vadd.f32 %v2873, %v3092
      %v3137 = vadd.f32 %v2874, %v3095
      %v3138 = vadd.f32 %v2875, %v3100
      %v3139 = vadd.f32 %v2876, %v3103
      %v3140 = vadd.f32 %v2877, %v3108
      %v3141 = vadd.f32 %v2878, %v3111
      %v3142 = vadd.f32 %v2879, %v3116
      %v3143 = vadd.f32 %v2880, %v3119
      %v3144 = vadd.f32 %v2881, %v3124
      %v3145 = vadd.f32 %v2882, %v3127
      %v3146 = vsel %vm1644, %v562, 0
      %v3147 = vsel %vm1645, %v563, 0
      %v3148 = vsel %vm1646, %v564, 0
      %v3149 = vsel %vm1647, %v565, 0
      %v3150 = vsel %vm1648, %v566, 0
      %v3151 = vsel %vm1649, %v567, 0
      %v3152 = vsel %vm1650, %v568, 0
      %v3153 = vsel %vm1651, %v569, 0
      %v3154 = vsel %vm1652, %v570, 0
      %v3155 = vsel %vm1653, %v571, 0
      %v3156 = vsel %vm1654, %v572, 0
      %v3157 = vsel %vm1655, %v573, 0
      %v3158 = vsel %vm1656, %v574, 0
      %v3159 = vsel %vm1657, %v575, 0
      %v3160 = vsel %vm1658, %v576, 0
      %v3161 = vsel %vm1659, %v577, 0
      %s3162 = scalar_lea.vmem %s3, 384
      %v3163 = vld [vmem:[%s3162] sm:$0xf]
      %v3164 = vld [vmem:[%s3162 + $0x4] sm:$0xf]
      %v3165 = vld [vmem:[%s3162 + $0x8] sm:$0xf]
      %v3166 = vld [vmem:[%s3162 + $0xc] sm:$0xf]
      %v3167 = vld [vmem:[%s3162 + $0x10] sm:$0xf]
      %v3168 = vld [vmem:[%s3162 + $0x14] sm:$0xf]
      %v3169 = vld [vmem:[%s3162 + $0x18] sm:$0xf]
      %v3170 = vld [vmem:[%s3162 + $0x1c] sm:$0xf]
      %v3171 = vld [vmem:[%s3162 + $0x20] sm:$0xf]
      %v3172 = vld [vmem:[%s3162 + $0x24] sm:$0xf]
      %v3173 = vld [vmem:[%s3162 + $0x28] sm:$0xf]
      %v3174 = vld [vmem:[%s3162 + $0x2c] sm:$0xf]
      %v3175 = vld [vmem:[%s3162 + $0x30] sm:$0xf]
      %v3176 = vld [vmem:[%s3162 + $0x34] sm:$0xf]
      %v3177 = vld [vmem:[%s3162 + $0x38] sm:$0xf]
      %v3178 = vld [vmem:[%s3162 + $0x3c] sm:$0xf]
      %v3195 = vunpack.c.l.b16 %v3146
      %v3196 = vunpack.c.l.b16 %v3147
      %v3197 = vunpack.c.l.b16 %v3148
      %v3198 = vunpack.c.l.b16 %v3149
      %v3199 = vunpack.c.l.b16 %v3150
      %v3200 = vunpack.c.l.b16 %v3151
      %v3201 = vunpack.c.l.b16 %v3152
      %v3202 = vunpack.c.l.b16 %v3153
      %v3203 = vunpack.c.l.b16 %v3154
      %v3204 = vunpack.c.l.b16 %v3155
      %v3205 = vunpack.c.l.b16 %v3156
      %v3206 = vunpack.c.l.b16 %v3157
      %v3207 = vunpack.c.l.b16 %v3158
      %v3208 = vunpack.c.l.b16 %v3159
      %v3209 = vunpack.c.l.b16 %v3160
      %v3210 = vunpack.c.l.b16 %v3161
      %v3211 = vpack.c.b16 %v3196, %v3195
      %v3212 = vpack.c.b16 %v3198, %v3197
      %v3213 = vpack.c.b16 %v3200, %v3199
      %v3214 = vpack.c.b16 %v3202, %v3201
      %v3215 = vpack.c.b16 %v3204, %v3203
      %v3216 = vpack.c.b16 %v3206, %v3205
      %v3217 = vpack.c.b16 %v3208, %v3207
      %v3218 = vpack.c.b16 %v3210, %v3209
      %v3243 = vunpack.c.l.b16 %v3163
      %v3244 = vunpack.c.l.b16 %v3164
      %v3245 = vunpack.c.l.b16 %v3165
      %v3246 = vunpack.c.l.b16 %v3166
      %v3247 = vunpack.c.l.b16 %v3167
      %v3248 = vunpack.c.l.b16 %v3168
      %v3249 = vunpack.c.l.b16 %v3169
      %v3250 = vunpack.c.l.b16 %v3170
      %v3251 = vunpack.c.l.b16 %v3171
      %v3252 = vunpack.c.l.b16 %v3172
      %v3253 = vunpack.c.l.b16 %v3173
      %v3254 = vunpack.c.l.b16 %v3174
      %v3255 = vunpack.c.l.b16 %v3175
      %v3256 = vunpack.c.l.b16 %v3176
      %v3257 = vunpack.c.l.b16 %v3177
      %v3258 = vunpack.c.l.b16 %v3178
      %v3259 = vpack.c.b16 %v3244, %v3243
      %v3260 = vpack.c.b16 %v3246, %v3245
      %v3261 = vpack.c.b16 %v3248, %v3247
      %v3262 = vpack.c.b16 %v3250, %v3249
      %v3263 = vpack.c.b16 %v3252, %v3251
      %v3264 = vpack.c.b16 %v3254, %v3253
      %v3265 = vpack.c.b16 %v3256, %v3255
      %v3266 = vpack.c.b16 %v3258, %v3257
      %3275 = vmatprep.subr.bf16.mxu0 0
      %3276 = vmatpush1.bf16.msra.mxu0 %v3266
      %3277 = vmatprep.subr.bf16.mxu0 0
      %3278 = vmatpush1.bf16.msra.mxu0 %v3265
      %3279 = vmatprep.subr.bf16.mxu0 0
      %3280 = vmatpush1.bf16.msra.mxu0 %v3264
      %3281 = vmatprep.subr.bf16.mxu0 0
      %3282 = vmatpush1.bf16.msra.mxu0 %v3263
      %3283 = vmatprep.subr.bf16.mxu0 0
      %3284 = vmatpush1.bf16.msra.mxu0 %v3262
      %3285 = vmatprep.subr.bf16.mxu0 0
      %3286 = vmatpush1.bf16.msra.mxu0 %v3261
      %3287 = vmatprep.subr.bf16.mxu0 0
      %3288 = vmatpush1.bf16.msra.mxu0 %v3260
      %3289 = vmatprep.subr.bf16.mxu0 0
      %3290 = vmatpush1.bf16.msra.mxu0 %v3259
      %3291 = vmatprep.subr.bf16.mxu0 0
      %3292 = vmatpush2.bf16.msra.mxu0 0
      %3293 = vmatprep.subr.bf16.mxu0 0
      %3294 = vmatpush2.bf16.msra.mxu0 0
      %3295 = vmatprep.subr.bf16.mxu0 0
      %3296 = vmatpush2.bf16.msra.mxu0 0
      %3297 = vmatprep.subr.bf16.mxu0 0
      %3298 = vmatpush2.bf16.msra.mxu0 0
      %3299 = vmatprep.subr.bf16.mxu0 0
      %3300 = vmatpush2.bf16.msra.mxu0 0
      %3301 = vmatprep.subr.bf16.mxu0 0
      %3302 = vmatpush2.bf16.msra.mxu0 0
      %3303 = vmatprep.subr.bf16.mxu0 0
      %3304 = vmatpush2.bf16.msra.mxu0 0
      %3305 = vmatprep.subr.bf16.mxu0 0
      %3306 = vmatpush2.bf16.msra.mxu0 0
      %3307 = vmatprep.mubr.bf16.mxu0 0
      %3308 = vmatmul.mubr.bf16.gmra.mxu0 %v3211
      %v3309 = vpop.f32.mrf.mxu0
      %v3310 = vadd.f32 0.0, %v3309
      %v3311 = vpop.f32.mrf.mxu0
      %v3312 = vpop.f32.mrf.mxu0
      %v3313 = vadd.f32 0.0, %v3312
      %v3314 = vpop.f32.mrf.mxu0
      %3315 = vmatprep.mubr.bf16.mxu0 0
      %3316 = vmatmul.mubr.bf16.gmra.mxu0 %v3212
      %v3317 = vpop.f32.mrf.mxu0
      %v3318 = vadd.f32 0.0, %v3317
      %v3319 = vpop.f32.mrf.mxu0
      %v3320 = vpop.f32.mrf.mxu0
      %v3321 = vadd.f32 0.0, %v3320
      %v3322 = vpop.f32.mrf.mxu0
      %3323 = vmatprep.mubr.bf16.mxu0 0
      %3324 = vmatmul.mubr.bf16.gmra.mxu0 %v3213
      %v3325 = vpop.f32.mrf.mxu0
      %v3326 = vadd.f32 0.0, %v3325
      %v3327 = vpop.f32.mrf.mxu0
      %v3328 = vpop.f32.mrf.mxu0
      %v3329 = vadd.f32 0.0, %v3328
      %v3330 = vpop.f32.mrf.mxu0
      %3331 = vmatprep.mubr.bf16.mxu0 0
      %3332 = vmatmul.mubr.bf16.gmra.mxu0 %v3214
      %v3333 = vpop.f32.mrf.mxu0
      %v3334 = vadd.f32 0.0, %v3333
      %v3335 = vpop.f32.mrf.mxu0
      %v3336 = vpop.f32.mrf.mxu0
      %v3337 = vadd.f32 0.0, %v3336
      %v3338 = vpop.f32.mrf.mxu0
      %3339 = vmatprep.mubr.bf16.mxu0 0
      %3340 = vmatmul.mubr.bf16.gmra.mxu0 %v3215
      %v3341 = vpop.f32.mrf.mxu0
      %v3342 = vadd.f32 0.0, %v3341
      %v3343 = vpop.f32.mrf.mxu0
      %v3344 = vpop.f32.mrf.mxu0
      %v3345 = vadd.f32 0.0, %v3344
      %v3346 = vpop.f32.mrf.mxu0
      %3347 = vmatprep.mubr.bf16.mxu0 0
      %3348 = vmatmul.mubr.bf16.gmra.mxu0 %v3216
      %v3349 = vpop.f32.mrf.mxu0
      %v3350 = vadd.f32 0.0, %v3349
      %v3351 = vpop.f32.mrf.mxu0
      %v3352 = vpop.f32.mrf.mxu0
      %v3353 = vadd.f32 0.0, %v3352
      %v3354 = vpop.f32.mrf.mxu0
      %3355 = vmatprep.mubr.bf16.mxu0 0
      %3356 = vmatmul.mubr.bf16.gmra.mxu0 %v3217
      %v3357 = vpop.f32.mrf.mxu0
      %v3358 = vadd.f32 0.0, %v3357
      %v3359 = vpop.f32.mrf.mxu0
      %v3360 = vpop.f32.mrf.mxu0
      %v3361 = vadd.f32 0.0, %v3360
      %v3362 = vpop.f32.mrf.mxu0
      %3363 = vmatprep.mubr.bf16.mxu0 0
      %3364 = vmatmul.mubr.bf16.gmra.mxu0 %v3218
      %v3365 = vpop.f32.mrf.mxu0
      %v3366 = vadd.f32 0.0, %v3365
      %v3367 = vpop.f32.mrf.mxu0
      %v3368 = vpop.f32.mrf.mxu0
      %v3369 = vadd.f32 0.0, %v3368
      %v3370 = vpop.f32.mrf.mxu0
      %3371 = vdwg.mxu0
      %v3372 = vadd.f32 %v3130, %v3310
      %v3373 = vadd.f32 %v3131, %v3313
      %v3374 = vadd.f32 %v3132, %v3318
      %v3375 = vadd.f32 %v3133, %v3321
      %v3376 = vadd.f32 %v3134, %v3326
      %v3377 = vadd.f32 %v3135, %v3329
      %v3378 = vadd.f32 %v3136, %v3334
      %v3379 = vadd.f32 %v3137, %v3337
      %v3380 = vadd.f32 %v3138, %v3342
      %v3381 = vadd.f32 %v3139, %v3345
      %v3382 = vadd.f32 %v3140, %v3350
      %v3383 = vadd.f32 %v3141, %v3353
      %v3384 = vadd.f32 %v3142, %v3358
      %v3385 = vadd.f32 %v3143, %v3361
      %v3386 = vadd.f32 %v3144, %v3366
      %v3387 = vadd.f32 %v3145, %v3369
      %s3388 = scalar_lea.vmem %s3, 448
      %v3389 = vld [vmem:[%s3388] sm:$0xf]
      %v3390 = vld [vmem:[%s3388 + $0x4] sm:$0xf]
      %v3391 = vld [vmem:[%s3388 + $0x8] sm:$0xf]
      %v3392 = vld [vmem:[%s3388 + $0xc] sm:$0xf]
      %v3393 = vld [vmem:[%s3388 + $0x10] sm:$0xf]
      %v3394 = vld [vmem:[%s3388 + $0x14] sm:$0xf]
      %v3395 = vld [vmem:[%s3388 + $0x18] sm:$0xf]
      %v3396 = vld [vmem:[%s3388 + $0x1c] sm:$0xf]
      %v3397 = vld [vmem:[%s3388 + $0x20] sm:$0xf]
      %v3398 = vld [vmem:[%s3388 + $0x24] sm:$0xf]
      %v3399 = vld [vmem:[%s3388 + $0x28] sm:$0xf]
      %v3400 = vld [vmem:[%s3388 + $0x2c] sm:$0xf]
      %v3401 = vld [vmem:[%s3388 + $0x30] sm:$0xf]
      %v3402 = vld [vmem:[%s3388 + $0x34] sm:$0xf]
      %v3403 = vld [vmem:[%s3388 + $0x38] sm:$0xf]
      %v3404 = vld [vmem:[%s3388 + $0x3c] sm:$0xf]
      %v3407 = vunpack.c.l.b16 %v577
      %v3408 = vunpack.c.l.b16 %v578
      %v3409 = vpack.c.b16 %v3407, %v974
      %v3410 = vpack.c.b16 %v3408, %v3408
      %v3412 = vshll.u32 %v3409, 16
      %v3414 = vrot.slane %v3412, 1
      %v3415 = vsel %vm984, %v1047, %v3414
      %v3416 = vshrl.u32 %v3409, 16
      %v3418 = vor.u32 %v3416, %v3414
      %v3420 = vshll.u32 %v3410, 16
      %v3422 = vrot.slane %v3420, 1
      %v3423 = vsel %vm984, %v3418, %v3422
      %v3442 = vunpack.c.l.b16 %v3389
      %v3443 = vunpack.c.l.b16 %v3390
      %v3444 = vunpack.c.l.b16 %v3391
      %v3445 = vunpack.c.l.b16 %v3392
      %v3446 = vunpack.c.l.b16 %v3393
      %v3447 = vunpack.c.l.b16 %v3394
      %v3448 = vunpack.c.l.b16 %v3395
      %v3449 = vunpack.c.l.b16 %v3396
      %v3450 = vunpack.c.l.b16 %v3397
      %v3451 = vunpack.c.l.b16 %v3398
      %v3452 = vunpack.c.l.b16 %v3399
      %v3453 = vunpack.c.l.b16 %v3400
      %v3454 = vunpack.c.l.b16 %v3401
      %v3455 = vunpack.c.l.b16 %v3402
      %v3456 = vunpack.c.l.b16 %v3403
      %v3457 = vunpack.c.l.b16 %v3404
      %v3458 = vpack.c.b16 %v3443, %v3442
      %v3459 = vpack.c.b16 %v3445, %v3444
      %v3460 = vpack.c.b16 %v3447, %v3446
      %v3461 = vpack.c.b16 %v3449, %v3448
      %v3462 = vpack.c.b16 %v3451, %v3450
      %v3463 = vpack.c.b16 %v3453, %v3452
      %v3464 = vpack.c.b16 %v3455, %v3454
      %v3465 = vpack.c.b16 %v3457, %v3456
      %3474 = vmatprep.subr.bf16.mxu0 0
      %3475 = vmatpush1.bf16.msra.mxu0 %v3465
      %3476 = vmatprep.subr.bf16.mxu0 0
      %3477 = vmatpush1.bf16.msra.mxu0 %v3464
      %3478 = vmatprep.subr.bf16.mxu0 0
      %3479 = vmatpush1.bf16.msra.mxu0 %v3463
      %3480 = vmatprep.subr.bf16.mxu0 0
      %3481 = vmatpush1.bf16.msra.mxu0 %v3462
      %3482 = vmatprep.subr.bf16.mxu0 0
      %3483 = vmatpush1.bf16.msra.mxu0 %v3461
      %3484 = vmatprep.subr.bf16.mxu0 0
      %3485 = vmatpush1.bf16.msra.mxu0 %v3460
      %3486 = vmatprep.subr.bf16.mxu0 0
      %3487 = vmatpush1.bf16.msra.mxu0 %v3459
      %3488 = vmatprep.subr.bf16.mxu0 0
      %3489 = vmatpush1.bf16.msra.mxu0 %v3458
      %3490 = vmatprep.subr.bf16.mxu0 0
      %3491 = vmatpush2.bf16.msra.mxu0 0
      %3492 = vmatprep.subr.bf16.mxu0 0
      %3493 = vmatpush2.bf16.msra.mxu0 0
      %3494 = vmatprep.subr.bf16.mxu0 0
      %3495 = vmatpush2.bf16.msra.mxu0 0
      %3496 = vmatprep.subr.bf16.mxu0 0
      %3497 = vmatpush2.bf16.msra.mxu0 0
      %3498 = vmatprep.subr.bf16.mxu0 0
      %3499 = vmatpush2.bf16.msra.mxu0 0
      %3500 = vmatprep.subr.bf16.mxu0 0
      %3501 = vmatpush2.bf16.msra.mxu0 0
      %3502 = vmatprep.subr.bf16.mxu0 0
      %3503 = vmatpush2.bf16.msra.mxu0 0
      %3504 = vmatprep.subr.bf16.mxu0 0
      %3505 = vmatpush2.bf16.msra.mxu0 0
      %3506 = vmatprep.mubr.bf16.mxu0 0
      %3507 = vmatmul.mubr.bf16.gmra.mxu0 %v1004
      %v3508 = vpop.f32.mrf.mxu0
      %v3509 = vadd.f32 0.0, %v3508
      %v3510 = vpop.f32.mrf.mxu0
      %v3511 = vpop.f32.mrf.mxu0
      %v3512 = vadd.f32 0.0, %v3511
      %v3513 = vpop.f32.mrf.mxu0
      %3514 = vmatprep.mubr.bf16.mxu0 0
      %3515 = vmatmul.mubr.bf16.gmra.mxu0 %v1012
      %v3516 = vpop.f32.mrf.mxu0
      %v3517 = vadd.f32 0.0, %v3516
      %v3518 = vpop.f32.mrf.mxu0
      %v3519 = vpop.f32.mrf.mxu0
      %v3520 = vadd.f32 0.0, %v3519
      %v3521 = vpop.f32.mrf.mxu0
      %3522 = vmatprep.mubr.bf16.mxu0 0
      %3523 = vmatmul.mubr.bf16.gmra.mxu0 %v1020
      %v3524 = vpop.f32.mrf.mxu0
      %v3525 = vadd.f32 0.0, %v3524
      %v3526 = vpop.f32.mrf.mxu0
      %v3527 = vpop.f32.mrf.mxu0
      %v3528 = vadd.f32 0.0, %v3527
      %v3529 = vpop.f32.mrf.mxu0
      %3530 = vmatprep.mubr.bf16.mxu0 0
      %3531 = vmatmul.mubr.bf16.gmra.mxu0 %v1028
      %v3532 = vpop.f32.mrf.mxu0
      %v3533 = vadd.f32 0.0, %v3532
      %v3534 = vpop.f32.mrf.mxu0
      %v3535 = vpop.f32.mrf.mxu0
      %v3536 = vadd.f32 0.0, %v3535
      %v3537 = vpop.f32.mrf.mxu0
      %3538 = vmatprep.mubr.bf16.mxu0 0
      %3539 = vmatmul.mubr.bf16.gmra.mxu0 %v1036
      %v3540 = vpop.f32.mrf.mxu0
      %v3541 = vadd.f32 0.0, %v3540
      %v3542 = vpop.f32.mrf.mxu0
      %v3543 = vpop.f32.mrf.mxu0
      %v3544 = vadd.f32 0.0, %v3543
      %v3545 = vpop.f32.mrf.mxu0
      %3546 = vmatprep.mubr.bf16.mxu0 0
      %3547 = vmatmul.mubr.bf16.gmra.mxu0 %v1044
      %v3548 = vpop.f32.mrf.mxu0
      %v3549 = vadd.f32 0.0, %v3548
      %v3550 = vpop.f32.mrf.mxu0
      %v3551 = vpop.f32.mrf.mxu0
      %v3552 = vadd.f32 0.0, %v3551
      %v3553 = vpop.f32.mrf.mxu0
      %3554 = vmatprep.mubr.bf16.mxu0 0
      %3555 = vmatmul.mubr.bf16.gmra.mxu0 %v3415
      %v3556 = vpop.f32.mrf.mxu0
      %v3557 = vadd.f32 0.0, %v3556
      %v3558 = vpop.f32.mrf.mxu0
      %v3559 = vpop.f32.mrf.mxu0
      %v3560 = vadd.f32 0.0, %v3559
      %v3561 = vpop.f32.mrf.mxu0
      %3562 = vmatprep.mubr.bf16.mxu0 0
      %3563 = vmatmul.mubr.bf16.gmra.mxu0 %v3423
      %v3564 = vpop.f32.mrf.mxu0
      %v3565 = vadd.f32 0.0, %v3564
      %v3566 = vpop.f32.mrf.mxu0
      %v3567 = vpop.f32.mrf.mxu0
      %v3568 = vadd.f32 0.0, %v3567
      %v3569 = vpop.f32.mrf.mxu0
      %3570 = vdwg.mxu0
      %v3571 = vadd.f32 %v3372, %v3509
      %v3572 = vadd.f32 %v3373, %v3512
      %v3573 = vadd.f32 %v3374, %v3517
      %v3574 = vadd.f32 %v3375, %v3520
      %v3575 = vadd.f32 %v3376, %v3525
      %v3576 = vadd.f32 %v3377, %v3528
      %v3577 = vadd.f32 %v3378, %v3533
      %v3578 = vadd.f32 %v3379, %v3536
      %v3579 = vadd.f32 %v3380, %v3541
      %v3580 = vadd.f32 %v3381, %v3544
      %v3581 = vadd.f32 %v3382, %v3549
      %v3582 = vadd.f32 %v3383, %v3552
      %v3583 = vadd.f32 %v3384, %v3557
      %v3584 = vadd.f32 %v3385, %v3560
      %v3585 = vadd.f32 %v3386, %v3565
      %v3586 = vadd.f32 %v3387, %v3568
      %v3587 = vsel %vm2182, %v562, 0
      %v3588 = vsel %vm2183, %v563, 0
      %v3589 = vsel %vm2184, %v564, 0
      %v3590 = vsel %vm2185, %v565, 0
      %v3591 = vsel %vm2186, %v566, 0
      %v3592 = vsel %vm2187, %v567, 0
      %v3593 = vsel %vm2188, %v568, 0
      %v3594 = vsel %vm2189, %v569, 0
      %v3595 = vsel %vm2190, %v570, 0
      %v3596 = vsel %vm2191, %v571, 0
      %v3597 = vsel %vm2192, %v572, 0
      %v3598 = vsel %vm2193, %v573, 0
      %v3599 = vsel %vm2194, %v574, 0
      %v3600 = vsel %vm2195, %v575, 0
      %v3601 = vsel %vm2196, %v576, 0
      %v3602 = vsel %vm2197, %v577, 0
      %v3603 = vsel %vm2198, %v578, 0
      %s3604 = scalar_lea.vmem %s3, 512
      %v3605 = vld [vmem:[%s3604] sm:$0xf]
      %v3606 = vld [vmem:[%s3604 + $0x4] sm:$0xf]
      %v3607 = vld [vmem:[%s3604 + $0x8] sm:$0xf]
      %v3608 = vld [vmem:[%s3604 + $0xc] sm:$0xf]
      %v3609 = vld [vmem:[%s3604 + $0x10] sm:$0xf]
      %v3610 = vld [vmem:[%s3604 + $0x14] sm:$0xf]
      %v3611 = vld [vmem:[%s3604 + $0x18] sm:$0xf]
      %v3612 = vld [vmem:[%s3604 + $0x1c] sm:$0xf]
      %v3613 = vld [vmem:[%s3604 + $0x20] sm:$0xf]
      %v3614 = vld [vmem:[%s3604 + $0x24] sm:$0xf]
      %v3615 = vld [vmem:[%s3604 + $0x28] sm:$0xf]
      %v3616 = vld [vmem:[%s3604 + $0x2c] sm:$0xf]
      %v3617 = vld [vmem:[%s3604 + $0x30] sm:$0xf]
      %v3618 = vld [vmem:[%s3604 + $0x34] sm:$0xf]
      %v3619 = vld [vmem:[%s3604 + $0x38] sm:$0xf]
      %v3620 = vld [vmem:[%s3604 + $0x3c] sm:$0xf]
      %v3638 = vunpack.c.l.b16 %v3587
      %v3639 = vunpack.c.l.b16 %v3588
      %v3640 = vunpack.c.l.b16 %v3589
      %v3641 = vunpack.c.l.b16 %v3590
      %v3642 = vunpack.c.l.b16 %v3591
      %v3643 = vunpack.c.l.b16 %v3592
      %v3644 = vunpack.c.l.b16 %v3593
      %v3645 = vunpack.c.l.b16 %v3594
      %v3646 = vunpack.c.l.b16 %v3595
      %v3647 = vunpack.c.l.b16 %v3596
      %v3648 = vunpack.c.l.b16 %v3597
      %v3649 = vunpack.c.l.b16 %v3598
      %v3650 = vunpack.c.l.b16 %v3599
      %v3651 = vunpack.c.l.b16 %v3600
      %v3652 = vunpack.c.l.b16 %v3601
      %v3653 = vunpack.c.l.b16 %v3602
      %v3654 = vunpack.c.l.b16 %v3603
      %v3655 = vpack.c.b16 %v3639, %v3638
      %v3656 = vpack.c.b16 %v3641, %v3640
      %v3657 = vpack.c.b16 %v3643, %v3642
      %v3658 = vpack.c.b16 %v3645, %v3644
      %v3659 = vpack.c.b16 %v3647, %v3646
      %v3660 = vpack.c.b16 %v3649, %v3648
      %v3661 = vpack.c.b16 %v3651, %v3650
      %v3662 = vpack.c.b16 %v3653, %v3652
      %v3663 = vpack.c.b16 %v3654, %v3654
      %v3664 = vrot.slane %v3655, 1
      %v3665 = vrot.slane %v3656, 1
      %v3666 = vsel %vm2276, %v3664, %v3665
      %v3667 = vrot.slane %v3657, 1
      %v3668 = vsel %vm2276, %v3665, %v3667
      %v3669 = vrot.slane %v3658, 1
      %v3670 = vsel %vm2276, %v3667, %v3669
      %v3671 = vrot.slane %v3659, 1
      %v3672 = vsel %vm2276, %v3669, %v3671
      %v3673 = vrot.slane %v3660, 1
      %v3674 = vsel %vm2276, %v3671, %v3673
      %v3675 = vrot.slane %v3661, 1
      %v3676 = vsel %vm2276, %v3673, %v3675
      %v3677 = vrot.slane %v3662, 1
      %v3678 = vsel %vm2276, %v3675, %v3677
      %v3679 = vrot.slane %v3663, 1
      %v3680 = vsel %vm2276, %v3677, %v3679
      %v3705 = vunpack.c.l.b16 %v3605
      %v3706 = vunpack.c.l.b16 %v3606
      %v3707 = vunpack.c.l.b16 %v3607
      %v3708 = vunpack.c.l.b16 %v3608
      %v3709 = vunpack.c.l.b16 %v3609
      %v3710 = vunpack.c.l.b16 %v3610
      %v3711 = vunpack.c.l.b16 %v3611
      %v3712 = vunpack.c.l.b16 %v3612
      %v3713 = vunpack.c.l.b16 %v3613
      %v3714 = vunpack.c.l.b16 %v3614
      %v3715 = vunpack.c.l.b16 %v3615
      %v3716 = vunpack.c.l.b16 %v3616
      %v3717 = vunpack.c.l.b16 %v3617
      %v3718 = vunpack.c.l.b16 %v3618
      %v3719 = vunpack.c.l.b16 %v3619
      %v3720 = vunpack.c.l.b16 %v3620
      %v3721 = vpack.c.b16 %v3706, %v3705
      %v3722 = vpack.c.b16 %v3708, %v3707
      %v3723 = vpack.c.b16 %v3710, %v3709
      %v3724 = vpack.c.b16 %v3712, %v3711
      %v3725 = vpack.c.b16 %v3714, %v3713
      %v3726 = vpack.c.b16 %v3716, %v3715
      %v3727 = vpack.c.b16 %v3718, %v3717
      %v3728 = vpack.c.b16 %v3720, %v3719
      %3737 = vmatprep.subr.bf16.mxu0 0
      %3738 = vmatpush1.bf16.msra.mxu0 %v3728
      %3739 = vmatprep.subr.bf16.mxu0 0
      %3740 = vmatpush1.bf16.msra.mxu0 %v3727
      %3741 = vmatprep.subr.bf16.mxu0 0
      %3742 = vmatpush1.bf16.msra.mxu0 %v3726
      %3743 = vmatprep.subr.bf16.mxu0 0
      %3744 = vmatpush1.bf16.msra.mxu0 %v3725
      %3745 = vmatprep.subr.bf16.mxu0 0
      %3746 = vmatpush1.bf16.msra.mxu0 %v3724
      %3747 = vmatprep.subr.bf16.mxu0 0
      %3748 = vmatpush1.bf16.msra.mxu0 %v3723
      %3749 = vmatprep.subr.bf16.mxu0 0
      %3750 = vmatpush1.bf16.msra.mxu0 %v3722
      %3751 = vmatprep.subr.bf16.mxu0 0
      %3752 = vmatpush1.bf16.msra.mxu0 %v3721
      %3753 = vmatprep.subr.bf16.mxu0 0
      %3754 = vmatpush2.bf16.msra.mxu0 0
      %3755 = vmatprep.subr.bf16.mxu0 0
      %3756 = vmatpush2.bf16.msra.mxu0 0
      %3757 = vmatprep.subr.bf16.mxu0 0
      %3758 = vmatpush2.bf16.msra.mxu0 0
      %3759 = vmatprep.subr.bf16.mxu0 0
      %3760 = vmatpush2.bf16.msra.mxu0 0
      %3761 = vmatprep.subr.bf16.mxu0 0
      %3762 = vmatpush2.bf16.msra.mxu0 0
      %3763 = vmatprep.subr.bf16.mxu0 0
      %3764 = vmatpush2.bf16.msra.mxu0 0
      %3765 = vmatprep.subr.bf16.mxu0 0
      %3766 = vmatpush2.bf16.msra.mxu0 0
      %3767 = vmatprep.subr.bf16.mxu0 0
      %3768 = vmatpush2.bf16.msra.mxu0 0
      %3769 = vmatprep.mubr.bf16.mxu0 0
      %3770 = vmatmul.mubr.bf16.gmra.mxu0 %v3666
      %v3771 = vpop.f32.mrf.mxu0
      %v3772 = vadd.f32 0.0, %v3771
      %v3773 = vpop.f32.mrf.mxu0
      %v3774 = vpop.f32.mrf.mxu0
      %v3775 = vadd.f32 0.0, %v3774
      %v3776 = vpop.f32.mrf.mxu0
      %3777 = vmatprep.mubr.bf16.mxu0 0
      %3778 = vmatmul.mubr.bf16.gmra.mxu0 %v3668
      %v3779 = vpop.f32.mrf.mxu0
      %v3780 = vadd.f32 0.0, %v3779
      %v3781 = vpop.f32.mrf.mxu0
      %v3782 = vpop.f32.mrf.mxu0
      %v3783 = vadd.f32 0.0, %v3782
      %v3784 = vpop.f32.mrf.mxu0
      %3785 = vmatprep.mubr.bf16.mxu0 0
      %3786 = vmatmul.mubr.bf16.gmra.mxu0 %v3670
      %v3787 = vpop.f32.mrf.mxu0
      %v3788 = vadd.f32 0.0, %v3787
      %v3789 = vpop.f32.mrf.mxu0
      %v3790 = vpop.f32.mrf.mxu0
      %v3791 = vadd.f32 0.0, %v3790
      %v3792 = vpop.f32.mrf.mxu0
      %3793 = vmatprep.mubr.bf16.mxu0 0
      %3794 = vmatmul.mubr.bf16.gmra.mxu0 %v3672
      %v3795 = vpop.f32.mrf.mxu0
      %v3796 = vadd.f32 0.0, %v3795
      %v3797 = vpop.f32.mrf.mxu0
      %v3798 = vpop.f32.mrf.mxu0
      %v3799 = vadd.f32 0.0, %v3798
      %v3800 = vpop.f32.mrf.mxu0
      %3801 = vmatprep.mubr.bf16.mxu0 0
      %3802 = vmatmul.mubr.bf16.gmra.mxu0 %v3674
      %v3803 = vpop.f32.mrf.mxu0
      %v3804 = vadd.f32 0.0, %v3803
      %v3805 = vpop.f32.mrf.mxu0
      %v3806 = vpop.f32.mrf.mxu0
      %v3807 = vadd.f32 0.0, %v3806
      %v3808 = vpop.f32.mrf.mxu0
      %3809 = vmatprep.mubr.bf16.mxu0 0
      %3810 = vmatmul.mubr.bf16.gmra.mxu0 %v3676
      %v3811 = vpop.f32.mrf.mxu0
      %v3812 = vadd.f32 0.0, %v3811
      %v3813 = vpop.f32.mrf.mxu0
      %v3814 = vpop.f32.mrf.mxu0
      %v3815 = vadd.f32 0.0, %v3814
      %v3816 = vpop.f32.mrf.mxu0
      %3817 = vmatprep.mubr.bf16.mxu0 0
      %3818 = vmatmul.mubr.bf16.gmra.mxu0 %v3678
      %v3819 = vpop.f32.mrf.mxu0
      %v3820 = vadd.f32 0.0, %v3819
      %v3821 = vpop.f32.mrf.mxu0
      %v3822 = vpop.f32.mrf.mxu0
      %v3823 = vadd.f32 0.0, %v3822
      %v3824 = vpop.f32.mrf.mxu0
      %3825 = vmatprep.mubr.bf16.mxu0 0
      %3826 = vmatmul.mubr.bf16.gmra.mxu0 %v3680
      %v3827 = vpop.f32.mrf.mxu0
      %v3828 = vadd.f32 0.0, %v3827
      %v3829 = vpop.f32.mrf.mxu0
      %v3830 = vpop.f32.mrf.mxu0
      %v3831 = vadd.f32 0.0, %v3830
      %v3832 = vpop.f32.mrf.mxu0
      %3833 = vdwg.mxu0
      %v3834 = vadd.f32 %v3571, %v3772
      %v3835 = vadd.f32 %v3572, %v3775
      %v3836 = vadd.f32 %v3573, %v3780
      %v3837 = vadd.f32 %v3574, %v3783
      %v3838 = vadd.f32 %v3575, %v3788
      %v3839 = vadd.f32 %v3576, %v3791
      %v3840 = vadd.f32 %v3577, %v3796
      %v3841 = vadd.f32 %v3578, %v3799
      %v3842 = vadd.f32 %v3579, %v3804
      %v3843 = vadd.f32 %v3580, %v3807
      %v3844 = vadd.f32 %v3581, %v3812
      %v3845 = vadd.f32 %v3582, %v3815
      %v3846 = vadd.f32 %v3583, %v3820
      %v3847 = vadd.f32 %v3584, %v3823
      %v3848 = vadd.f32 %v3585, %v3828
      %v3849 = vadd.f32 %v3586, %v3831
      %v3850 = vld [vmem:[%s4] sm:$0x1]
      %v3852 = vlaneseq
      %v3853 = vshrl.u32 %v3852, 7
      %v3854 = vsub.s32 0, %v3853
      %v3855 = vrot.slane %v3850, %v3854
      %v3857 = vadd.f32 %v3834, %v3855
      %v3858 = vadd.f32 %v3835, %v3855
      %v3859 = vadd.f32 %v3836, %v3855
      %v3860 = vadd.f32 %v3837, %v3855
      %v3861 = vadd.f32 %v3838, %v3855
      %v3862 = vadd.f32 %v3839, %v3855
      %v3863 = vadd.f32 %v3840, %v3855
      %v3864 = vadd.f32 %v3841, %v3855
      %v3865 = vadd.f32 %v3842, %v3855
      %v3866 = vadd.f32 %v3843, %v3855
      %v3867 = vadd.f32 %v3844, %v3855
      %v3868 = vadd.f32 %v3845, %v3855
      %v3869 = vadd.f32 %v3846, %v3855
      %v3870 = vadd.f32 %v3847, %v3855
      %v3871 = vadd.f32 %v3848, %v3855
      %v3872 = vadd.f32 %v3849, %v3855
      %v3873 = vmax.f32 %v3857, 0.0
      %v3874 = vmax.f32 %v3858, 0.0
      %v3875 = vmax.f32 %v3859, 0.0
      %v3876 = vmax.f32 %v3860, 0.0
      %v3877 = vmax.f32 %v3861, 0.0
      %v3878 = vmax.f32 %v3862, 0.0
      %v3879 = vmax.f32 %v3863, 0.0
      %v3880 = vmax.f32 %v3864, 0.0
      %v3881 = vmax.f32 %v3865, 0.0
      %v3882 = vmax.f32 %v3866, 0.0
      %v3883 = vmax.f32 %v3867, 0.0
      %v3884 = vmax.f32 %v3868, 0.0
      %v3885 = vmax.f32 %v3869, 0.0
      %v3886 = vmax.f32 %v3870, 0.0
      %v3887 = vmax.f32 %v3871, 0.0
      %v3888 = vmax.f32 %v3872, 0.0
      %v3889 = vpack.c.bf16 %v3874, %v3873
      %v3890 = vpack.c.bf16 %v3876, %v3875
      %v3891 = vpack.c.bf16 %v3878, %v3877
      %v3892 = vpack.c.bf16 %v3880, %v3879
      %v3893 = vpack.c.bf16 %v3882, %v3881
      %v3894 = vpack.c.bf16 %v3884, %v3883
      %v3895 = vpack.c.bf16 %v3886, %v3885
      %v3896 = vpack.c.bf16 %v3888, %v3887
      %v3897 = vld [vmem:[%s5] sm:$0xf]
      %v3898 = vld [vmem:[%s5 + $0x4] sm:$0xf]
      %v3899 = vld [vmem:[%s5 + $0x8] sm:$0xf]
      %v3900 = vld [vmem:[%s5 + $0xc] sm:$0xf]
      %v3901 = vld [vmem:[%s5 + $0x10] sm:$0xf]
      %v3902 = vld [vmem:[%s5 + $0x14] sm:$0xf]
      %v3903 = vld [vmem:[%s5 + $0x18] sm:$0xf]
      %v3904 = vld [vmem:[%s5 + $0x1c] sm:$0xf]
      %v3905 = vld [vmem:[%s5 + $0x20] sm:$0xf]
      %v3906 = vld [vmem:[%s5 + $0x24] sm:$0xf]
      %v3907 = vld [vmem:[%s5 + $0x28] sm:$0xf]
      %v3908 = vld [vmem:[%s5 + $0x2c] sm:$0xf]
      %v3909 = vld [vmem:[%s5 + $0x30] sm:$0xf]
      %v3910 = vld [vmem:[%s5 + $0x34] sm:$0xf]
      %v3911 = vld [vmem:[%s5 + $0x38] sm:$0xf]
      %v3912 = vld [vmem:[%s5 + $0x3c] sm:$0xf]
      %v3913 = vld [vmem:[%s6] sm:$0x1]
      %v3915 = vlaneseq
      %v3916 = vshrl.u32 %v3915, 7
      %v3917 = vsub.s32 0, %v3916
      %v3918 = vrot.slane %v3913, %v3917
      %v3936 = vunpack.c.l.b16 %v3897
      %v3937 = vunpack.c.l.b16 %v3898
      %v3938 = vunpack.c.l.b16 %v3899
      %v3939 = vunpack.c.l.b16 %v3900
      %v3940 = vunpack.c.l.b16 %v3901
      %v3941 = vunpack.c.l.b16 %v3902
      %v3942 = vunpack.c.l.b16 %v3903
      %v3943 = vunpack.c.l.b16 %v3904
      %v3944 = vunpack.c.l.b16 %v3905
      %v3945 = vunpack.c.l.b16 %v3906
      %v3946 = vunpack.c.l.b16 %v3907
      %v3947 = vunpack.c.l.b16 %v3908
      %v3948 = vunpack.c.l.b16 %v3909
      %v3949 = vunpack.c.l.b16 %v3910
      %v3950 = vunpack.c.l.b16 %v3911
      %v3951 = vunpack.c.l.b16 %v3912
      %v3952 = vpack.c.b16 %v3937, %v3936
      %v3953 = vpack.c.b16 %v3939, %v3938
      %v3954 = vpack.c.b16 %v3941, %v3940
      %v3955 = vpack.c.b16 %v3943, %v3942
      %v3956 = vpack.c.b16 %v3945, %v3944
      %v3957 = vpack.c.b16 %v3947, %v3946
      %v3958 = vpack.c.b16 %v3949, %v3948
      %v3959 = vpack.c.b16 %v3951, %v3950
      %3968 = vmatprep.subr.bf16.mxu0 0
      %3969 = vmatpush1.bf16.msra.mxu0 %v3959
      %3970 = vmatprep.subr.bf16.mxu0 0
      %3971 = vmatpush1.bf16.msra.mxu0 %v3958
      %3972 = vmatprep.subr.bf16.mxu0 0
      %3973 = vmatpush1.bf16.msra.mxu0 %v3957
      %3974 = vmatprep.subr.bf16.mxu0 0
      %3975 = vmatpush1.bf16.msra.mxu0 %v3956
      %3976 = vmatprep.subr.bf16.mxu0 0
      %3977 = vmatpush1.bf16.msra.mxu0 %v3955
      %3978 = vmatprep.subr.bf16.mxu0 0
      %3979 = vmatpush1.bf16.msra.mxu0 %v3954
      %3980 = vmatprep.subr.bf16.mxu0 0
      %3981 = vmatpush1.bf16.msra.mxu0 %v3953
      %3982 = vmatprep.subr.bf16.mxu0 0
      %3983 = vmatpush1.bf16.msra.mxu0 %v3952
      %3984 = vmatprep.subr.bf16.mxu0 0
      %3985 = vmatpush2.bf16.msra.mxu0 0
      %3986 = vmatprep.subr.bf16.mxu0 0
      %3987 = vmatpush2.bf16.msra.mxu0 0
      %3988 = vmatprep.subr.bf16.mxu0 0
      %3989 = vmatpush2.bf16.msra.mxu0 0
      %3990 = vmatprep.subr.bf16.mxu0 0
      %3991 = vmatpush2.bf16.msra.mxu0 0
      %3992 = vmatprep.subr.bf16.mxu0 0
      %3993 = vmatpush2.bf16.msra.mxu0 0
      %3994 = vmatprep.subr.bf16.mxu0 0
      %3995 = vmatpush2.bf16.msra.mxu0 0
      %3996 = vmatprep.subr.bf16.mxu0 0
      %3997 = vmatpush2.bf16.msra.mxu0 0
      %3998 = vmatprep.subr.bf16.mxu0 0
      %3999 = vmatpush2.bf16.msra.mxu0 0
      %4000 = vmatprep.mubr.bf16.mxu0 0
      %4001 = vmatmul.mubr.bf16.gmra.mxu0 %v3889
      %v4002 = vpop.f32.mrf.mxu0
      %v4003 = vadd.f32 %v3918, %v4002
      %v4004 = vpop.f32.mrf.mxu0
      %v4005 = vpop.f32.mrf.mxu0
      %v4006 = vadd.f32 %v3918, %v4005
      %v4007 = vpop.f32.mrf.mxu0
      %4008 = vmatprep.mubr.bf16.mxu0 0
      %4009 = vmatmul.mubr.bf16.gmra.mxu0 %v3890
      %v4010 = vpop.f32.mrf.mxu0
      %v4011 = vadd.f32 %v3918, %v4010
      %v4012 = vpop.f32.mrf.mxu0
      %v4013 = vpop.f32.mrf.mxu0
      %v4014 = vadd.f32 %v3918, %v4013
      %v4015 = vpop.f32.mrf.mxu0
      %4016 = vmatprep.mubr.bf16.mxu0 0
      %4017 = vmatmul.mubr.bf16.gmra.mxu0 %v3891
      %v4018 = vpop.f32.mrf.mxu0
      %v4019 = vadd.f32 %v3918, %v4018
      %v4020 = vpop.f32.mrf.mxu0
      %v4021 = vpop.f32.mrf.mxu0
      %v4022 = vadd.f32 %v3918, %v4021
      %v4023 = vpop.f32.mrf.mxu0
      %4024 = vmatprep.mubr.bf16.mxu0 0
      %4025 = vmatmul.mubr.bf16.gmra.mxu0 %v3892
      %v4026 = vpop.f32.mrf.mxu0
      %v4027 = vadd.f32 %v3918, %v4026
      %v4028 = vpop.f32.mrf.mxu0
      %v4029 = vpop.f32.mrf.mxu0
      %v4030 = vadd.f32 %v3918, %v4029
      %v4031 = vpop.f32.mrf.mxu0
      %4032 = vmatprep.mubr.bf16.mxu0 0
      %4033 = vmatmul.mubr.bf16.gmra.mxu0 %v3893
      %v4034 = vpop.f32.mrf.mxu0
      %v4035 = vadd.f32 %v3918, %v4034
      %v4036 = vpop.f32.mrf.mxu0
      %v4037 = vpop.f32.mrf.mxu0
      %v4038 = vadd.f32 %v3918, %v4037
      %v4039 = vpop.f32.mrf.mxu0
      %4040 = vmatprep.mubr.bf16.mxu0 0
      %4041 = vmatmul.mubr.bf16.gmra.mxu0 %v3894
      %v4042 = vpop.f32.mrf.mxu0
      %v4043 = vadd.f32 %v3918, %v4042
      %v4044 = vpop.f32.mrf.mxu0
      %v4045 = vpop.f32.mrf.mxu0
      %v4046 = vadd.f32 %v3918, %v4045
      %v4047 = vpop.f32.mrf.mxu0
      %4048 = vmatprep.mubr.bf16.mxu0 0
      %4049 = vmatmul.mubr.bf16.gmra.mxu0 %v3895
      %v4050 = vpop.f32.mrf.mxu0
      %v4051 = vadd.f32 %v3918, %v4050
      %v4052 = vpop.f32.mrf.mxu0
      %v4053 = vpop.f32.mrf.mxu0
      %v4054 = vadd.f32 %v3918, %v4053
      %v4055 = vpop.f32.mrf.mxu0
      %4056 = vmatprep.mubr.bf16.mxu0 0
      %4057 = vmatmul.mubr.bf16.gmra.mxu0 %v3896
      %v4058 = vpop.f32.mrf.mxu0
      %v4059 = vadd.f32 %v3918, %v4058
      %v4060 = vpop.f32.mrf.mxu0
      %v4061 = vpop.f32.mrf.mxu0
      %v4062 = vadd.f32 %v3918, %v4061
      %v4063 = vpop.f32.mrf.mxu0
      %4064 = vdwg.mxu0
      %v4065 = vmax.f32 %v4003, 0.0
      %v4066 = vmax.f32 %v4006, 0.0
      %v4067 = vmax.f32 %v4011, 0.0
      %v4068 = vmax.f32 %v4014, 0.0
      %v4069 = vmax.f32 %v4019, 0.0
      %v4070 = vmax.f32 %v4022, 0.0
      %v4071 = vmax.f32 %v4027, 0.0
      %v4072 = vmax.f32 %v4030, 0.0
      %v4073 = vmax.f32 %v4035, 0.0
      %v4074 = vmax.f32 %v4038, 0.0
      %v4075 = vmax.f32 %v4043, 0.0
      %v4076 = vmax.f32 %v4046, 0.0
      %v4077 = vmax.f32 %v4051, 0.0
      %v4078 = vmax.f32 %v4054, 0.0
      %v4079 = vmax.f32 %v4059, 0.0
      %v4080 = vmax.f32 %v4062, 0.0
      %v4081 = vpack.c.bf16 %v4066, %v4065
      %v4082 = vpack.c.bf16 %v4068, %v4067
      %v4083 = vpack.c.bf16 %v4070, %v4069
      %v4084 = vpack.c.bf16 %v4072, %v4071
      %v4085 = vpack.c.bf16 %v4074, %v4073
      %v4086 = vpack.c.bf16 %v4076, %v4075
      %v4087 = vpack.c.bf16 %v4078, %v4077
      %v4088 = vpack.c.bf16 %v4080, %v4079
      %v4097 = vunpack.c.l.b16 %v4081
      %v4098 = vunpack.c.h.b16 %v4081
      %v4099 = vunpack.c.l.b16 %v4082
      %v4100 = vunpack.c.h.b16 %v4082
      %v4101 = vunpack.c.l.b16 %v4083
      %v4102 = vunpack.c.h.b16 %v4083
      %v4103 = vunpack.c.l.b16 %v4084
      %v4104 = vunpack.c.h.b16 %v4084
      %v4105 = vunpack.c.l.b16 %v4085
      %v4106 = vunpack.c.h.b16 %v4085
      %v4107 = vunpack.c.l.b16 %v4086
      %v4108 = vunpack.c.h.b16 %v4086
      %v4109 = vunpack.c.l.b16 %v4087
      %v4110 = vunpack.c.h.b16 %v4087
      %v4111 = vunpack.c.l.b16 %v4088
      %v4112 = vunpack.c.h.b16 %v4088
      %v4113 = vpack.c.b16 %v4097, %v4097
      %v4114 = vpack.c.b16 %v4098, %v4098
      %v4115 = vpack.c.b16 %v4099, %v4099
      %v4116 = vpack.c.b16 %v4100, %v4100
      %v4117 = vpack.c.b16 %v4101, %v4101
      %v4118 = vpack.c.b16 %v4102, %v4102
      %v4119 = vpack.c.b16 %v4103, %v4103
      %v4120 = vpack.c.b16 %v4104, %v4104
      %v4121 = vpack.c.b16 %v4105, %v4105
      %v4122 = vpack.c.b16 %v4106, %v4106
      %v4123 = vpack.c.b16 %v4107, %v4107
      %v4124 = vpack.c.b16 %v4108, %v4108
      %v4125 = vpack.c.b16 %v4109, %v4109
      %v4126 = vpack.c.b16 %v4110, %v4110
      %v4127 = vpack.c.b16 %v4111, %v4111
      %v4128 = vpack.c.b16 %v4112, %v4112
      %4145 = vst [vmem:[%s551] sm:$0xf] %v4113
      %4146 = vst [vmem:[%s551 + $0x4] sm:$0xf] %v4114
      %4147 = vst [vmem:[%s551 + $0x8] sm:$0xf] %v4115
      %4148 = vst [vmem:[%s551 + $0xc] sm:$0xf] %v4116
      %4149 = vst [vmem:[%s551 + $0x10] sm:$0xf] %v4117
      %4150 = vst [vmem:[%s551 + $0x14] sm:$0xf] %v4118
      %4151 = vst [vmem:[%s551 + $0x18] sm:$0xf] %v4119
      %4152 = vst [vmem:[%s551 + $0x1c] sm:$0xf] %v4120
      %4153 = vst [vmem:[%s551 + $0x20] sm:$0xf] %v4121
      %4154 = vst [vmem:[%s551 + $0x24] sm:$0xf] %v4122
      %4155 = vst [vmem:[%s551 + $0x28] sm:$0xf] %v4123
      %4156 = vst [vmem:[%s551 + $0x2c] sm:$0xf] %v4124
      %4157 = vst [vmem:[%s551 + $0x30] sm:$0xf] %v4125
      %4158 = vst [vmem:[%s551 + $0x34] sm:$0xf] %v4126
      %4159 = vst [vmem:[%s551 + $0x38] sm:$0xf] %v4127
      %4160 = vst [vmem:[%s551 + $0x3c] sm:$0xf] %v4128
      %p4161 = scmp.lt.s32.totalorder %s28, 1
      %s4162 = scalar_select %p4161, %s28, 1
      %s4163 = smul.addr %s4162, 16
      %s4164 = smul.addr %s4163, 4
      %s4165 = scalar_lea.vmem %s13, %s4164
      %p4166 = scmp.lt.s32.totalorder %s28, 1
      %s4167 = scalar_select %p4166, %s28, 1
      %s4168 = smul.addr %s4167, 4
      %s4169 = smul.addr %s4168, 4
      %s4170 = scalar_lea.vmem %s14, %s4169
      %p4171 = scmp.lt.s32.totalorder %s28, 1
      %s4172 = scalar_select %p4171, %s28, 1
      %s4173 = smul.addr %s4172, 16
      %s4174 = smul.addr %s4173, 4
      %s4175 = scalar_lea.vmem %s15, %s4174
      %p4176 = scmp.lt.s32.totalorder %s28, 1
      %s4177 = scalar_select %p4176, %s28, 1
      %s4178 = scalar_lea.vmem %s16, %s4177
      // Predicated region
      $region73: #{sadecoder_forward.2} parent=71 // pred_check
        %p4179 = pneg %p324
      $region74: #{sadecoder_forward.2} parent=71 // pred_check_branch
        %4181 = sbr.rel (%p4179) target = $region76
      $region75: #{sadecoder_forward.2} parent=71 // pred_region
        _
      $region76: #{sadecoder_forward.2} parent=71 // pred_fallthru
        _
      // Predicated region
      $region77: #{sadecoder_forward.2} parent=71 // pred_check
        %p4182 = pneg %p350
      $region78: #{sadecoder_forward.2} parent=71 // pred_check_branch
        %4184 = sbr.rel (%p4182) target = $region80
      $region79: #{sadecoder_forward.2} parent=71 // pred_region
        _
      $region80: #{sadecoder_forward.2} parent=71 // pred_fallthru
        _
      // Predicated region
      $region81: #{sadecoder_forward.2} parent=71 // pred_check
        %p4185 = pneg %p376
      $region82: #{sadecoder_forward.2} parent=71 // pred_check_branch
        %4187 = sbr.rel (%p4185) target = $region84
      $region83: #{sadecoder_forward.2} parent=71 // pred_region
        _
      $region84: #{sadecoder_forward.2} parent=71 // pred_fallthru
        _
      // Predicated region
      $region85: #{sadecoder_forward.2} parent=71 // pred_check
        %p4188 = pneg %p402
      $region86: #{sadecoder_forward.2} parent=71 // pred_check_branch
        %4190 = sbr.rel (%p4188) target = $region88
      $region87: #{sadecoder_forward.2} parent=71 // pred_region
        _
      $region88: #{sadecoder_forward.2} parent=71 // pred_fallthru
        _
    $region72: #{sadecoder_forward.2} parent=5 // pred_fallthru
      _
    %p4191 = scmp.le.s32.totalorder 2, %s23
    // Predicated region
    $region89: #{sadecoder_forward.2} parent=5 // pred_check
      %p4192 = pneg %p4191
    $region90: #{sadecoder_forward.2} parent=5 // pred_check_branch
      %4194 = sbr.rel (%p4192) target = $region92
    $region91: #{sadecoder_forward.2} parent=5 // pred_region
      %s4195 = ssub.s32 %s23, 2
      // Predicated region
      $region93: #{sadecoder_forward.2} parent=91 // pred_check
        %p4196 = pneg %p330
      $region94: #{sadecoder_forward.2} parent=91 // pred_check_branch
        %4198 = sbr.rel (%p4196) target = $region96
      $region95: #{sadecoder_forward.2} parent=91 // pred_region
        %p4199 = scmp.lt.s32.totalorder %s29, 1
        %s4200 = scalar_select %p4199, %s29, 1
        %s4201 = smul.addr %s4200, 16
        %s4202 = smul.addr %s4201, 4
        %s4203 = scalar_lea.vmem %s13, %s4202
      $region96: #{sadecoder_forward.2} parent=91 // pred_fallthru
        _
      // Predicated region
      $region97: #{sadecoder_forward.2} parent=91 // pred_check
        %p4204 = pneg %p356
      $region98: #{sadecoder_forward.2} parent=91 // pred_check_branch
        %4206 = sbr.rel (%p4204) target = $region100
      $region99: #{sadecoder_forward.2} parent=91 // pred_region
        %p4207 = scmp.lt.s32.totalorder %s29, 1
        %s4208 = scalar_select %p4207, %s29, 1
        %s4209 = smul.addr %s4208, 4
        %s4210 = smul.addr %s4209, 4
        %s4211 = scalar_lea.vmem %s14, %s4210
      $region100: #{sadecoder_forward.2} parent=91 // pred_fallthru
        _
      // Predicated region
      $region101: #{sadecoder_forward.2} parent=91 // pred_check
        %p4212 = pneg %p382
      $region102: #{sadecoder_forward.2} parent=91 // pred_check_branch
        %4214 = sbr.rel (%p4212) target = $region104
      $region103: #{sadecoder_forward.2} parent=91 // pred_region
        %p4215 = scmp.lt.s32.totalorder %s29, 1
        %s4216 = scalar_select %p4215, %s29, 1
        %s4217 = smul.addr %s4216, 16
        %s4218 = smul.addr %s4217, 4
        %s4219 = scalar_lea.vmem %s15, %s4218
      $region104: #{sadecoder_forward.2} parent=91 // pred_fallthru
        _
      // Predicated region
      $region105: #{sadecoder_forward.2} parent=91 // pred_check
        %p4220 = pneg %p408
      $region106: #{sadecoder_forward.2} parent=91 // pred_check_branch
        %4222 = sbr.rel (%p4220) target = $region108
      $region107: #{sadecoder_forward.2} parent=91 // pred_region
        %p4223 = scmp.lt.s32.totalorder %s29, 1
        %s4224 = scalar_select %p4223, %s29, 1
        %s4225 = scalar_lea.vmem %s16, %s4224
      $region108: #{sadecoder_forward.2} parent=91 // pred_fallthru
        _
    $region92: #{sadecoder_forward.2} parent=5 // pred_fallthru
      _
  $region6: #{sadecoder_forward.2} parent=0 // loop_footer
    %s27 = sadd.s32 1, %s23
  $region7: #{sadecoder_forward.2} parent=0 // loop_footer_branch
    %22 = sbr.rel target = $region3
  $region8: #{sadecoder_forward.2} parent=0 // loop_exit
    _

</llo_original>
